<compile_context>
chip_gen: v6e
topology: v6e:2x2x1
jax: 0.10.0
libtpu: 0.0.40
codegen_flags: <defaults>
</compile_context>

<pallas_src>
import functools

import jax
import jax.numpy as jnp
from jax.experimental import pallas as pl
from jax.experimental.pallas import tpu as pltpu

KW = 4       # conv kernel size
PADW = 1     # conv padding
EPS = 1e-5   # InstanceNorm2d default eps
SLOPE = 0.2  # LeakyReLU negative slope


def _round_up(x, m):
    return (x + m - 1) // m * m


# ---------------------------------------------------------------------------
# Pallas kernel: one conv layer = single fused-K matmul + bias
#                [+ masked InstanceNorm] [+ LeakyReLU], lane-dense (Cout, P) out
# ---------------------------------------------------------------------------
def _conv_layer_kernel(x_ref, w_ref, b_ref, o_ref, *, k_eff, win, ho, wo, n_out,
                       inv_cnt, use_norm, use_act):
    # x_ref: (Cin_eff, L_pad)  flattened, zero-padded activation (one sample, resident)
    # w_ref: (Cout, K)         K = k_eff^2 * Cin_eff, tap-major contraction layout
    # b_ref: (Cout, 1) f32
    # o_ref: (Cout, n_out)     lane-dense (n_out % 128 == 0); row-major rows of `win`

    # In-kernel im2col along the contraction axis: stack the k_eff^2 shifted views of
    # the already-resident activation (unit-stride static slices only) so the whole
    # convolution is ONE deep-K MXU dot instead of k_eff^2 skinny partial dots.
    taps = []
    for t in range(k_eff * k_eff):
        off = (t // k_eff) * win + (t % k_eff)
        taps.append(x_ref[:, pl.ds(off, n_out)])
    xs = jnp.concatenate(taps, axis=0)                           # (K, n_out)

    # Single matmul with f32 accumulation held in a local value (no VMEM scratch RMW);
    # bias folded in via a lane broadcast. o_ref is written exactly once at the end.
    y = jnp.dot(w_ref[...], xs, preferred_element_type=jnp.float32) + b_ref[...]

    if use_norm:
        # InstanceNorm2d (affine=False): one-pass masked stats over the valid output
        # positions only. Validity mask built in-kernel from an iota; float "mod" is
        # exact for col < 2^22 (the +0.5 guard keeps floor() on the right side).
        col = jax.lax.broadcasted_iota(jnp.int32, (1, n_out), 1).astype(jnp.float32)
        row = jnp.floor((col + 0.5) * (1.0 / win))
        j_in_row = col - row * win
        m = ((j_in_row < wo) & (row < ho)).astype(jnp.float32)   # (1, n_out)
        ym = y * m
        s1 = jnp.sum(ym, axis=-1, keepdims=True) * inv_cnt       # mean
        s2 = jnp.sum(ym * y, axis=-1, keepdims=True) * inv_cnt   # E[x^2]
        var = jnp.maximum(s2 - s1 * s1, 0.0)                     # clamp cancellation
        y = (y - s1) * jax.lax.rsqrt(var + EPS)

    if use_act:
        y = jnp.where(y > 0, y, SLOPE * y)                       # LeakyReLU(0.2)

    o_ref[...] = y.astype(o_ref.dtype)


# ---------------------------------------------------------------------------
# Host glue: pad, space-to-depth (stride-2 layers), flatten, weight re-tiling
# ---------------------------------------------------------------------------
def _space_to_depth(xp):
    """(B, C, Hp, Wp) -> (B, 4C, Hp/2, Wp/2), channel index = (py*2+px)*C + c."""
    B, C, Hp, Wp = xp.shape
    z = xp.reshape(B, C, Hp // 2, 2, Wp // 2, 2)       # [b, c, i, py, j, px]
    z = z.transpose(0, 3, 5, 1, 2, 4)                  # [b, py, px, c, i, j]
    return z.reshape(B, 4 * C, Hp // 2, Wp // 2)


def _prep_weights(w, stride):
    """w: (KW, KW, Cin, Cout) -> (Cout, K) with K = k_eff^2 * Cin_eff, tap-major."""
    kh, kw_, cin, cout = w.shape
    if stride == 2:
        w5 = w.reshape(2, 2, 2, 2, cin, cout)          # [qy, py, qx, px, c, co]
        w_taps = w5.transpose(0, 2, 5, 1, 3, 4)        # [qy, qx, co, py, px, c]
        w_taps = w_taps.reshape(4, cout, 4 * cin)      # tap = qy*2+qx, ch' = (py*2+px)*C+c
        k_eff = 2
    else:
        w_taps = w.transpose(0, 1, 3, 2).reshape(kh * kw_, cout, cin)  # tap = dy*KW+dx
        k_eff = KW
    K = w_taps.shape[0] * w_taps.shape[2]
    w_mat = jnp.transpose(w_taps, (1, 0, 2)).reshape(cout, K)
    return w_mat, k_eff


def _conv_layer(x_nchw, w, b, *, stride, use_norm, use_act, compute_dtype, out_dtype):
    """One discriminator layer; returns NCHW output (PyTorch-sized)."""
    B, C, H, W = x_nchw.shape
    cout = w.shape[-1]

    # PyTorch output size for this conv.
    ho = (H + 2 * PADW - KW) // stride + 1
    wo = (W + 2 * PADW - KW) // stride + 1

    # Spatial pad; for stride-2 pad to even so space-to-depth is defined (the extra
    # zero row/col only feeds positions that are masked and sliced off).
    hp, wp = H + 2 * PADW, W + 2 * PADW
    eh = hp % 2 if stride == 2 else 0
    ew = wp % 2 if stride == 2 else 0
    xp = jnp.pad(x_nchw, ((0, 0), (0, 0), (PADW, PADW + eh), (PADW, PADW + ew)))

    x_in = _space_to_depth(xp) if stride == 2 else xp
    w_mat, k_eff = _prep_weights(w, stride)
    _, cin_eff, hin, win = x_in.shape
    K = w_mat.shape[1]

    # Lane-dense flat output width (multiple of 128 -> unmasked stores). Each of the
    # ho rows occupies `win` columns; the (win - wo) wrap columns per row and the
    # 128-alignment tail are junk, masked out of the norm stats and sliced off below.
    n_valid = ho * win
    n_out = _round_up(n_valid, 128)
    max_off = (k_eff - 1) * (win + 1)
    l_in_pad = _round_up(max_off + n_out, 128)

    x_flat = x_in.reshape(B, cin_eff, hin * win)
    x_flat = jnp.pad(x_flat, ((0, 0), (0, 0), (0, l_in_pad - hin * win)))
    x_flat = x_flat.astype(compute_dtype)
    w_mat = w_mat.astype(compute_dtype)
    b_col = b.reshape(cout, 1).astype(jnp.float32)

    kernel = functools.partial(
        _conv_layer_kernel, k_eff=k_eff, win=win, ho=ho, wo=wo, n_out=n_out,
        inv_cnt=1.0 / float(ho * wo), use_norm=use_norm, use_act=use_act)

    # VMEM budget: double-buffered activation/output blocks + resident params + the
    # in-kernel (K, n_out) im2col operand and f32 epilogue temps. Capped at 48 MiB,
    # comfortably under v7x's 64 MiB physical VMEM per TensorCore.
    isz = jnp.dtype(compute_dtype).itemsize
    osz = jnp.dtype(out_dtype).itemsize
    est = (2 * cin_eff * l_in_pad * isz          # activation block, double-buffered
           + 2 * cout * K * isz + 2 * cout * 4   # weights + bias
           + 2 * cout * n_out * osz              # output block, double-buffered
           + K * n_out * isz                     # im2col operand value
           + 2 * cout * n_out * 4)               # f32 accumulator / epilogue temps
    vmem_limit = int(min(48 * 2**20, max(8 * 2**20, 2 * est)))

    out_flat = pl.pallas_call(
        kernel,
        out_shape=jax.ShapeDtypeStruct((B, cout, n_out), out_dtype),
        grid=(B,),
        in_specs=[
            pl.BlockSpec((None, cin_eff, l_in_pad), lambda i: (i, 0, 0)),  # per-sample act
            pl.BlockSpec((cout, K), lambda i: (0, 0)),                     # fused-K weights
            pl.BlockSpec((cout, 1), lambda i: (0, 0)),                     # bias
        ],
        out_specs=pl.BlockSpec((None, cout, n_out), lambda i: (i, 0, 0)),
        compiler_params=pltpu.CompilerParams(
            dimension_semantics=("parallel",),
            vmem_limit_bytes=vmem_limit,
        ),
    )(x_flat, w_mat, b_col)

    # Free fixup: take the ho valid rows, reshape, drop the per-row wrap columns.
    out = out_flat[:, :, :n_valid].reshape(B, cout, ho, win)[:, :, :, :wo]
    return out


# ---------------------------------------------------------------------------
# Full discriminator forward
# ---------------------------------------------------------------------------
# (stride, use_instance_norm, use_leaky_relu) per conv layer
_LAYER_SPECS = [
    (2, False, True),
    (2, True, True),
    (2, True, True),
    (1, True, True),
    (1, False, False),
]


def init_params(key, input_nc, ndf):
    """Deterministic synthetic parameters (CycleGAN-style N(0, 0.02) weights)."""
    chans = [input_nc, ndf, ndf * 2, ndf * 4, ndf * 8, 1]
    params = {}
    for i in range(5):
        key, kw_, kb_ = jax.random.split(key, 3)
        cin, cout = chans[i], chans[i + 1]
        params[f"w{i}"] = 0.02 * jax.random.normal(kw_, (KW, KW, cin, cout), jnp.float32)
        params[f"b{i}"] = 0.01 * jax.random.normal(kb_, (cout,), jnp.float32)
    return params


def nlayer_discriminator_forward(x_nchw, params, compute_dtype=jnp.bfloat16):
    x = x_nchw
    n_total = len(_LAYER_SPECS)
    for i, (stride, use_norm, use_act) in enumerate(_LAYER_SPECS):
        out_dtype = jnp.float32 if i == n_total - 1 else compute_dtype
        x = _conv_layer(
            x, params[f"w{i}"], params[f"b{i}"],
            stride=stride, use_norm=use_norm, use_act=use_act,
            compute_dtype=compute_dtype, out_dtype=out_dtype,
        )
    return x  # NCHW


# ---------------------------------------------------------------------------
# Pure-JAX reference (for correctness check of the Pallas path)
# ---------------------------------------------------------------------------
def _ref_forward(x_nchw, params):
    x = x_nchw
    for i, (stride, use_norm, use_act) in enumerate(_LAYER_SPECS):
        w = jnp.transpose(params[f"w{i}"], (3, 2, 0, 1))        # -> OIHW
        x = jax.lax.conv_general_dilated(
            x, w, (stride, stride), ((PADW, PADW), (PADW, PADW)),
            dimension_numbers=("NCHW", "OIHW", "NCHW"),
        )
        x = x + params[f"b{i}"].reshape(1, -1, 1, 1)
        if use_norm:
            mean = jnp.mean(x, axis=(2, 3), keepdims=True)
            var = jnp.mean((x - mean) ** 2, axis=(2, 3), keepdims=True)
            x = (x - mean) * jax.lax.rsqrt(var + EPS)
        if use_act:
            x = jnp.where(x > 0, x, SLOPE * x)
    return x


if __name__ == "__main__":
    key = jax.random.PRNGKey(0)
    k_x, k_p = jax.random.split(key)

    # opt.input_nc = 3, opt.ndf = 8; 32x32 spatial so the final stride-1 convs
    # still produce a valid (2x2) prediction map.
    B, input_nc, ndf, H, W = 2, 3, 8, 32, 32
    x = jax.random.normal(k_x, (B, input_nc, H, W), jnp.float32)
    params = init_params(k_p, input_nc, ndf)

    ref = jax.block_until_ready(_ref_forward(x, params))
    assert ref.shape == (B, 1, 2, 2), ref.shape

    # Strict correctness: f32 compute path vs lax.conv reference.
    fwd_f32 = jax.jit(functools.partial(nlayer_discriminator_forward,
                                        compute_dtype=jnp.float32))
    out_f32 = jax.block_until_ready(fwd_f32(x, params))
    assert out_f32.shape == ref.shape, (out_f32.shape, ref.shape)
    assert jnp.allclose(out_f32, ref, rtol=1e-4, atol=1e-4), (
        float(jnp.max(jnp.abs(out_f32 - ref)))
    )

    # Performance config: bf16 operands / inter-layer activations, f32 accumulation
    # and f32 InstanceNorm statistics. Sanity-checked with a relative-L2 bound.
    fwd_bf16 = jax.jit(functools.partial(nlayer_discriminator_forward,
                                         compute_dtype=jnp.bfloat16))
    out_bf16 = jax.block_until_ready(fwd_bf16(x, params))
    assert out_bf16.shape == ref.shape, (out_bf16.shape, ref.shape)
    rel_err = float(jnp.linalg.norm(out_bf16 - ref) / (jnp.linalg.norm(ref) + 1e-12))
    assert rel_err < 5e-2, rel_err

    print("KERNEL_OK")
</pallas_src>

<mosaic_0001>
module attributes {stable_mosaic.version = 11 : i64} {
  func.func @_conv_layer_kernel(%arg0: i32, %arg1: memref<1x12x512xf32, #tpu.memory_space<vmem>>, %arg2: memref<8x48xf32, #tpu.memory_space<vmem>>, %arg3: memref<8x1xf32, #tpu.memory_space<vmem>>, %arg4: memref<1x8x384xf32, #tpu.memory_space<vmem>>) attributes {dimension_semantics = [#tpu.dimension_semantics<parallel>], iteration_bounds = array<i64: 2>, scalar_prefetch = 0 : i64, scratch_operands = 0 : i64, tpu.core_type = #tpu.core_type<tc>, window_params = [{transform_indices = @transform_0, window_bounds = array<i64: 1, 12, 512>}, {pipeline_mode = #tpu.pipeline_mode<synchronous>, transform_indices = @transform_1, window_bounds = array<i64: 8, 48>}, {pipeline_mode = #tpu.pipeline_mode<synchronous>, transform_indices = @transform_2, window_bounds = array<i64: 8, 1>}, {transform_indices = @transform_3, window_bounds = array<i64: 1, 8, 384>}]} {
    %c0 = arith.constant 0 : index
    %c0_0 = arith.constant 0 : index
    %c0_1 = arith.constant 0 : index
    %0 = vector.load %arg1[%c0, %c0_0, %c0_1] : memref<1x12x512xf32, #tpu.memory_space<vmem>>, vector<1x12x384xf32>
    %1 = vector.shape_cast %0 : vector<1x12x384xf32> to vector<12x384xf32>
    %c0_2 = arith.constant 0 : index
    %c0_3 = arith.constant 0 : index
    %c1 = arith.constant 1 : index
    %2 = vector.load %arg1[%c0_2, %c0_3, %c1] : memref<1x12x512xf32, #tpu.memory_space<vmem>>, vector<1x12x384xf32>
    %3 = vector.shape_cast %2 : vector<1x12x384xf32> to vector<12x384xf32>
    %c0_4 = arith.constant 0 : index
    %c0_5 = arith.constant 0 : index
    %c17 = arith.constant 17 : index
    %4 = vector.load %arg1[%c0_4, %c0_5, %c17] : memref<1x12x512xf32, #tpu.memory_space<vmem>>, vector<1x12x384xf32>
    %5 = vector.shape_cast %4 : vector<1x12x384xf32> to vector<12x384xf32>
    %c0_6 = arith.constant 0 : index
    %c0_7 = arith.constant 0 : index
    %c18 = arith.constant 18 : index
    %6 = vector.load %arg1[%c0_6, %c0_7, %c18] : memref<1x12x512xf32, #tpu.memory_space<vmem>>, vector<1x12x384xf32>
    %7 = vector.shape_cast %6 : vector<1x12x384xf32> to vector<12x384xf32>
    %8 = tpu.concatenate %1, %3, %5, %7 in 0 : vector<12x384xf32>, vector<12x384xf32>, vector<12x384xf32>, vector<12x384xf32> -> vector<48x384xf32>
    %c0_8 = arith.constant 0 : index
    %c0_9 = arith.constant 0 : index
    %9 = vector.load %arg2[%c0_8, %c0_9] : memref<8x48xf32, #tpu.memory_space<vmem>>, vector<8x48xf32>
    %cst = arith.constant dense<0.000000e+00> : vector<8x384xf32>
    %10 = tpu.matmul %9, %8, %cst {dimension_numbers = #tpu.dot_dimension_numbers<[1], [0], [0], [1], [0, 0, 1, 1], [], []>} : vector<8x48xf32>, vector<48x384xf32>, vector<8x384xf32> -> vector<8x384xf32>
    %c0_10 = arith.constant 0 : index
    %c0_11 = arith.constant 0 : index
    %11 = vector.load %arg3[%c0_10, %c0_11] : memref<8x1xf32, #tpu.memory_space<vmem>>, vector<8x1xf32>
    %12 = vector.broadcast %11 : vector<8x1xf32> to vector<8x384xf32>
    %13 = arith.addf %10, %12 : vector<8x384xf32>
    %cst_12 = arith.constant 0.000000e+00 : f32
    %14 = vector.broadcast %cst_12 : f32 to vector<8x384xf32>
    %15 = arith.cmpf ogt, %13, %14 : vector<8x384xf32>
    %cst_13 = arith.constant 2.000000e-01 : f32
    %16 = vector.broadcast %cst_13 : f32 to vector<8x384xf32>
    %17 = arith.mulf %16, %13 : vector<8x384xf32>
    %18 = arith.select %15, %13, %17 : vector<8x384xi1>, vector<8x384xf32>
    %c0_14 = arith.constant 0 : index
    %c0_15 = arith.constant 0 : index
    %c0_16 = arith.constant 0 : index
    %19 = vector.load %arg4[%c0_14, %c0_15, %c0_16] : memref<1x8x384xf32, #tpu.memory_space<vmem>>, vector<1x8x384xf32>
    %20 = vector.shape_cast %19 : vector<1x8x384xf32> to vector<8x384xf32>
    %21 = vector.shape_cast %18 : vector<8x384xf32> to vector<1x8x384xf32>
    tpu.vector_store %arg4[%c0_14, %c0_15, %c0_16], %21 {strides = array<i32>} : memref<1x8x384xf32, #tpu.memory_space<vmem>>, vector<1x8x384xf32>,
    return
  }
  func.func @transform_0(%arg0: i32) -> (i32, i32, i32) {
    %c0_i32 = arith.constant 0 : i32
    %c0_i32_0 = arith.constant 0 : i32
    %c0_i32_1 = arith.constant 0 : i32
    return %arg0, %c0_i32, %c0_i32_0 : i32, i32, i32
  }
  func.func @transform_1(%arg0: i32) -> (i32, i32) {
    %c0_i32 = arith.constant 0 : i32
    %c0_i32_0 = arith.constant 0 : i32
    %c0_i32_1 = arith.constant 0 : i32
    return %c0_i32, %c0_i32_0 : i32, i32
  }
  func.func @transform_2(%arg0: i32) -> (i32, i32) {
    %c0_i32 = arith.constant 0 : i32
    %c0_i32_0 = arith.constant 0 : i32
    %c0_i32_1 = arith.constant 0 : i32
    return %c0_i32, %c0_i32_0 : i32, i32
  }
  func.func @transform_3(%arg0: i32) -> (i32, i32, i32) {
    %c0_i32 = arith.constant 0 : i32
    %c0_i32_0 = arith.constant 0 : i32
    %c0_i32_1 = arith.constant 0 : i32
    return %arg0, %c0_i32, %c0_i32_0 : i32, i32, i32
  }
}

module attributes {stable_mosaic.version = 11 : i64} {
  func.func @_conv_layer_kernel(%arg0: i32, %arg1: memref<1x32x256xf32, #tpu.memory_space<vmem>>, %arg2: memref<16x128xf32, #tpu.memory_space<vmem>>, %arg3: memref<16x1xf32, #tpu.memory_space<vmem>>, %arg4: memref<1x16x128xf32, #tpu.memory_space<vmem>>) attributes {dimension_semantics = [#tpu.dimension_semantics<parallel>], iteration_bounds = array<i64: 2>, scalar_prefetch = 0 : i64, scratch_operands = 0 : i64, tpu.core_type = #tpu.core_type<tc>, window_params = [{transform_indices = @transform_0, window_bounds = array<i64: 1, 32, 256>}, {pipeline_mode = #tpu.pipeline_mode<synchronous>, transform_indices = @transform_1, window_bounds = array<i64: 16, 128>}, {pipeline_mode = #tpu.pipeline_mode<synchronous>, transform_indices = @transform_2, window_bounds = array<i64: 16, 1>}, {transform_indices = @transform_3, window_bounds = array<i64: 1, 16, 128>}]} {
    %c0 = arith.constant 0 : index
    %c0_0 = arith.constant 0 : index
    %c0_1 = arith.constant 0 : index
    %0 = vector.load %arg1[%c0, %c0_0, %c0_1] : memref<1x32x256xf32, #tpu.memory_space<vmem>>, vector<1x32x128xf32>
    %1 = vector.shape_cast %0 : vector<1x32x128xf32> to vector<32x128xf32>
    %c0_2 = arith.constant 0 : index
    %c0_3 = arith.constant 0 : index
    %c1 = arith.constant 1 : index
    %2 = vector.load %arg1[%c0_2, %c0_3, %c1] : memref<1x32x256xf32, #tpu.memory_space<vmem>>, vector<1x32x128xf32>
    %3 = vector.shape_cast %2 : vector<1x32x128xf32> to vector<32x128xf32>
    %c0_4 = arith.constant 0 : index
    %c0_5 = arith.constant 0 : index
    %c9 = arith.constant 9 : index
    %4 = vector.load %arg1[%c0_4, %c0_5, %c9] : memref<1x32x256xf32, #tpu.memory_space<vmem>>, vector<1x32x128xf32>
    %5 = vector.shape_cast %4 : vector<1x32x128xf32> to vector<32x128xf32>
    %c0_6 = arith.constant 0 : index
    %c0_7 = arith.constant 0 : index
    %c10 = arith.constant 10 : index
    %6 = vector.load %arg1[%c0_6, %c0_7, %c10] : memref<1x32x256xf32, #tpu.memory_space<vmem>>, vector<1x32x128xf32>
    %7 = vector.shape_cast %6 : vector<1x32x128xf32> to vector<32x128xf32>
    %8 = tpu.concatenate %1, %3, %5, %7 in 0 : vector<32x128xf32>, vector<32x128xf32>, vector<32x128xf32>, vector<32x128xf32> -> vector<128x128xf32>
    %c0_8 = arith.constant 0 : index
    %c0_9 = arith.constant 0 : index
    %9 = vector.load %arg2[%c0_8, %c0_9] : memref<16x128xf32, #tpu.memory_space<vmem>>, vector<16x128xf32>
    %cst = arith.constant dense<0.000000e+00> : vector<16x128xf32>
    %10 = tpu.matmul %9, %8, %cst {dimension_numbers = #tpu.dot_dimension_numbers<[1], [0], [0], [1], [0, 0, 1, 1], [], []>} : vector<16x128xf32>, vector<128x128xf32>, vector<16x128xf32> -> vector<16x128xf32>
    %c0_10 = arith.constant 0 : index
    %c0_11 = arith.constant 0 : index
    %11 = vector.load %arg3[%c0_10, %c0_11] : memref<16x1xf32, #tpu.memory_space<vmem>>, vector<16x1xf32>
    %12 = vector.broadcast %11 : vector<16x1xf32> to vector<16x128xf32>
    %13 = arith.addf %10, %12 : vector<16x128xf32>
    %14 = tpu.iota {dimensions = array<i32: 1>} : vector<1x128xi32>
    %15 = arith.sitofp %14 : vector<1x128xi32> to vector<1x128xf32>
    %cst_12 = arith.constant 5.000000e-01 : f32
    %16 = vector.broadcast %cst_12 : f32 to vector<1x128xf32>
    %17 = arith.addf %15, %16 : vector<1x128xf32>
    %cst_13 = arith.constant 0.111111112 : f32
    %18 = vector.broadcast %cst_13 : f32 to vector<1x128xf32>
    %19 = arith.mulf %17, %18 : vector<1x128xf32>
    %20 = math.floor %19 : vector<1x128xf32>
    %cst_14 = arith.constant 9.000000e+00 : f32
    %21 = vector.broadcast %cst_14 : f32 to vector<1x128xf32>
    %22 = arith.mulf %20, %21 : vector<1x128xf32>
    %23 = arith.subf %15, %22 : vector<1x128xf32>
    %cst_15 = arith.constant 8.000000e+00 : f32
    %24 = vector.broadcast %cst_15 : f32 to vector<1x128xf32>
    %25 = arith.cmpf olt, %23, %24 : vector<1x128xf32>
    %cst_16 = arith.constant 8.000000e+00 : f32
    %26 = vector.broadcast %cst_16 : f32 to vector<1x128xf32>
    %27 = arith.cmpf olt, %20, %26 : vector<1x128xf32>
    %28 = arith.andi %25, %27 : vector<1x128xi1>
    %29 = arith.extui %28 : vector<1x128xi1> to vector<1x128xi32>
    %30 = arith.sitofp %29 : vector<1x128xi32> to vector<1x128xf32>
    %31 = vector.broadcast %30 : vector<1x128xf32> to vector<16x128xf32>
    %32 = arith.mulf %13, %31 : vector<16x128xf32>
    %cst_17 = arith.constant dense<0.000000e+00> : vector<16xf32>
    %33 = vector.multi_reduction <add>, %32, %cst_17 [1] : vector<16x128xf32> to vector<16xf32>
    %34 = vector.shape_cast %33 : vector<16xf32> to vector<16x1xf32>
    %cst_18 = arith.constant 1.562500e-02 : f32
    %35 = vector.broadcast %cst_18 : f32 to vector<16x1xf32>
    %36 = arith.mulf %34, %35 : vector<16x1xf32>
    %37 = arith.mulf %32, %13 : vector<16x128xf32>
    %cst_19 = arith.constant dense<0.000000e+00> : vector<16xf32>
    %38 = vector.multi_reduction <add>, %37, %cst_19 [1] : vector<16x128xf32> to vector<16xf32>
    %39 = vector.shape_cast %38 : vector<16xf32> to vector<16x1xf32>
    %cst_20 = arith.constant 1.562500e-02 : f32
    %40 = vector.broadcast %cst_20 : f32 to vector<16x1xf32>
    %41 = arith.mulf %39, %40 : vector<16x1xf32>
    %42 = arith.mulf %36, %36 : vector<16x1xf32>
    %43 = arith.subf %41, %42 : vector<16x1xf32>
    %cst_21 = arith.constant 0.000000e+00 : f32
    %44 = vector.broadcast %cst_21 : f32 to vector<16x1xf32>
    %45 = arith.maximumf %43, %44 : vector<16x1xf32>
    %46 = vector.broadcast %36 : vector<16x1xf32> to vector<16x128xf32>
    %47 = arith.subf %13, %46 : vector<16x128xf32>
    %cst_22 = arith.constant 9.99999974E-6 : f32
    %48 = vector.broadcast %cst_22 : f32 to vector<16x1xf32>
    %49 = arith.addf %45, %48 : vector<16x1xf32>
    %50 = math.rsqrt %49 : vector<16x1xf32>
    %51 = vector.broadcast %50 : vector<16x1xf32> to vector<16x128xf32>
    %52 = arith.mulf %47, %51 : vector<16x128xf32>
    %cst_23 = arith.constant 0.000000e+00 : f32
    %53 = vector.broadcast %cst_23 : f32 to vector<16x128xf32>
    %54 = arith.cmpf ogt, %52, %53 : vector<16x128xf32>
    %cst_24 = arith.constant 2.000000e-01 : f32
    %55 = vector.broadcast %cst_24 : f32 to vector<16x128xf32>
    %56 = arith.mulf %55, %52 : vector<16x128xf32>
    %57 = arith.select %54, %52, %56 : vector<16x128xi1>, vector<16x128xf32>
    %c0_25 = arith.constant 0 : index
    %c0_26 = arith.constant 0 : index
    %c0_27 = arith.constant 0 : index
    %58 = vector.load %arg4[%c0_25, %c0_26, %c0_27] : memref<1x16x128xf32, #tpu.memory_space<vmem>>, vector<1x16x128xf32>
    %59 = vector.shape_cast %58 : vector<1x16x128xf32> to vector<16x128xf32>
    %60 = vector.shape_cast %57 : vector<16x128xf32> to vector<1x16x128xf32>
    tpu.vector_store %arg4[%c0_25, %c0_26, %c0_27], %60 {strides = array<i32>} : memref<1x16x128xf32, #tpu.memory_space<vmem>>, vector<1x16x128xf32>,
    return
  }
  func.func @transform_0(%arg0: i32) -> (i32, i32, i32) {
    %c0_i32 = arith.constant 0 : i32
    %c0_i32_0 = arith.constant 0 : i32
    %c0_i32_1 = arith.constant 0 : i32
    return %arg0, %c0_i32, %c0_i32_0 : i32, i32, i32
  }
  func.func @transform_1(%arg0: i32) -> (i32, i32) {
    %c0_i32 = arith.constant 0 : i32
    %c0_i32_0 = arith.constant 0 : i32
    %c0_i32_1 = arith.constant 0 : i32
    return %c0_i32, %c0_i32_0 : i32, i32
  }
  func.func @transform_2(%arg0: i32) -> (i32, i32) {
    %c0_i32 = arith.constant 0 : i32
    %c0_i32_0 = arith.constant 0 : i32
    %c0_i32_1 = arith.constant 0 : i32
    return %c0_i32, %c0_i32_0 : i32, i32
  }
  func.func @transform_3(%arg0: i32) -> (i32, i32, i32) {
    %c0_i32 = arith.constant 0 : i32
    %c0_i32_0 = arith.constant 0 : i32
    %c0_i32_1 = arith.constant 0 : i32
    return %arg0, %c0_i32, %c0_i32_0 : i32, i32, i32
  }
}

module attributes {stable_mosaic.version = 11 : i64} {
  func.func @_conv_layer_kernel(%arg0: i32, %arg1: memref<1x64x256xf32, #tpu.memory_space<vmem>>, %arg2: memref<32x256xf32, #tpu.memory_space<vmem>>, %arg3: memref<32x1xf32, #tpu.memory_space<vmem>>, %arg4: memref<1x32x128xf32, #tpu.memory_space<vmem>>) attributes {dimension_semantics = [#tpu.dimension_semantics<parallel>], iteration_bounds = array<i64: 2>, scalar_prefetch = 0 : i64, scratch_operands = 0 : i64, tpu.core_type = #tpu.core_type<tc>, window_params = [{transform_indices = @transform_0, window_bounds = array<i64: 1, 64, 256>}, {pipeline_mode = #tpu.pipeline_mode<synchronous>, transform_indices = @transform_1, window_bounds = array<i64: 32, 256>}, {pipeline_mode = #tpu.pipeline_mode<synchronous>, transform_indices = @transform_2, window_bounds = array<i64: 32, 1>}, {transform_indices = @transform_3, window_bounds = array<i64: 1, 32, 128>}]} {
    %c0 = arith.constant 0 : index
    %c0_0 = arith.constant 0 : index
    %c0_1 = arith.constant 0 : index
    %0 = vector.load %arg1[%c0, %c0_0, %c0_1] : memref<1x64x256xf32, #tpu.memory_space<vmem>>, vector<1x64x128xf32>
    %1 = vector.shape_cast %0 : vector<1x64x128xf32> to vector<64x128xf32>
    %c0_2 = arith.constant 0 : index
    %c0_3 = arith.constant 0 : index
    %c1 = arith.constant 1 : index
    %2 = vector.load %arg1[%c0_2, %c0_3, %c1] : memref<1x64x256xf32, #tpu.memory_space<vmem>>, vector<1x64x128xf32>
    %3 = vector.shape_cast %2 : vector<1x64x128xf32> to vector<64x128xf32>
    %c0_4 = arith.constant 0 : index
    %c0_5 = arith.constant 0 : index
    %c5 = arith.constant 5 : index
    %4 = vector.load %arg1[%c0_4, %c0_5, %c5] : memref<1x64x256xf32, #tpu.memory_space<vmem>>, vector<1x64x128xf32>
    %5 = vector.shape_cast %4 : vector<1x64x128xf32> to vector<64x128xf32>
    %c0_6 = arith.constant 0 : index
    %c0_7 = arith.constant 0 : index
    %c6 = arith.constant 6 : index
    %6 = vector.load %arg1[%c0_6, %c0_7, %c6] : memref<1x64x256xf32, #tpu.memory_space<vmem>>, vector<1x64x128xf32>
    %7 = vector.shape_cast %6 : vector<1x64x128xf32> to vector<64x128xf32>
    %8 = tpu.concatenate %1, %3, %5, %7 in 0 : vector<64x128xf32>, vector<64x128xf32>, vector<64x128xf32>, vector<64x128xf32> -> vector<256x128xf32>
    %c0_8 = arith.constant 0 : index
    %c0_9 = arith.constant 0 : index
    %9 = vector.load %arg2[%c0_8, %c0_9] : memref<32x256xf32, #tpu.memory_space<vmem>>, vector<32x256xf32>
    %cst = arith.constant dense<0.000000e+00> : vector<32x128xf32>
    %10 = tpu.matmul %9, %8, %cst {dimension_numbers = #tpu.dot_dimension_numbers<[1], [0], [0], [1], [0, 0, 1, 1], [], []>} : vector<32x256xf32>, vector<256x128xf32>, vector<32x128xf32> -> vector<32x128xf32>
    %c0_10 = arith.constant 0 : index
    %c0_11 = arith.constant 0 : index
    %11 = vector.load %arg3[%c0_10, %c0_11] : memref<32x1xf32, #tpu.memory_space<vmem>>, vector<32x1xf32>
    %12 = vector.broadcast %11 : vector<32x1xf32> to vector<32x128xf32>
    %13 = arith.addf %10, %12 : vector<32x128xf32>
    %14 = tpu.iota {dimensions = array<i32: 1>} : vector<1x128xi32>
    %15 = arith.sitofp %14 : vector<1x128xi32> to vector<1x128xf32>
    %cst_12 = arith.constant 5.000000e-01 : f32
    %16 = vector.broadcast %cst_12 : f32 to vector<1x128xf32>
    %17 = arith.addf %15, %16 : vector<1x128xf32>
    %cst_13 = arith.constant 2.000000e-01 : f32
    %18 = vector.broadcast %cst_13 : f32 to vector<1x128xf32>
    %19 = arith.mulf %17, %18 : vector<1x128xf32>
    %20 = math.floor %19 : vector<1x128xf32>
    %cst_14 = arith.constant 5.000000e+00 : f32
    %21 = vector.broadcast %cst_14 : f32 to vector<1x128xf32>
    %22 = arith.mulf %20, %21 : vector<1x128xf32>
    %23 = arith.subf %15, %22 : vector<1x128xf32>
    %cst_15 = arith.constant 4.000000e+00 : f32
    %24 = vector.broadcast %cst_15 : f32 to vector<1x128xf32>
    %25 = arith.cmpf olt, %23, %24 : vector<1x128xf32>
    %cst_16 = arith.constant 4.000000e+00 : f32
    %26 = vector.broadcast %cst_16 : f32 to vector<1x128xf32>
    %27 = arith.cmpf olt, %20, %26 : vector<1x128xf32>
    %28 = arith.andi %25, %27 : vector<1x128xi1>
    %29 = arith.extui %28 : vector<1x128xi1> to vector<1x128xi32>
    %30 = arith.sitofp %29 : vector<1x128xi32> to vector<1x128xf32>
    %31 = vector.broadcast %30 : vector<1x128xf32> to vector<32x128xf32>
    %32 = arith.mulf %13, %31 : vector<32x128xf32>
    %cst_17 = arith.constant dense<0.000000e+00> : vector<32xf32>
    %33 = vector.multi_reduction <add>, %32, %cst_17 [1] : vector<32x128xf32> to vector<32xf32>
    %34 = vector.shape_cast %33 : vector<32xf32> to vector<32x1xf32>
    %cst_18 = arith.constant 6.250000e-02 : f32
    %35 = vector.broadcast %cst_18 : f32 to vector<32x1xf32>
    %36 = arith.mulf %34, %35 : vector<32x1xf32>
    %37 = arith.mulf %32, %13 : vector<32x128xf32>
    %cst_19 = arith.constant dense<0.000000e+00> : vector<32xf32>
    %38 = vector.multi_reduction <add>, %37, %cst_19 [1] : vector<32x128xf32> to vector<32xf32>
    %39 = vector.shape_cast %38 : vector<32xf32> to vector<32x1xf32>
    %cst_20 = arith.constant 6.250000e-02 : f32
    %40 = vector.broadcast %cst_20 : f32 to vector<32x1xf32>
    %41 = arith.mulf %39, %40 : vector<32x1xf32>
    %42 = arith.mulf %36, %36 : vector<32x1xf32>
    %43 = arith.subf %41, %42 : vector<32x1xf32>
    %cst_21 = arith.constant 0.000000e+00 : f32
    %44 = vector.broadcast %cst_21 : f32 to vector<32x1xf32>
    %45 = arith.maximumf %43, %44 : vector<32x1xf32>
    %46 = vector.broadcast %36 : vector<32x1xf32> to vector<32x128xf32>
    %47 = arith.subf %13, %46 : vector<32x128xf32>
    %cst_22 = arith.constant 9.99999974E-6 : f32
    %48 = vector.broadcast %cst_22 : f32 to vector<32x1xf32>
    %49 = arith.addf %45, %48 : vector<32x1xf32>
    %50 = math.rsqrt %49 : vector<32x1xf32>
    %51 = vector.broadcast %50 : vector<32x1xf32> to vector<32x128xf32>
    %52 = arith.mulf %47, %51 : vector<32x128xf32>
    %cst_23 = arith.constant 0.000000e+00 : f32
    %53 = vector.broadcast %cst_23 : f32 to vector<32x128xf32>
    %54 = arith.cmpf ogt, %52, %53 : vector<32x128xf32>
    %cst_24 = arith.constant 2.000000e-01 : f32
    %55 = vector.broadcast %cst_24 : f32 to vector<32x128xf32>
    %56 = arith.mulf %55, %52 : vector<32x128xf32>
    %57 = arith.select %54, %52, %56 : vector<32x128xi1>, vector<32x128xf32>
    %c0_25 = arith.constant 0 : index
    %c0_26 = arith.constant 0 : index
    %c0_27 = arith.constant 0 : index
    %58 = vector.load %arg4[%c0_25, %c0_26, %c0_27] : memref<1x32x128xf32, #tpu.memory_space<vmem>>, vector<1x32x128xf32>
    %59 = vector.shape_cast %58 : vector<1x32x128xf32> to vector<32x128xf32>
    %60 = vector.shape_cast %57 : vector<32x128xf32> to vector<1x32x128xf32>
    tpu.vector_store %arg4[%c0_25, %c0_26, %c0_27], %60 {strides = array<i32>} : memref<1x32x128xf32, #tpu.memory_space<vmem>>, vector<1x32x128xf32>,
    return
  }
  func.func @transform_0(%arg0: i32) -> (i32, i32, i32) {
    %c0_i32 = arith.constant 0 : i32
    %c0_i32_0 = arith.constant 0 : i32
    %c0_i32_1 = arith.constant 0 : i32
    return %arg0, %c0_i32, %c0_i32_0 : i32, i32, i32
  }
  func.func @transform_1(%arg0: i32) -> (i32, i32) {
    %c0_i32 = arith.constant 0 : i32
    %c0_i32_0 = arith.constant 0 : i32
    %c0_i32_1 = arith.constant 0 : i32
    return %c0_i32, %c0_i32_0 : i32, i32
  }
  func.func @transform_2(%arg0: i32) -> (i32, i32) {
    %c0_i32 = arith.constant 0 : i32
    %c0_i32_0 = arith.constant 0 : i32
    %c0_i32_1 = arith.constant 0 : i32
    return %c0_i32, %c0_i32_0 : i32, i32
  }
  func.func @transform_3(%arg0: i32) -> (i32, i32, i32) {
    %c0_i32 = arith.constant 0 : i32
    %c0_i32_0 = arith.constant 0 : i32
    %c0_i32_1 = arith.constant 0 : i32
    return %arg0, %c0_i32, %c0_i32_0 : i32, i32, i32
  }
}

module attributes {stable_mosaic.version = 11 : i64} {
  func.func @_conv_layer_kernel(%arg0: i32, %arg1: memref<1x32x256xf32, #tpu.memory_space<vmem>>, %arg2: memref<64x512xf32, #tpu.memory_space<vmem>>, %arg3: memref<64x1xf32, #tpu.memory_space<vmem>>, %arg4: memref<1x64x128xf32, #tpu.memory_space<vmem>>) attributes {dimension_semantics = [#tpu.dimension_semantics<parallel>], iteration_bounds = array<i64: 2>, scalar_prefetch = 0 : i64, scratch_operands = 0 : i64, tpu.core_type = #tpu.core_type<tc>, window_params = [{transform_indices = @transform_0, window_bounds = array<i64: 1, 32, 256>}, {pipeline_mode = #tpu.pipeline_mode<synchronous>, transform_indices = @transform_1, window_bounds = array<i64: 64, 512>}, {pipeline_mode = #tpu.pipeline_mode<synchronous>, transform_indices = @transform_2, window_bounds = array<i64: 64, 1>}, {transform_indices = @transform_3, window_bounds = array<i64: 1, 64, 128>}]} {
    %c0 = arith.constant 0 : index
    %c0_0 = arith.constant 0 : index
    %c0_1 = arith.constant 0 : index
    %0 = vector.load %arg1[%c0, %c0_0, %c0_1] : memref<1x32x256xf32, #tpu.memory_space<vmem>>, vector<1x32x128xf32>
    %1 = vector.shape_cast %0 : vector<1x32x128xf32> to vector<32x128xf32>
    %c0_2 = arith.constant 0 : index
    %c0_3 = arith.constant 0 : index
    %c1 = arith.constant 1 : index
    %2 = vector.load %arg1[%c0_2, %c0_3, %c1] : memref<1x32x256xf32, #tpu.memory_space<vmem>>, vector<1x32x128xf32>
    %3 = vector.shape_cast %2 : vector<1x32x128xf32> to vector<32x128xf32>
    %c0_4 = arith.constant 0 : index
    %c0_5 = arith.constant 0 : index
    %c2 = arith.constant 2 : index
    %4 = vector.load %arg1[%c0_4, %c0_5, %c2] : memref<1x32x256xf32, #tpu.memory_space<vmem>>, vector<1x32x128xf32>
    %5 = vector.shape_cast %4 : vector<1x32x128xf32> to vector<32x128xf32>
    %c0_6 = arith.constant 0 : index
    %c0_7 = arith.constant 0 : index
    %c3 = arith.constant 3 : index
    %6 = vector.load %arg1[%c0_6, %c0_7, %c3] : memref<1x32x256xf32, #tpu.memory_space<vmem>>, vector<1x32x128xf32>
    %7 = vector.shape_cast %6 : vector<1x32x128xf32> to vector<32x128xf32>
    %c0_8 = arith.constant 0 : index
    %c0_9 = arith.constant 0 : index
    %c6 = arith.constant 6 : index
    %8 = vector.load %arg1[%c0_8, %c0_9, %c6] : memref<1x32x256xf32, #tpu.memory_space<vmem>>, vector<1x32x128xf32>
    %9 = vector.shape_cast %8 : vector<1x32x128xf32> to vector<32x128xf32>
    %c0_10 = arith.constant 0 : index
    %c0_11 = arith.constant 0 : index
    %c7 = arith.constant 7 : index
    %10 = vector.load %arg1[%c0_10, %c0_11, %c7] : memref<1x32x256xf32, #tpu.memory_space<vmem>>, vector<1x32x128xf32>
    %11 = vector.shape_cast %10 : vector<1x32x128xf32> to vector<32x128xf32>
    %c0_12 = arith.constant 0 : index
    %c0_13 = arith.constant 0 : index
    %c8 = arith.constant 8 : index
    %12 = vector.load %arg1[%c0_12, %c0_13, %c8] : memref<1x32x256xf32, #tpu.memory_space<vmem>>, vector<1x32x128xf32>
    %13 = vector.shape_cast %12 : vector<1x32x128xf32> to vector<32x128xf32>
    %c0_14 = arith.constant 0 : index
    %c0_15 = arith.constant 0 : index
    %c9 = arith.constant 9 : index
    %14 = vector.load %arg1[%c0_14, %c0_15, %c9] : memref<1x32x256xf32, #tpu.memory_space<vmem>>, vector<1x32x128xf32>
    %15 = vector.shape_cast %14 : vector<1x32x128xf32> to vector<32x128xf32>
    %c0_16 = arith.constant 0 : index
    %c0_17 = arith.constant 0 : index
    %c12 = arith.constant 12 : index
    %16 = vector.load %arg1[%c0_16, %c0_17, %c12] : memref<1x32x256xf32, #tpu.memory_space<vmem>>, vector<1x32x128xf32>
    %17 = vector.shape_cast %16 : vector<1x32x128xf32> to vector<32x128xf32>
    %c0_18 = arith.constant 0 : index
    %c0_19 = arith.constant 0 : index
    %c13 = arith.constant 13 : index
    %18 = vector.load %arg1[%c0_18, %c0_19, %c13] : memref<1x32x256xf32, #tpu.memory_space<vmem>>, vector<1x32x128xf32>
    %19 = vector.shape_cast %18 : vector<1x32x128xf32> to vector<32x128xf32>
    %c0_20 = arith.constant 0 : index
    %c0_21 = arith.constant 0 : index
    %c14 = arith.constant 14 : index
    %20 = vector.load %arg1[%c0_20, %c0_21, %c14] : memref<1x32x256xf32, #tpu.memory_space<vmem>>, vector<1x32x128xf32>
    %21 = vector.shape_cast %20 : vector<1x32x128xf32> to vector<32x128xf32>
    %c0_22 = arith.constant 0 : index
    %c0_23 = arith.constant 0 : index
    %c15 = arith.constant 15 : index
    %22 = vector.load %arg1[%c0_22, %c0_23, %c15] : memref<1x32x256xf32, #tpu.memory_space<vmem>>, vector<1x32x128xf32>
    %23 = vector.shape_cast %22 : vector<1x32x128xf32> to vector<32x128xf32>
    %c0_24 = arith.constant 0 : index
    %c0_25 = arith.constant 0 : index
    %c18 = arith.constant 18 : index
    %24 = vector.load %arg1[%c0_24, %c0_25, %c18] : memref<1x32x256xf32, #tpu.memory_space<vmem>>, vector<1x32x128xf32>
    %25 = vector.shape_cast %24 : vector<1x32x128xf32> to vector<32x128xf32>
    %c0_26 = arith.constant 0 : index
    %c0_27 = arith.constant 0 : index
    %c19 = arith.constant 19 : index
    %26 = vector.load %arg1[%c0_26, %c0_27, %c19] : memref<1x32x256xf32, #tpu.memory_space<vmem>>, vector<1x32x128xf32>
    %27 = vector.shape_cast %26 : vector<1x32x128xf32> to vector<32x128xf32>
    %c0_28 = arith.constant 0 : index
    %c0_29 = arith.constant 0 : index
    %c20 = arith.constant 20 : index
    %28 = vector.load %arg1[%c0_28, %c0_29, %c20] : memref<1x32x256xf32, #tpu.memory_space<vmem>>, vector<1x32x128xf32>
    %29 = vector.shape_cast %28 : vector<1x32x128xf32> to vector<32x128xf32>
    %c0_30 = arith.constant 0 : index
    %c0_31 = arith.constant 0 : index
    %c21 = arith.constant 21 : index
    %30 = vector.load %arg1[%c0_30, %c0_31, %c21] : memref<1x32x256xf32, #tpu.memory_space<vmem>>, vector<1x32x128xf32>
    %31 = vector.shape_cast %30 : vector<1x32x128xf32> to vector<32x128xf32>
    %32 = tpu.concatenate %1, %3, %5, %7, %9, %11, %13, %15, %17, %19, %21, %23, %25, %27, %29, %31 in 0 : vector<32x128xf32>, vector<32x128xf32>, vector<32x128xf32>, vector<32x128xf32>, vector<32x128xf32>, vector<32x128xf32>, vector<32x128xf32>, vector<32x128xf32>, vector<32x128xf32>, vector<32x128xf32>, vector<32x128xf32>, vector<32x128xf32>, vector<32x128xf32>, vector<32x128xf32>, vector<32x128xf32>, vector<32x128xf32> -> vector<512x128xf32>
    %c0_32 = arith.constant 0 : index
    %c0_33 = arith.constant 0 : index
    %33 = vector.load %arg2[%c0_32, %c0_33] : memref<64x512xf32, #tpu.memory_space<vmem>>, vector<64x512xf32>
    %cst = arith.constant dense<0.000000e+00> : vector<64x128xf32>
    %34 = tpu.matmul %33, %32, %cst {dimension_numbers = #tpu.dot_dimension_numbers<[1], [0], [0], [1], [0, 0, 1, 1], [], []>} : vector<64x512xf32>, vector<512x128xf32>, vector<64x128xf32> -> vector<64x128xf32>
    %c0_34 = arith.constant 0 : index
    %c0_35 = arith.constant 0 : index
    %35 = vector.load %arg3[%c0_34, %c0_35] : memref<64x1xf32, #tpu.memory_space<vmem>>, vector<64x1xf32>
    %36 = vector.broadcast %35 : vector<64x1xf32> to vector<64x128xf32>
    %37 = arith.addf %34, %36 : vector<64x128xf32>
    %38 = tpu.iota {dimensions = array<i32: 1>} : vector<1x128xi32>
    %39 = arith.sitofp %38 : vector<1x128xi32> to vector<1x128xf32>
    %cst_36 = arith.constant 5.000000e-01 : f32
    %40 = vector.broadcast %cst_36 : f32 to vector<1x128xf32>
    %41 = arith.addf %39, %40 : vector<1x128xf32>
    %cst_37 = arith.constant 0.166666672 : f32
    %42 = vector.broadcast %cst_37 : f32 to vector<1x128xf32>
    %43 = arith.mulf %41, %42 : vector<1x128xf32>
    %44 = math.floor %43 : vector<1x128xf32>
    %cst_38 = arith.constant 6.000000e+00 : f32
    %45 = vector.broadcast %cst_38 : f32 to vector<1x128xf32>
    %46 = arith.mulf %44, %45 : vector<1x128xf32>
    %47 = arith.subf %39, %46 : vector<1x128xf32>
    %cst_39 = arith.constant 3.000000e+00 : f32
    %48 = vector.broadcast %cst_39 : f32 to vector<1x128xf32>
    %49 = arith.cmpf olt, %47, %48 : vector<1x128xf32>
    %cst_40 = arith.constant 3.000000e+00 : f32
    %50 = vector.broadcast %cst_40 : f32 to vector<1x128xf32>
    %51 = arith.cmpf olt, %44, %50 : vector<1x128xf32>
    %52 = arith.andi %49, %51 : vector<1x128xi1>
    %53 = arith.extui %52 : vector<1x128xi1> to vector<1x128xi32>
    %54 = arith.sitofp %53 : vector<1x128xi32> to vector<1x128xf32>
    %55 = vector.broadcast %54 : vector<1x128xf32> to vector<64x128xf32>
    %56 = arith.mulf %37, %55 : vector<64x128xf32>
    %cst_41 = arith.constant dense<0.000000e+00> : vector<64xf32>
    %57 = vector.multi_reduction <add>, %56, %cst_41 [1] : vector<64x128xf32> to vector<64xf32>
    %58 = vector.shape_cast %57 : vector<64xf32> to vector<64x1xf32>
    %cst_42 = arith.constant 0.111111112 : f32
    %59 = vector.broadcast %cst_42 : f32 to vector<64x1xf32>
    %60 = arith.mulf %58, %59 : vector<64x1xf32>
    %61 = arith.mulf %56, %37 : vector<64x128xf32>
    %cst_43 = arith.constant dense<0.000000e+00> : vector<64xf32>
    %62 = vector.multi_reduction <add>, %61, %cst_43 [1] : vector<64x128xf32> to vector<64xf32>
    %63 = vector.shape_cast %62 : vector<64xf32> to vector<64x1xf32>
    %cst_44 = arith.constant 0.111111112 : f32
    %64 = vector.broadcast %cst_44 : f32 to vector<64x1xf32>
    %65 = arith.mulf %63, %64 : vector<64x1xf32>
    %66 = arith.mulf %60, %60 : vector<64x1xf32>
    %67 = arith.subf %65, %66 : vector<64x1xf32>
    %cst_45 = arith.constant 0.000000e+00 : f32
    %68 = vector.broadcast %cst_45 : f32 to vector<64x1xf32>
    %69 = arith.maximumf %67, %68 : vector<64x1xf32>
    %70 = vector.broadcast %60 : vector<64x1xf32> to vector<64x128xf32>
    %71 = arith.subf %37, %70 : vector<64x128xf32>
    %cst_46 = arith.constant 9.99999974E-6 : f32
    %72 = vector.broadcast %cst_46 : f32 to vector<64x1xf32>
    %73 = arith.addf %69, %72 : vector<64x1xf32>
    %74 = math.rsqrt %73 : vector<64x1xf32>
    %75 = vector.broadcast %74 : vector<64x1xf32> to vector<64x128xf32>
    %76 = arith.mulf %71, %75 : vector<64x128xf32>
    %cst_47 = arith.constant 0.000000e+00 : f32
    %77 = vector.broadcast %cst_47 : f32 to vector<64x128xf32>
    %78 = arith.cmpf ogt, %76, %77 : vector<64x128xf32>
    %cst_48 = arith.constant 2.000000e-01 : f32
    %79 = vector.broadcast %cst_48 : f32 to vector<64x128xf32>
    %80 = arith.mulf %79, %76 : vector<64x128xf32>
    %81 = arith.select %78, %76, %80 : vector<64x128xi1>, vector<64x128xf32>
    %c0_49 = arith.constant 0 : index
    %c0_50 = arith.constant 0 : index
    %c0_51 = arith.constant 0 : index
    %82 = vector.load %arg4[%c0_49, %c0_50, %c0_51] : memref<1x64x128xf32, #tpu.memory_space<vmem>>, vector<1x64x128xf32>
    %83 = vector.shape_cast %82 : vector<1x64x128xf32> to vector<64x128xf32>
    %84 = vector.shape_cast %81 : vector<64x128xf32> to vector<1x64x128xf32>
    tpu.vector_store %arg4[%c0_49, %c0_50, %c0_51], %84 {strides = array<i32>} : memref<1x64x128xf32, #tpu.memory_space<vmem>>, vector<1x64x128xf32>,
    return
  }
  func.func @transform_0(%arg0: i32) -> (i32, i32, i32) {
    %c0_i32 = arith.constant 0 : i32
    %c0_i32_0 = arith.constant 0 : i32
    %c0_i32_1 = arith.constant 0 : i32
    return %arg0, %c0_i32, %c0_i32_0 : i32, i32, i32
  }
  func.func @transform_1(%arg0: i32) -> (i32, i32) {
    %c0_i32 = arith.constant 0 : i32
    %c0_i32_0 = arith.constant 0 : i32
    %c0_i32_1 = arith.constant 0 : i32
    return %c0_i32, %c0_i32_0 : i32, i32
  }
  func.func @transform_2(%arg0: i32) -> (i32, i32) {
    %c0_i32 = arith.constant 0 : i32
    %c0_i32_0 = arith.constant 0 : i32
    %c0_i32_1 = arith.constant 0 : i32
    return %c0_i32, %c0_i32_0 : i32, i32
  }
  func.func @transform_3(%arg0: i32) -> (i32, i32, i32) {
    %c0_i32 = arith.constant 0 : i32
    %c0_i32_0 = arith.constant 0 : i32
    %c0_i32_1 = arith.constant 0 : i32
    return %arg0, %c0_i32, %c0_i32_0 : i32, i32, i32
  }
}

module attributes {stable_mosaic.version = 11 : i64} {
  func.func @_conv_layer_kernel(%arg0: i32, %arg1: memref<1x64x256xf32, #tpu.memory_space<vmem>>, %arg2: memref<1x1024xf32, #tpu.memory_space<vmem>>, %arg3: memref<1x1xf32, #tpu.memory_space<vmem>>, %arg4: memref<1x1x128xf32, #tpu.memory_space<vmem>>) attributes {dimension_semantics = [#tpu.dimension_semantics<parallel>], iteration_bounds = array<i64: 2>, scalar_prefetch = 0 : i64, scratch_operands = 0 : i64, tpu.core_type = #tpu.core_type<tc>, window_params = [{transform_indices = @transform_0, window_bounds = array<i64: 1, 64, 256>}, {pipeline_mode = #tpu.pipeline_mode<synchronous>, transform_indices = @transform_1, window_bounds = array<i64: 1, 1024>}, {pipeline_mode = #tpu.pipeline_mode<synchronous>, transform_indices = @transform_2, window_bounds = array<i64: 1, 1>}, {transform_indices = @transform_3, window_bounds = array<i64: 1, 1, 128>}]} {
    %c0 = arith.constant 0 : index
    %c0_0 = arith.constant 0 : index
    %c0_1 = arith.constant 0 : index
    %0 = vector.load %arg1[%c0, %c0_0, %c0_1] : memref<1x64x256xf32, #tpu.memory_space<vmem>>, vector<1x64x128xf32>
    %1 = vector.shape_cast %0 : vector<1x64x128xf32> to vector<64x128xf32>
    %c0_2 = arith.constant 0 : index
    %c0_3 = arith.constant 0 : index
    %c1 = arith.constant 1 : index
    %2 = vector.load %arg1[%c0_2, %c0_3, %c1] : memref<1x64x256xf32, #tpu.memory_space<vmem>>, vector<1x64x128xf32>
    %3 = vector.shape_cast %2 : vector<1x64x128xf32> to vector<64x128xf32>
    %c0_4 = arith.constant 0 : index
    %c0_5 = arith.constant 0 : index
    %c2 = arith.constant 2 : index
    %4 = vector.load %arg1[%c0_4, %c0_5, %c2] : memref<1x64x256xf32, #tpu.memory_space<vmem>>, vector<1x64x128xf32>
    %5 = vector.shape_cast %4 : vector<1x64x128xf32> to vector<64x128xf32>
    %c0_6 = arith.constant 0 : index
    %c0_7 = arith.constant 0 : index
    %c3 = arith.constant 3 : index
    %6 = vector.load %arg1[%c0_6, %c0_7, %c3] : memref<1x64x256xf32, #tpu.memory_space<vmem>>, vector<1x64x128xf32>
    %7 = vector.shape_cast %6 : vector<1x64x128xf32> to vector<64x128xf32>
    %c0_8 = arith.constant 0 : index
    %c0_9 = arith.constant 0 : index
    %c5 = arith.constant 5 : index
    %8 = vector.load %arg1[%c0_8, %c0_9, %c5] : memref<1x64x256xf32, #tpu.memory_space<vmem>>, vector<1x64x128xf32>
    %9 = vector.shape_cast %8 : vector<1x64x128xf32> to vector<64x128xf32>
    %c0_10 = arith.constant 0 : index
    %c0_11 = arith.constant 0 : index
    %c6 = arith.constant 6 : index
    %10 = vector.load %arg1[%c0_10, %c0_11, %c6] : memref<1x64x256xf32, #tpu.memory_space<vmem>>, vector<1x64x128xf32>
    %11 = vector.shape_cast %10 : vector<1x64x128xf32> to vector<64x128xf32>
    %c0_12 = arith.constant 0 : index
    %c0_13 = arith.constant 0 : index
    %c7 = arith.constant 7 : index
    %12 = vector.load %arg1[%c0_12, %c0_13, %c7] : memref<1x64x256xf32, #tpu.memory_space<vmem>>, vector<1x64x128xf32>
    %13 = vector.shape_cast %12 : vector<1x64x128xf32> to vector<64x128xf32>
    %c0_14 = arith.constant 0 : index
    %c0_15 = arith.constant 0 : index
    %c8 = arith.constant 8 : index
    %14 = vector.load %arg1[%c0_14, %c0_15, %c8] : memref<1x64x256xf32, #tpu.memory_space<vmem>>, vector<1x64x128xf32>
    %15 = vector.shape_cast %14 : vector<1x64x128xf32> to vector<64x128xf32>
    %c0_16 = arith.constant 0 : index
    %c0_17 = arith.constant 0 : index
    %c10 = arith.constant 10 : index
    %16 = vector.load %arg1[%c0_16, %c0_17, %c10] : memref<1x64x256xf32, #tpu.memory_space<vmem>>, vector<1x64x128xf32>
    %17 = vector.shape_cast %16 : vector<1x64x128xf32> to vector<64x128xf32>
    %c0_18 = arith.constant 0 : index
    %c0_19 = arith.constant 0 : index
    %c11 = arith.constant 11 : index
    %18 = vector.load %arg1[%c0_18, %c0_19, %c11] : memref<1x64x256xf32, #tpu.memory_space<vmem>>, vector<1x64x128xf32>
    %19 = vector.shape_cast %18 : vector<1x64x128xf32> to vector<64x128xf32>
    %c0_20 = arith.constant 0 : index
    %c0_21 = arith.constant 0 : index
    %c12 = arith.constant 12 : index
    %20 = vector.load %arg1[%c0_20, %c0_21, %c12] : memref<1x64x256xf32, #tpu.memory_space<vmem>>, vector<1x64x128xf32>
    %21 = vector.shape_cast %20 : vector<1x64x128xf32> to vector<64x128xf32>
    %c0_22 = arith.constant 0 : index
    %c0_23 = arith.constant 0 : index
    %c13 = arith.constant 13 : index
    %22 = vector.load %arg1[%c0_22, %c0_23, %c13] : memref<1x64x256xf32, #tpu.memory_space<vmem>>, vector<1x64x128xf32>
    %23 = vector.shape_cast %22 : vector<1x64x128xf32> to vector<64x128xf32>
    %c0_24 = arith.constant 0 : index
    %c0_25 = arith.constant 0 : index
    %c15 = arith.constant 15 : index
    %24 = vector.load %arg1[%c0_24, %c0_25, %c15] : memref<1x64x256xf32, #tpu.memory_space<vmem>>, vector<1x64x128xf32>
    %25 = vector.shape_cast %24 : vector<1x64x128xf32> to vector<64x128xf32>
    %c0_26 = arith.constant 0 : index
    %c0_27 = arith.constant 0 : index
    %c16 = arith.constant 16 : index
    %26 = vector.load %arg1[%c0_26, %c0_27, %c16] : memref<1x64x256xf32, #tpu.memory_space<vmem>>, vector<1x64x128xf32>
    %27 = vector.shape_cast %26 : vector<1x64x128xf32> to vector<64x128xf32>
    %c0_28 = arith.constant 0 : index
    %c0_29 = arith.constant 0 : index
    %c17 = arith.constant 17 : index
    %28 = vector.load %arg1[%c0_28, %c0_29, %c17] : memref<1x64x256xf32, #tpu.memory_space<vmem>>, vector<1x64x128xf32>
    %29 = vector.shape_cast %28 : vector<1x64x128xf32> to vector<64x128xf32>
    %c0_30 = arith.constant 0 : index
    %c0_31 = arith.constant 0 : index
    %c18 = arith.constant 18 : index
    %30 = vector.load %arg1[%c0_30, %c0_31, %c18] : memref<1x64x256xf32, #tpu.memory_space<vmem>>, vector<1x64x128xf32>
    %31 = vector.shape_cast %30 : vector<1x64x128xf32> to vector<64x128xf32>
    %32 = tpu.concatenate %1, %3, %5, %7, %9, %11, %13, %15, %17, %19, %21, %23, %25, %27, %29, %31 in 0 : vector<64x128xf32>, vector<64x128xf32>, vector<64x128xf32>, vector<64x128xf32>, vector<64x128xf32>, vector<64x128xf32>, vector<64x128xf32>, vector<64x128xf32>, vector<64x128xf32>, vector<64x128xf32>, vector<64x128xf32>, vector<64x128xf32>, vector<64x128xf32>, vector<64x128xf32>, vector<64x128xf32>, vector<64x128xf32> -> vector<1024x128xf32>
    %c0_32 = arith.constant 0 : index
    %c0_33 = arith.constant 0 : index
    %33 = vector.load %arg2[%c0_32, %c0_33] : memref<1x1024xf32, #tpu.memory_space<vmem>>, vector<1x1024xf32>
    %cst = arith.constant dense<0.000000e+00> : vector<1x128xf32>
    %34 = tpu.matmul %33, %32, %cst {dimension_numbers = #tpu.dot_dimension_numbers<[1], [0], [0], [1], [0, 0, 1, 1], [], []>} : vector<1x1024xf32>, vector<1024x128xf32>, vector<1x128xf32> -> vector<1x128xf32>
    %c0_34 = arith.constant 0 : index
    %c0_35 = arith.constant 0 : index
    %35 = vector.load %arg3[%c0_34, %c0_35] : memref<1x1xf32, #tpu.memory_space<vmem>>, vector<1x1xf32>
    %36 = vector.broadcast %35 : vector<1x1xf32> to vector<1x128xf32>
    %37 = arith.addf %34, %36 : vector<1x128xf32>
    %c0_36 = arith.constant 0 : index
    %c0_37 = arith.constant 0 : index
    %c0_38 = arith.constant 0 : index
    %38 = vector.load %arg4[%c0_36, %c0_37, %c0_38] : memref<1x1x128xf32, #tpu.memory_space<vmem>>, vector<1x1x128xf32>
    %39 = vector.shape_cast %38 : vector<1x1x128xf32> to vector<1x128xf32>
    %40 = vector.shape_cast %37 : vector<1x128xf32> to vector<1x1x128xf32>
    tpu.vector_store %arg4[%c0_36, %c0_37, %c0_38], %40 {strides = array<i32>} : memref<1x1x128xf32, #tpu.memory_space<vmem>>, vector<1x1x128xf32>,
    return
  }
  func.func @transform_0(%arg0: i32) -> (i32, i32, i32) {
    %c0_i32 = arith.constant 0 : i32
    %c0_i32_0 = arith.constant 0 : i32
    %c0_i32_1 = arith.constant 0 : i32
    return %arg0, %c0_i32, %c0_i32_0 : i32, i32, i32
  }
  func.func @transform_1(%arg0: i32) -> (i32, i32) {
    %c0_i32 = arith.constant 0 : i32
    %c0_i32_0 = arith.constant 0 : i32
    %c0_i32_1 = arith.constant 0 : i32
    return %c0_i32, %c0_i32_0 : i32, i32
  }
  func.func @transform_2(%arg0: i32) -> (i32, i32) {
    %c0_i32 = arith.constant 0 : i32
    %c0_i32_0 = arith.constant 0 : i32
    %c0_i32_1 = arith.constant 0 : i32
    return %c0_i32, %c0_i32_0 : i32, i32
  }
  func.func @transform_3(%arg0: i32) -> (i32, i32, i32) {
    %c0_i32 = arith.constant 0 : i32
    %c0_i32_0 = arith.constant 0 : i32
    %c0_i32_1 = arith.constant 0 : i32
    return %arg0, %c0_i32, %c0_i32_0 : i32, i32, i32
  }
}

</mosaic_0001>

<llo_original>
// kernel: nlayer_discriminator_forward.5
$region0: #{nlayer_discriminator_forward.5}
  #allocation0 [shape = 'u32[]', space=smem, size = 0x4, offset = 0x4, fixed_abs, tag = 'smem constant byte address 0x4 - core index']
  #allocation1 [shape = 'u32[144,128]{1,0:T(1,128)}', space=vmem, size = 0x12000, scoped, tag = 'internal scratch']
  %s0 = inlined_call_operand.vmem [shape: f32[2,12,512], index: 0, kind: input, shape index: {}]
  %s1 = inlined_call_operand.vmem [shape: f32[8,48], index: 1, kind: input, shape index: {}]
  %s2 = inlined_call_operand.vmem [shape: f32[8,1], index: 2, kind: input, shape index: {}]
  %s3 = inlined_call_operand.vmem [shape: f32[2,8,384], index: 3, kind: output, shape index: {}]
  %s4 = sld [smem:[#allocation0]]
  $region45: #{nlayer_discriminator_forward.5} parent=0
    _
  %s6 = ssub.s32 1, %s4
  %s7 = scalar_select 0, %s6, %s4
  loop: start=0, step=1, limit=4
  $region2: #{nlayer_discriminator_forward.5} parent=0 // loop_pre_header
    _
  $region3: #{nlayer_discriminator_forward.5} parent=0 // loop_header
    %s9 = sphi 0, %s13
    %p10 = scmp.ge.s32.totalorder %s9, 4
    %s19 = sphi 0, %s21
    %s22 = sphi 0, %s19
    %s23 = sphi 0, %s22
    %s39 = sphi 0, %s23
    %s43 = sphi 0, %s43
    %s45 = sphi 0, %s43
    %s46 = sphi 0, %s45
    %s60 = sphi 0, %s46
    %s64 = sphi 0, %s64
    %s66 = sphi 0, %s64
    %s67 = sphi 0, %s66
    %s81 = sphi 0, %s67
    %s87 = sphi 0, %s89
    %s90 = sphi 0, %s87
    %s91 = sphi 0, %s90
    %s107 = sphi 0, %s91
  $region4: #{nlayer_discriminator_forward.5} parent=0 // loop_header_branch
    %12 = sbr.rel (%p10) target = $region8
  $region5: #{nlayer_discriminator_forward.5} parent=0 // loop_body
    %s14 = ssub.s32 %s9, 1
    %s15 = ssub.s32 %s9, 2
    %s16 = sadd.s32 %s9, 1
    %s17 = ssub.s32 %s9, %s16
    %p18 = scmp.eq.s32.totalorder %s17, 0
    %s20 = sadd.s32 %s19, 1
    %s21 = scalar_select %p18, %s19, %s20
    %p24 = pneg %p18
    %p25 = scmp.eq.s32.totalorder %s9, 1
    %p26 = por %p24, %p25
    %p27 = scmp.ne.s32.totalorder %s19, %s22
    %p28 = scmp.eq.s32.totalorder %s9, 0
    %p29 = por %p27, %p28
    %p30 = scmp.ne.s32.totalorder %s19, %s22
    %p31 = scmp.eq.s32.totalorder %s14, 1
    %p32 = por %p30, %p31
    %p33 = scmp.ne.s32.totalorder %s22, %s23
    %p34 = scmp.eq.s32.totalorder %s14, 0
    %p35 = por %p33, %p34
    %p36 = scmp.ne.s32.totalorder %s22, %s23
    %p37 = scmp.eq.s32.totalorder %s15, 1
    %p38 = por %p36, %p37
    %p40 = scmp.ne.s32.totalorder %s23, %s39
    %p41 = scmp.eq.s32.totalorder %s15, 0
    %p42 = por %p40, %p41
    %s44 = sadd.s32 %s43, 1
    %p47 = scmp.eq.s32.totalorder %s9, 1
    %p48 = scmp.ne.s32.totalorder %s43, %s45
    %p49 = scmp.eq.s32.totalorder %s9, 0
    %p50 = por %p48, %p49
    %p51 = scmp.ne.s32.totalorder %s43, %s45
    %p52 = scmp.eq.s32.totalorder %s14, 1
    %p53 = por %p51, %p52
    %p54 = scmp.ne.s32.totalorder %s45, %s46
    %p55 = scmp.eq.s32.totalorder %s14, 0
    %p56 = por %p54, %p55
    %p57 = scmp.ne.s32.totalorder %s45, %s46
    %p58 = scmp.eq.s32.totalorder %s15, 1
    %p59 = por %p57, %p58
    %p61 = scmp.ne.s32.totalorder %s46, %s60
    %p62 = scmp.eq.s32.totalorder %s15, 0
    %p63 = por %p61, %p62
    %s65 = sadd.s32 %s64, 1
    %p68 = scmp.eq.s32.totalorder %s9, 1
    %p69 = scmp.ne.s32.totalorder %s64, %s66
    %p70 = scmp.eq.s32.totalorder %s9, 0
    %p71 = por %p69, %p70
    %p72 = scmp.ne.s32.totalorder %s64, %s66
    %p73 = scmp.eq.s32.totalorder %s14, 1
    %p74 = por %p72, %p73
    %p75 = scmp.ne.s32.totalorder %s66, %s67
    %p76 = scmp.eq.s32.totalorder %s14, 0
    %p77 = por %p75, %p76
    %p78 = scmp.ne.s32.totalorder %s66, %s67
    %p79 = scmp.eq.s32.totalorder %s15, 1
    %p80 = por %p78, %p79
    %p82 = scmp.ne.s32.totalorder %s67, %s81
    %p83 = scmp.eq.s32.totalorder %s15, 0
    %p84 = por %p82, %p83
    %s85 = ssub.s32 %s9, %s16
    %p86 = scmp.eq.s32.totalorder %s85, 0
    %s88 = sadd.s32 %s87, 1
    %s89 = scalar_select %p86, %s87, %s88
    %p92 = pneg %p86
    %p93 = scmp.eq.s32.totalorder %s9, 1
    %p94 = por %p92, %p93
    %p95 = scmp.ne.s32.totalorder %s87, %s90
    %p96 = scmp.eq.s32.totalorder %s9, 0
    %p97 = por %p95, %p96
    %p98 = scmp.ne.s32.totalorder %s87, %s90
    %p99 = scmp.eq.s32.totalorder %s14, 1
    %p100 = por %p98, %p99
    %p101 = scmp.ne.s32.totalorder %s90, %s91
    %p102 = scmp.eq.s32.totalorder %s14, 0
    %p103 = por %p101, %p102
    %p104 = scmp.ne.s32.totalorder %s90, %s91
    %p105 = scmp.eq.s32.totalorder %s15, 1
    %p106 = por %p104, %p105
    %p108 = scmp.ne.s32.totalorder %s91, %s107
    %p109 = scmp.eq.s32.totalorder %s15, 0
    %p110 = por %p108, %p109
    %p111 = scmp.le.s32.totalorder 1, %s9
    %p112 = scmp.lt.s32.totalorder %s9, 3
    %p113 = pnand %p111, %p112
    %p114 = pneg %p113
    // Predicated region
    $region9: #{nlayer_discriminator_forward.5} parent=5 // pred_check
      _
    $region10: #{nlayer_discriminator_forward.5} parent=5 // pred_check_branch
      %116 = sbr.rel (%p113) target = $region12
    $region11: #{nlayer_discriminator_forward.5} parent=5 // pred_region
      %s117 = ssub.s32 %s9, 1
      // Predicated region
      $region13: #{nlayer_discriminator_forward.5} parent=11 // pred_check
        %p118 = pneg %p56
      $region14: #{nlayer_discriminator_forward.5} parent=11 // pred_check_branch
        %120 = sbr.rel (%p118) target = $region16
      $region15: #{nlayer_discriminator_forward.5} parent=11 // pred_region
        _
      $region16: #{nlayer_discriminator_forward.5} parent=11 // pred_fallthru
        _
      // Predicated region
      $region17: #{nlayer_discriminator_forward.5} parent=11 // pred_check
        %p121 = pneg %p77
      $region18: #{nlayer_discriminator_forward.5} parent=11 // pred_check_branch
        %123 = sbr.rel (%p121) target = $region20
      $region19: #{nlayer_discriminator_forward.5} parent=11 // pred_region
        _
      $region20: #{nlayer_discriminator_forward.5} parent=11 // pred_fallthru
        _
    $region12: #{nlayer_discriminator_forward.5} parent=5 // pred_fallthru
      _
    %p124 = scmp.lt.s32.totalorder %s9, 2
    // Predicated region
    $region21: #{nlayer_discriminator_forward.5} parent=5 // pred_check
      %p125 = pneg %p124
    $region22: #{nlayer_discriminator_forward.5} parent=5 // pred_check_branch
      %127 = sbr.rel (%p125) target = $region24
    $region23: #{nlayer_discriminator_forward.5} parent=5 // pred_region
      // Predicated region
      $region25: #{nlayer_discriminator_forward.5} parent=23 // pred_check
        %p128 = pneg %p29
      $region26: #{nlayer_discriminator_forward.5} parent=23 // pred_check_branch
        %130 = sbr.rel (%p128) target = $region28
      $region27: #{nlayer_discriminator_forward.5} parent=23 // pred_region
        %p131 = scmp.lt.s32.totalorder %s9, 1
        %s132 = scalar_select %p131, %s9, 1
        %s133 = smul.addr %s132, 8
        %s134 = smul.addr %s133, 8
        %s135 = scalar_lea.vmem %s0, %s134
      $region28: #{nlayer_discriminator_forward.5} parent=23 // pred_fallthru
        _
    $region24: #{nlayer_discriminator_forward.5} parent=5 // pred_fallthru
      _
    %p136 = scmp.le.s32.totalorder 1, %s9
    %p137 = scmp.lt.s32.totalorder %s9, 3
    %p138 = pnand %p136, %p137
    %p139 = pneg %p138
    // Predicated region
    $region29: #{nlayer_discriminator_forward.5} parent=5 // pred_check
      _
    $region30: #{nlayer_discriminator_forward.5} parent=5 // pred_check_branch
      %141 = sbr.rel (%p138) target = $region32
    $region31: #{nlayer_discriminator_forward.5} parent=5 // pred_region
      %s142 = ssub.s32 %s9, 1
      %p143 = scmp.lt.s32.totalorder %s14, 1
      %s144 = scalar_select %p143, %s14, 1
      %s145 = smul.addr %s144, 8
      %s146 = smul.addr %s145, 8
      %s147 = scalar_lea.vmem %s0, %s146
      %p148 = pneg %p35
      %p149 = pneg %p32
      %p150 = pneg %p56
      %p151 = pneg %p53
      %p152 = pneg %p77
      %p153 = pneg %p74
      %p154 = pneg %p103
      %p155 = pneg %p100
      %p156 = scmp.lt.s32.totalorder %s14, 1
      %s157 = scalar_select %p156, %s14, 1
      %s158 = smul.addr %s157, 3
      %s159 = smul.addr %s158, 8
      %s160 = scalar_lea.vmem %s3, %s159
      %p161 = scmp.lt.s32.totalorder %s14, 1
      %s162 = scalar_select %p161, %s14, 1
      %s163 = smul.addr %s162, 8
      %s164 = smul.addr %s163, 8
      %s165 = scalar_lea.vmem %s0, %s164
      %p166 = scmp.lt.s32.totalorder %s14, 1
      %s167 = scalar_select %p166, %s14, 1
      %s168 = smul.addr %s167, 3
      %s169 = smul.addr %s168, 8
      %s170 = scalar_lea.vmem %s3, %s169
      %v171 = vld [vmem:[%s165] sm:$0xff]
      %v172 = vld [vmem:[%s165 + $0x8] sm:$0xff]
      %v173 = vld [vmem:[%s165 + $0x10] sm:$0xff]
      %v174 = vld [vmem:[%s165 + $0x20] sm:$0xf]
      %v175 = vld [vmem:[%s165 + $0x28] sm:$0xf]
      %v176 = vld [vmem:[%s165 + $0x30] sm:$0xf]
      %v177 = vld [vmem:[%s165 + $0x18] sm:$0xff]
      %v178 = vld [vmem:[%s165 + $0x38] sm:$0xf]
      %vm187 = vcmask 1043456
      %v188 = vrot.slane %v171, 4
      %v189 = vrot.slane %v172, 4
      %v190 = vrot.slane %v173, 4
      %v191 = vrot.slane %v177, 4
      %v192 = vrot.slane %v174, 4
      %v193 = vsel %vm187, %v188, %v192
      %v194 = vrot.slane %v175, 4
      %v195 = vsel %vm187, %v189, %v194
      %v196 = vrot.slane %v176, 4
      %v197 = vsel %vm187, %v190, %v196
      %v198 = vrot.slane %v178, 4
      %v199 = vsel %vm187, %v191, %v198
      %200 = vrot.lane.b32.xlu0 %v188, 127
      %v201 = vpop.permute.xlu0 %200
      %202 = vrot.lane.b32.xlu0 %v189, 127
      %v203 = vpop.permute.xlu0 %202
      %204 = vrot.lane.b32.xlu0 %v190, 127
      %v205 = vpop.permute.xlu0 %204
      %206 = vrot.lane.b32.xlu0 %v191, 127
      %v207 = vpop.permute.xlu0 %206
      %208 = vrot.lane.b32.xlu0 %v193, 127
      %v209 = vpop.permute.xlu0 %208
      %210 = vrot.lane.b32.xlu0 %v195, 127
      %v211 = vpop.permute.xlu0 %210
      %212 = vrot.lane.b32.xlu0 %v197, 127
      %v213 = vpop.permute.xlu0 %212
      %214 = vrot.lane.b32.xlu0 %v199, 127
      %v215 = vpop.permute.xlu0 %214
      %vm216 = vcmask 1039360
      %v217 = vsel %vm216, %v201, %v203
      %v218 = vsel %vm216, %v203, %v205
      %v219 = vsel %vm216, %v205, %v207
      %v220 = vsel %vm216, %v209, %v211
      %v221 = vsel %vm216, %v211, %v213
      %v222 = vsel %vm216, %v213, %v215
      %229 = vrot.lane.b32.xlu0 %v171, 111
      %v230 = vpop.permute.xlu0 %229
      %231 = vrot.lane.b32.xlu0 %v172, 111
      %v232 = vpop.permute.xlu0 %231
      %233 = vrot.lane.b32.xlu0 %v173, 111
      %v234 = vpop.permute.xlu0 %233
      %235 = vrot.lane.b32.xlu0 %v177, 111
      %v236 = vpop.permute.xlu0 %235
      %237 = vrot.lane.b32.xlu0 %v174, 111
      %v238 = vpop.permute.xlu0 %237
      %239 = vrot.lane.b32.xlu0 %v175, 111
      %v240 = vpop.permute.xlu0 %239
      %241 = vrot.lane.b32.xlu0 %v176, 111
      %v242 = vpop.permute.xlu0 %241
      %243 = vrot.lane.b32.xlu0 %v178, 111
      %v244 = vpop.permute.xlu0 %243
      %vm245 = vcmask 908288
      %v246 = vsel %vm245, %v230, %v232
      %v247 = vsel %vm245, %v232, %v234
      %v248 = vsel %vm245, %v234, %v236
      %v249 = vsel %vm245, %v238, %v240
      %v250 = vsel %vm245, %v240, %v242
      %v251 = vsel %vm245, %v242, %v244
      %258 = vrot.lane.b32.xlu0 %v188, 110
      %v259 = vpop.permute.xlu0 %258
      %260 = vrot.lane.b32.xlu0 %v189, 110
      %v261 = vpop.permute.xlu0 %260
      %262 = vrot.lane.b32.xlu0 %v190, 110
      %v263 = vpop.permute.xlu0 %262
      %264 = vrot.lane.b32.xlu0 %v191, 110
      %v265 = vpop.permute.xlu0 %264
      %266 = vrot.lane.b32.xlu0 %v193, 110
      %v267 = vpop.permute.xlu0 %266
      %268 = vrot.lane.b32.xlu0 %v195, 110
      %v269 = vpop.permute.xlu0 %268
      %270 = vrot.lane.b32.xlu0 %v197, 110
      %v271 = vpop.permute.xlu0 %270
      %272 = vrot.lane.b32.xlu0 %v199, 110
      %v273 = vpop.permute.xlu0 %272
      %vm274 = vcmask 900096
      %v275 = vsel %vm274, %v259, %v261
      %v276 = vsel %vm274, %v261, %v263
      %v277 = vsel %vm274, %v263, %v265
      %v278 = vsel %vm274, %v267, %v269
      %v279 = vsel %vm274, %v269, %v271
      %v280 = vsel %vm274, %v271, %v273
      %v287 = vsel %vm187, %v174, %v217
      %v288 = vsel %vm187, %v175, %v218
      %v289 = vsel %vm187, %v176, %v219
      %v290 = vsel %vm187, %v249, %v275
      %v291 = vsel %vm187, %v250, %v276
      %v292 = vsel %vm187, %v251, %v277
      %v293 = vld [vmem:[%s1] sm:$0xff]
      %v294 = vld [vmem:[%s2] sm:$0xff]
      %296 = vset.pattern.permute.xlu0 0
      %297 = vperm.xlu0 %296, %v294
      %v298 = vpop.permute.xlu0 %297
      %vm300 = vcmask 392192
      %v302 = vsel %vm300, %v293, 0
      %304 = vmatprep.subr.mxu0 0.0
      %305 = vmatpush1.msra.mxu0 0.0
      %306 = vmatprep.subr.mxu0 0.0
      %307 = vmatpush1.msra.mxu0 0.0
      %308 = vmatprep.subr.mxu0 0.0
      %309 = vmatpush1.msra.mxu0 0.0
      %310 = vmatprep.subr.mxu0 0.0
      %311 = vmatpush1.msra.mxu0 0.0
      %312 = vmatprep.subr.mxu0 0.0
      %313 = vmatpush1.msra.mxu0 0.0
      %314 = vmatprep.subr.mxu0 0.0
      %315 = vmatpush1.msra.mxu0 0.0
      %316 = vmatprep.subr.mxu0 0.0
      %317 = vmatpush1.msra.mxu0 0.0
      %318 = vmatprep.subr.mxu0 0.0
      %319 = vmatpush1.msra.mxu0 0.0
      %320 = vmatprep.subr.mxu0 0.0
      %321 = vmatpush1.msra.mxu0 0.0
      %322 = vmatprep.subr.mxu0 0.0
      %323 = vmatpush1.msra.mxu0 0.0
      %324 = vmatprep.subr.mxu0 %v279
      %325 = vmatpush1.msra.mxu0 %v278
      %326 = vmatprep.subr.mxu0 %v291
      %327 = vmatpush1.msra.mxu0 %v290
      %328 = vmatprep.subr.mxu0 %v247
      %329 = vmatpush1.msra.mxu0 %v246
      %330 = vmatprep.subr.mxu0 %v221
      %331 = vmatpush1.msra.mxu0 %v220
      %332 = vmatprep.subr.mxu0 %v288
      %333 = vmatpush1.msra.mxu0 %v287
      %334 = vmatprep.subr.mxu0 %v172
      %335 = vmatpush1.msra.mxu0 %v171
      %336 = vmatprep.subr.mxu0 0.0
      %337 = vmatpush2.msra.mxu0 0.0
      %338 = vmatprep.subr.mxu0 0.0
      %339 = vmatpush2.msra.mxu0 0.0
      %340 = vmatprep.subr.mxu0 0.0
      %341 = vmatpush2.msra.mxu0 0.0
      %342 = vmatprep.subr.mxu0 0.0
      %343 = vmatpush2.msra.mxu0 0.0
      %344 = vmatprep.subr.mxu0 0.0
      %345 = vmatpush2.msra.mxu0 0.0
      %346 = vmatprep.subr.mxu0 0.0
      %347 = vmatpush2.msra.mxu0 0.0
      %348 = vmatprep.subr.mxu0 0.0
      %349 = vmatpush2.msra.mxu0 0.0
      %350 = vmatprep.subr.mxu0 0.0
      %351 = vmatpush2.msra.mxu0 0.0
      %352 = vmatprep.subr.mxu0 0.0
      %353 = vmatpush2.msra.mxu0 0.0
      %354 = vmatprep.subr.mxu0 0.0
      %355 = vmatpush2.msra.mxu0 0.0
      %356 = vmatprep.subr.mxu0 0.0
      %357 = vmatpush2.msra.mxu0 0.0
      %358 = vmatprep.subr.mxu0 0.0
      %359 = vmatpush2.msra.mxu0 0.0
      %360 = vmatprep.subr.mxu0 0.0
      %361 = vmatpush2.msra.mxu0 0.0
      %362 = vmatprep.subr.mxu0 0.0
      %363 = vmatpush2.msra.mxu0 0.0
      %364 = vmatprep.subr.mxu0 0.0
      %365 = vmatpush2.msra.mxu0 0.0
      %366 = vmatprep.subr.mxu0 0.0
      %367 = vmatpush2.msra.mxu0 0.0
      %368 = vmatprep.mubr.f32.mxu0 0.0
      %369 = vmatmul.mubr.f32.gmra.mxu0 %v302
      %v370 = vpop.f32.mrf.mxu0
      %v371 = vadd.f32 %v298, %v370
      %v372 = vpop.f32.mrf.mxu0
      %v373 = vadd.f32 %v298, %v372
      %374 = vdwg.mxu0
      %375 = vmatprep.subr.mxu0 0.0
      %376 = vmatpush1.msra.mxu0 0.0
      %377 = vmatprep.subr.mxu0 0.0
      %378 = vmatpush1.msra.mxu0 0.0
      %379 = vmatprep.subr.mxu0 0.0
      %380 = vmatpush1.msra.mxu0 0.0
      %381 = vmatprep.subr.mxu0 0.0
      %382 = vmatpush1.msra.mxu0 0.0
      %383 = vmatprep.subr.mxu0 0.0
      %384 = vmatpush1.msra.mxu0 0.0
      %385 = vmatprep.subr.mxu0 0.0
      %386 = vmatpush1.msra.mxu0 0.0
      %387 = vmatprep.subr.mxu0 0.0
      %388 = vmatpush1.msra.mxu0 0.0
      %389 = vmatprep.subr.mxu0 0.0
      %390 = vmatpush1.msra.mxu0 0.0
      %391 = vmatprep.subr.mxu0 0.0
      %392 = vmatpush1.msra.mxu0 0.0
      %393 = vmatprep.subr.mxu0 0.0
      %394 = vmatpush1.msra.mxu0 0.0
      %395 = vmatprep.subr.mxu0 0.0
      %396 = vmatpush1.msra.mxu0 %v280
      %397 = vmatprep.subr.mxu0 0.0
      %398 = vmatpush1.msra.mxu0 %v292
      %399 = vmatprep.subr.mxu0 0.0
      %400 = vmatpush1.msra.mxu0 %v248
      %401 = vmatprep.subr.mxu0 0.0
      %402 = vmatpush1.msra.mxu0 %v222
      %403 = vmatprep.subr.mxu0 0.0
      %404 = vmatpush1.msra.mxu0 %v289
      %405 = vmatprep.subr.mxu0 0.0
      %406 = vmatpush1.msra.mxu0 %v173
      %407 = vmatprep.subr.mxu0 0.0
      %408 = vmatpush2.msra.mxu0 0.0
      %409 = vmatprep.subr.mxu0 0.0
      %410 = vmatpush2.msra.mxu0 0.0
      %411 = vmatprep.subr.mxu0 0.0
      %412 = vmatpush2.msra.mxu0 0.0
      %413 = vmatprep.subr.mxu0 0.0
      %414 = vmatpush2.msra.mxu0 0.0
      %415 = vmatprep.subr.mxu0 0.0
      %416 = vmatpush2.msra.mxu0 0.0
      %417 = vmatprep.subr.mxu0 0.0
      %418 = vmatpush2.msra.mxu0 0.0
      %419 = vmatprep.subr.mxu0 0.0
      %420 = vmatpush2.msra.mxu0 0.0
      %421 = vmatprep.subr.mxu0 0.0
      %422 = vmatpush2.msra.mxu0 0.0
      %423 = vmatprep.subr.mxu0 0.0
      %424 = vmatpush2.msra.mxu0 0.0
      %425 = vmatprep.subr.mxu0 0.0
      %426 = vmatpush2.msra.mxu0 0.0
      %427 = vmatprep.subr.mxu0 0.0
      %428 = vmatpush2.msra.mxu0 0.0
      %429 = vmatprep.subr.mxu0 0.0
      %430 = vmatpush2.msra.mxu0 0.0
      %431 = vmatprep.subr.mxu0 0.0
      %432 = vmatpush2.msra.mxu0 0.0
      %433 = vmatprep.subr.mxu0 0.0
      %434 = vmatpush2.msra.mxu0 0.0
      %435 = vmatprep.subr.mxu0 0.0
      %436 = vmatpush2.msra.mxu0 0.0
      %437 = vmatprep.subr.mxu0 0.0
      %438 = vmatpush2.msra.mxu0 0.0
      %439 = vmatprep.mubr.f32.mxu0 0.0
      %440 = vmatmul.mubr.f32.gmra.mxu0 %v302
      %v441 = vpop.f32.mrf.mxu0
      %v442 = vadd.f32 %v298, %v441
      %v443 = vpop.f32.mrf.mxu0
      %444 = vdwg.mxu0
      %vm445 = vcmp.gt.f32.partialorder %v371, 0.0
      %vm446 = vcmp.gt.f32.partialorder %v373, 0.0
      %vm447 = vcmp.gt.f32.partialorder %v442, 0.0
      %v448 = vmul.f32 %v371, 0.2
      %v449 = vmul.f32 %v373, 0.2
      %v450 = vmul.f32 %v442, 0.2
      %v451 = vsel %vm445, %v371, %v448
      %v452 = vsel %vm446, %v373, %v449
      %v453 = vsel %vm447, %v442, %v450
      %454 = vst [vmem:[%s170] sm:$0xff] %v451
      %455 = vst [vmem:[%s170 + $0x8] sm:$0xff] %v452
      %456 = vst [vmem:[%s170 + $0x10] sm:$0xff] %v453
      %p457 = scmp.lt.s32.totalorder %s14, 1
      %s458 = scalar_select %p457, %s14, 1
      %s459 = smul.addr %s458, 3
      %s460 = smul.addr %s459, 8
      %s461 = scalar_lea.vmem %s3, %s460
      // Predicated region
      $region33: #{nlayer_discriminator_forward.5} parent=31 // pred_check
        %p462 = pneg %p100
      $region34: #{nlayer_discriminator_forward.5} parent=31 // pred_check_branch
        %464 = sbr.rel (%p462) target = $region36
      $region35: #{nlayer_discriminator_forward.5} parent=31 // pred_region
        _
      $region36: #{nlayer_discriminator_forward.5} parent=31 // pred_fallthru
        _
    $region32: #{nlayer_discriminator_forward.5} parent=5 // pred_fallthru
      _
    %p465 = scmp.le.s32.totalorder 2, %s9
    // Predicated region
    $region37: #{nlayer_discriminator_forward.5} parent=5 // pred_check
      %p466 = pneg %p465
    $region38: #{nlayer_discriminator_forward.5} parent=5 // pred_check_branch
      %468 = sbr.rel (%p466) target = $region40
    $region39: #{nlayer_discriminator_forward.5} parent=5 // pred_region
      %s469 = ssub.s32 %s9, 2
      // Predicated region
      $region41: #{nlayer_discriminator_forward.5} parent=39 // pred_check
        %p470 = pneg %p106
      $region42: #{nlayer_discriminator_forward.5} parent=39 // pred_check_branch
        %472 = sbr.rel (%p470) target = $region44
      $region43: #{nlayer_discriminator_forward.5} parent=39 // pred_region
        %p473 = scmp.lt.s32.totalorder %s15, 1
        %s474 = scalar_select %p473, %s15, 1
        %s475 = smul.addr %s474, 3
        %s476 = smul.addr %s475, 8
        %s477 = scalar_lea.vmem %s3, %s476
      $region44: #{nlayer_discriminator_forward.5} parent=39 // pred_fallthru
        _
    $region40: #{nlayer_discriminator_forward.5} parent=5 // pred_fallthru
      _
  $region6: #{nlayer_discriminator_forward.5} parent=0 // loop_footer
    %s13 = sadd.s32 1, %s9
  $region7: #{nlayer_discriminator_forward.5} parent=0 // loop_footer_branch
    %8 = sbr.rel target = $region3
  $region8: #{nlayer_discriminator_forward.5} parent=0 // loop_exit
    _

// kernel: nlayer_discriminator_forward.6
$region0: #{nlayer_discriminator_forward.6}
  #allocation0 [shape = 'u32[]', space=smem, size = 0x4, offset = 0x4, fixed_abs, tag = 'smem constant byte address 0x4 - core index']
  #allocation1 [shape = 'u32[144,128]{1,0:T(1,128)}', space=vmem, size = 0x12000, scoped, tag = 'internal scratch']
  %s0 = inlined_call_operand.vmem [shape: f32[2,32,256], index: 0, kind: input, shape index: {}]
  %s1 = inlined_call_operand.vmem [shape: f32[16,128], index: 1, kind: input, shape index: {}]
  %s2 = inlined_call_operand.vmem [shape: f32[16,1], index: 2, kind: input, shape index: {}]
  %s3 = inlined_call_operand.vmem [shape: f32[2,16,128], index: 3, kind: output, shape index: {}]
  %s4 = sld [smem:[#allocation0]]
  $region45: #{nlayer_discriminator_forward.6} parent=0
    _
  %s6 = ssub.s32 1, %s4
  %s7 = scalar_select 0, %s6, %s4
  loop: start=0, step=1, limit=4
  $region2: #{nlayer_discriminator_forward.6} parent=0 // loop_pre_header
    _
  $region3: #{nlayer_discriminator_forward.6} parent=0 // loop_header
    %s9 = sphi 0, %s13
    %p10 = scmp.ge.s32.totalorder %s9, 4
    %s19 = sphi 0, %s21
    %s22 = sphi 0, %s19
    %s23 = sphi 0, %s22
    %s39 = sphi 0, %s23
    %s43 = sphi 0, %s43
    %s45 = sphi 0, %s43
    %s46 = sphi 0, %s45
    %s60 = sphi 0, %s46
    %s64 = sphi 0, %s64
    %s66 = sphi 0, %s64
    %s67 = sphi 0, %s66
    %s81 = sphi 0, %s67
    %s87 = sphi 0, %s89
    %s90 = sphi 0, %s87
    %s91 = sphi 0, %s90
    %s107 = sphi 0, %s91
  $region4: #{nlayer_discriminator_forward.6} parent=0 // loop_header_branch
    %12 = sbr.rel (%p10) target = $region8
  $region5: #{nlayer_discriminator_forward.6} parent=0 // loop_body
    %s14 = ssub.s32 %s9, 1
    %s15 = ssub.s32 %s9, 2
    %s16 = sadd.s32 %s9, 1
    %s17 = ssub.s32 %s9, %s16
    %p18 = scmp.eq.s32.totalorder %s17, 0
    %s20 = sadd.s32 %s19, 1
    %s21 = scalar_select %p18, %s19, %s20
    %p24 = pneg %p18
    %p25 = scmp.eq.s32.totalorder %s9, 1
    %p26 = por %p24, %p25
    %p27 = scmp.ne.s32.totalorder %s19, %s22
    %p28 = scmp.eq.s32.totalorder %s9, 0
    %p29 = por %p27, %p28
    %p30 = scmp.ne.s32.totalorder %s19, %s22
    %p31 = scmp.eq.s32.totalorder %s14, 1
    %p32 = por %p30, %p31
    %p33 = scmp.ne.s32.totalorder %s22, %s23
    %p34 = scmp.eq.s32.totalorder %s14, 0
    %p35 = por %p33, %p34
    %p36 = scmp.ne.s32.totalorder %s22, %s23
    %p37 = scmp.eq.s32.totalorder %s15, 1
    %p38 = por %p36, %p37
    %p40 = scmp.ne.s32.totalorder %s23, %s39
    %p41 = scmp.eq.s32.totalorder %s15, 0
    %p42 = por %p40, %p41
    %s44 = sadd.s32 %s43, 1
    %p47 = scmp.eq.s32.totalorder %s9, 1
    %p48 = scmp.ne.s32.totalorder %s43, %s45
    %p49 = scmp.eq.s32.totalorder %s9, 0
    %p50 = por %p48, %p49
    %p51 = scmp.ne.s32.totalorder %s43, %s45
    %p52 = scmp.eq.s32.totalorder %s14, 1
    %p53 = por %p51, %p52
    %p54 = scmp.ne.s32.totalorder %s45, %s46
    %p55 = scmp.eq.s32.totalorder %s14, 0
    %p56 = por %p54, %p55
    %p57 = scmp.ne.s32.totalorder %s45, %s46
    %p58 = scmp.eq.s32.totalorder %s15, 1
    %p59 = por %p57, %p58
    %p61 = scmp.ne.s32.totalorder %s46, %s60
    %p62 = scmp.eq.s32.totalorder %s15, 0
    %p63 = por %p61, %p62
    %s65 = sadd.s32 %s64, 1
    %p68 = scmp.eq.s32.totalorder %s9, 1
    %p69 = scmp.ne.s32.totalorder %s64, %s66
    %p70 = scmp.eq.s32.totalorder %s9, 0
    %p71 = por %p69, %p70
    %p72 = scmp.ne.s32.totalorder %s64, %s66
    %p73 = scmp.eq.s32.totalorder %s14, 1
    %p74 = por %p72, %p73
    %p75 = scmp.ne.s32.totalorder %s66, %s67
    %p76 = scmp.eq.s32.totalorder %s14, 0
    %p77 = por %p75, %p76
    %p78 = scmp.ne.s32.totalorder %s66, %s67
    %p79 = scmp.eq.s32.totalorder %s15, 1
    %p80 = por %p78, %p79
    %p82 = scmp.ne.s32.totalorder %s67, %s81
    %p83 = scmp.eq.s32.totalorder %s15, 0
    %p84 = por %p82, %p83
    %s85 = ssub.s32 %s9, %s16
    %p86 = scmp.eq.s32.totalorder %s85, 0
    %s88 = sadd.s32 %s87, 1
    %s89 = scalar_select %p86, %s87, %s88
    %p92 = pneg %p86
    %p93 = scmp.eq.s32.totalorder %s9, 1
    %p94 = por %p92, %p93
    %p95 = scmp.ne.s32.totalorder %s87, %s90
    %p96 = scmp.eq.s32.totalorder %s9, 0
    %p97 = por %p95, %p96
    %p98 = scmp.ne.s32.totalorder %s87, %s90
    %p99 = scmp.eq.s32.totalorder %s14, 1
    %p100 = por %p98, %p99
    %p101 = scmp.ne.s32.totalorder %s90, %s91
    %p102 = scmp.eq.s32.totalorder %s14, 0
    %p103 = por %p101, %p102
    %p104 = scmp.ne.s32.totalorder %s90, %s91
    %p105 = scmp.eq.s32.totalorder %s15, 1
    %p106 = por %p104, %p105
    %p108 = scmp.ne.s32.totalorder %s91, %s107
    %p109 = scmp.eq.s32.totalorder %s15, 0
    %p110 = por %p108, %p109
    %p111 = scmp.le.s32.totalorder 1, %s9
    %p112 = scmp.lt.s32.totalorder %s9, 3
    %p113 = pnand %p111, %p112
    %p114 = pneg %p113
    // Predicated region
    $region9: #{nlayer_discriminator_forward.6} parent=5 // pred_check
      _
    $region10: #{nlayer_discriminator_forward.6} parent=5 // pred_check_branch
      %116 = sbr.rel (%p113) target = $region12
    $region11: #{nlayer_discriminator_forward.6} parent=5 // pred_region
      %s117 = ssub.s32 %s9, 1
      // Predicated region
      $region13: #{nlayer_discriminator_forward.6} parent=11 // pred_check
        %p118 = pneg %p56
      $region14: #{nlayer_discriminator_forward.6} parent=11 // pred_check_branch
        %120 = sbr.rel (%p118) target = $region16
      $region15: #{nlayer_discriminator_forward.6} parent=11 // pred_region
        _
      $region16: #{nlayer_discriminator_forward.6} parent=11 // pred_fallthru
        _
      // Predicated region
      $region17: #{nlayer_discriminator_forward.6} parent=11 // pred_check
        %p121 = pneg %p77
      $region18: #{nlayer_discriminator_forward.6} parent=11 // pred_check_branch
        %123 = sbr.rel (%p121) target = $region20
      $region19: #{nlayer_discriminator_forward.6} parent=11 // pred_region
        _
      $region20: #{nlayer_discriminator_forward.6} parent=11 // pred_fallthru
        _
    $region12: #{nlayer_discriminator_forward.6} parent=5 // pred_fallthru
      _
    %p124 = scmp.lt.s32.totalorder %s9, 2
    // Predicated region
    $region21: #{nlayer_discriminator_forward.6} parent=5 // pred_check
      %p125 = pneg %p124
    $region22: #{nlayer_discriminator_forward.6} parent=5 // pred_check_branch
      %127 = sbr.rel (%p125) target = $region24
    $region23: #{nlayer_discriminator_forward.6} parent=5 // pred_region
      // Predicated region
      $region25: #{nlayer_discriminator_forward.6} parent=23 // pred_check
        %p128 = pneg %p29
      $region26: #{nlayer_discriminator_forward.6} parent=23 // pred_check_branch
        %130 = sbr.rel (%p128) target = $region28
      $region27: #{nlayer_discriminator_forward.6} parent=23 // pred_region
        %p131 = scmp.lt.s32.totalorder %s9, 1
        %s132 = scalar_select %p131, %s9, 1
        %s133 = smul.addr %s132, 8
        %s134 = smul.addr %s133, 8
        %s135 = scalar_lea.vmem %s0, %s134
      $region28: #{nlayer_discriminator_forward.6} parent=23 // pred_fallthru
        _
    $region24: #{nlayer_discriminator_forward.6} parent=5 // pred_fallthru
      _
    %p136 = scmp.le.s32.totalorder 1, %s9
    %p137 = scmp.lt.s32.totalorder %s9, 3
    %p138 = pnand %p136, %p137
    %p139 = pneg %p138
    // Predicated region
    $region29: #{nlayer_discriminator_forward.6} parent=5 // pred_check
      _
    $region30: #{nlayer_discriminator_forward.6} parent=5 // pred_check_branch
      %141 = sbr.rel (%p138) target = $region32
    $region31: #{nlayer_discriminator_forward.6} parent=5 // pred_region
      %s142 = ssub.s32 %s9, 1
      %p143 = scmp.lt.s32.totalorder %s14, 1
      %s144 = scalar_select %p143, %s14, 1
      %s145 = smul.addr %s144, 8
      %s146 = smul.addr %s145, 8
      %s147 = scalar_lea.vmem %s0, %s146
      %p148 = pneg %p35
      %p149 = pneg %p32
      %p150 = pneg %p56
      %p151 = pneg %p53
      %p152 = pneg %p77
      %p153 = pneg %p74
      %p154 = pneg %p103
      %p155 = pneg %p100
      %p156 = scmp.lt.s32.totalorder %s14, 1
      %s157 = scalar_select %p156, %s14, 1
      %s158 = smul.addr %s157, 2
      %s159 = smul.addr %s158, 8
      %s160 = scalar_lea.vmem %s3, %s159
      %p161 = scmp.lt.s32.totalorder %s14, 1
      %s162 = scalar_select %p161, %s14, 1
      %s163 = smul.addr %s162, 8
      %s164 = smul.addr %s163, 8
      %s165 = scalar_lea.vmem %s0, %s164
      %p166 = scmp.lt.s32.totalorder %s14, 1
      %s167 = scalar_select %p166, %s14, 1
      %s168 = smul.addr %s167, 2
      %s169 = smul.addr %s168, 8
      %s170 = scalar_lea.vmem %s3, %s169
      %v171 = vld [vmem:[%s165] sm:$0xff]
      %v172 = vld [vmem:[%s165 + $0x10] sm:$0xff]
      %v173 = vld [vmem:[%s165 + $0x20] sm:$0xff]
      %v174 = vld [vmem:[%s165 + $0x30] sm:$0xff]
      %v175 = vld [vmem:[%s165] sm:$0xff]
      %v176 = vld [vmem:[%s165 + $0x8] sm:$0xff]
      %v177 = vld [vmem:[%s165 + $0x10] sm:$0xff]
      %v178 = vld [vmem:[%s165 + $0x18] sm:$0xff]
      %v179 = vld [vmem:[%s165 + $0x20] sm:$0xff]
      %v180 = vld [vmem:[%s165 + $0x28] sm:$0xff]
      %v181 = vld [vmem:[%s165 + $0x30] sm:$0xff]
      %v182 = vld [vmem:[%s165 + $0x38] sm:$0xff]
      %191 = vrot.lane.b32.xlu0 %v175, 127
      %v192 = vpop.permute.xlu0 %191
      %193 = vrot.lane.b32.xlu0 %v176, 127
      %v194 = vpop.permute.xlu0 %193
      %195 = vrot.lane.b32.xlu0 %v177, 127
      %v196 = vpop.permute.xlu0 %195
      %197 = vrot.lane.b32.xlu0 %v178, 127
      %v198 = vpop.permute.xlu0 %197
      %199 = vrot.lane.b32.xlu0 %v179, 127
      %v200 = vpop.permute.xlu0 %199
      %201 = vrot.lane.b32.xlu0 %v180, 127
      %v202 = vpop.permute.xlu0 %201
      %203 = vrot.lane.b32.xlu0 %v181, 127
      %v204 = vpop.permute.xlu0 %203
      %205 = vrot.lane.b32.xlu0 %v182, 127
      %v206 = vpop.permute.xlu0 %205
      %vm207 = vcmask 1039360
      %v208 = vsel %vm207, %v192, %v194
      %v209 = vsel %vm207, %v196, %v198
      %v210 = vsel %vm207, %v200, %v202
      %v211 = vsel %vm207, %v204, %v206
      %216 = vrot.lane.b32.xlu0 %v175, 119
      %v217 = vpop.permute.xlu0 %216
      %218 = vrot.lane.b32.xlu0 %v176, 119
      %v219 = vpop.permute.xlu0 %218
      %220 = vrot.lane.b32.xlu0 %v177, 119
      %v221 = vpop.permute.xlu0 %220
      %222 = vrot.lane.b32.xlu0 %v178, 119
      %v223 = vpop.permute.xlu0 %222
      %224 = vrot.lane.b32.xlu0 %v179, 119
      %v225 = vpop.permute.xlu0 %224
      %226 = vrot.lane.b32.xlu0 %v180, 119
      %v227 = vpop.permute.xlu0 %226
      %228 = vrot.lane.b32.xlu0 %v181, 119
      %v229 = vpop.permute.xlu0 %228
      %230 = vrot.lane.b32.xlu0 %v182, 119
      %v231 = vpop.permute.xlu0 %230
      %vm232 = vcmask 973824
      %v233 = vsel %vm232, %v217, %v219
      %v234 = vsel %vm232, %v221, %v223
      %v235 = vsel %vm232, %v225, %v227
      %v236 = vsel %vm232, %v229, %v231
      %241 = vrot.lane.b32.xlu0 %v175, 118
      %v242 = vpop.permute.xlu0 %241
      %243 = vrot.lane.b32.xlu0 %v176, 118
      %v244 = vpop.permute.xlu0 %243
      %245 = vrot.lane.b32.xlu0 %v177, 118
      %v246 = vpop.permute.xlu0 %245
      %247 = vrot.lane.b32.xlu0 %v178, 118
      %v248 = vpop.permute.xlu0 %247
      %249 = vrot.lane.b32.xlu0 %v179, 118
      %v250 = vpop.permute.xlu0 %249
      %251 = vrot.lane.b32.xlu0 %v180, 118
      %v252 = vpop.permute.xlu0 %251
      %253 = vrot.lane.b32.xlu0 %v181, 118
      %v254 = vpop.permute.xlu0 %253
      %255 = vrot.lane.b32.xlu0 %v182, 118
      %v256 = vpop.permute.xlu0 %255
      %vm257 = vcmask 965632
      %v258 = vsel %vm257, %v242, %v244
      %v259 = vsel %vm257, %v246, %v248
      %v260 = vsel %vm257, %v250, %v252
      %v261 = vsel %vm257, %v254, %v256
      %v266 = vld [vmem:[%s1] sm:$0xff]
      %v267 = vld [vmem:[%s1 + $0x8] sm:$0xff]
      %v268 = vld [vmem:[%s2] sm:$0xff]
      %v269 = vld [vmem:[%s2 + $0x8] sm:$0xff]
      %271 = vset.pattern.permute.xlu0 0
      %272 = vperm.xlu0 %271, %v268
      %v273 = vpop.permute.xlu0 %272
      %276 = vset.pattern.permute.xlu0 0
      %277 = vperm.xlu0 %276, %v269
      %v278 = vpop.permute.xlu0 %277
      %280 = vmatprep.subr.mxu0 0.0
      %281 = vmatpush1.msra.mxu0 %v261
      %282 = vmatprep.subr.mxu0 0.0
      %283 = vmatpush1.msra.mxu0 %v260
      %284 = vmatprep.subr.mxu0 0.0
      %285 = vmatpush1.msra.mxu0 %v259
      %286 = vmatprep.subr.mxu0 0.0
      %287 = vmatpush1.msra.mxu0 %v258
      %288 = vmatprep.subr.mxu0 0.0
      %289 = vmatpush1.msra.mxu0 %v236
      %290 = vmatprep.subr.mxu0 0.0
      %291 = vmatpush1.msra.mxu0 %v235
      %292 = vmatprep.subr.mxu0 0.0
      %293 = vmatpush1.msra.mxu0 %v234
      %294 = vmatprep.subr.mxu0 0.0
      %295 = vmatpush1.msra.mxu0 %v233
      %296 = vmatprep.subr.mxu0 0.0
      %297 = vmatpush1.msra.mxu0 %v211
      %298 = vmatprep.subr.mxu0 0.0
      %299 = vmatpush1.msra.mxu0 %v210
      %300 = vmatprep.subr.mxu0 0.0
      %301 = vmatpush1.msra.mxu0 %v209
      %302 = vmatprep.subr.mxu0 0.0
      %303 = vmatpush1.msra.mxu0 %v208
      %304 = vmatprep.subr.mxu0 0.0
      %305 = vmatpush1.msra.mxu0 %v174
      %306 = vmatprep.subr.mxu0 0.0
      %307 = vmatpush1.msra.mxu0 %v173
      %308 = vmatprep.subr.mxu0 0.0
      %309 = vmatpush1.msra.mxu0 %v172
      %310 = vmatprep.subr.mxu0 0.0
      %311 = vmatpush1.msra.mxu0 %v171
      %312 = vmatprep.subr.mxu0 0.0
      %313 = vmatpush2.msra.mxu0 0.0
      %314 = vmatprep.subr.mxu0 0.0
      %315 = vmatpush2.msra.mxu0 0.0
      %316 = vmatprep.subr.mxu0 0.0
      %317 = vmatpush2.msra.mxu0 0.0
      %318 = vmatprep.subr.mxu0 0.0
      %319 = vmatpush2.msra.mxu0 0.0
      %320 = vmatprep.subr.mxu0 0.0
      %321 = vmatpush2.msra.mxu0 0.0
      %322 = vmatprep.subr.mxu0 0.0
      %323 = vmatpush2.msra.mxu0 0.0
      %324 = vmatprep.subr.mxu0 0.0
      %325 = vmatpush2.msra.mxu0 0.0
      %326 = vmatprep.subr.mxu0 0.0
      %327 = vmatpush2.msra.mxu0 0.0
      %328 = vmatprep.subr.mxu0 0.0
      %329 = vmatpush2.msra.mxu0 0.0
      %330 = vmatprep.subr.mxu0 0.0
      %331 = vmatpush2.msra.mxu0 0.0
      %332 = vmatprep.subr.mxu0 0.0
      %333 = vmatpush2.msra.mxu0 0.0
      %334 = vmatprep.subr.mxu0 0.0
      %335 = vmatpush2.msra.mxu0 0.0
      %336 = vmatprep.subr.mxu0 0.0
      %337 = vmatpush2.msra.mxu0 0.0
      %338 = vmatprep.subr.mxu0 0.0
      %339 = vmatpush2.msra.mxu0 0.0
      %340 = vmatprep.subr.mxu0 0.0
      %341 = vmatpush2.msra.mxu0 0.0
      %342 = vmatprep.subr.mxu0 0.0
      %343 = vmatpush2.msra.mxu0 0.0
      %344 = vmatprep.mubr.f32.mxu0 0.0
      %345 = vmatmul.mubr.f32.gmra.mxu0 %v266
      %v346 = vpop.f32.mrf.mxu0
      %v347 = vadd.f32 %v273, %v346
      %v348 = vpop.f32.mrf.mxu0
      %349 = vmatprep.mubr.f32.mxu0 0.0
      %350 = vmatmul.mubr.f32.gmra.mxu0 %v267
      %v351 = vpop.f32.mrf.mxu0
      %v352 = vadd.f32 %v278, %v351
      %v353 = vpop.f32.mrf.mxu0
      %354 = vdwg.mxu0
      %v355 = vlaneseq
      %v356 = vand.u32 %v355, 127
      %v357 = vcvt.s32.f32 %v356
      %v358 = vadd.f32 %v357, 0.5
      %v359 = vmul.f32 %v358, 0.11111111
      %v360 = vfloor.f32 %v359
      %v361 = vmul.f32 %v360, 9.0
      %v362 = vsub.f32 %v357, %v361
      %vm363 = vcmp.lt.f32.partialorder %v362, 8.0
      %vm364 = vcmp.lt.f32.partialorder %v360, 8.0
      %vm365 = vmand %vm363, %vm364
      %v366 = vsel %vm365, 1, 0
      %v367 = vcvt.s32.f32 %v366
      %v368 = vmul.f32 %v347, %v367
      %v369 = vmul.f32 %v352, %v367
      %370 = vadd.xlane.f32.xlu0 %v368
      %v371 = vpop.xlane.xlu0 %370
      %372 = vadd.xlane.f32.xlu0 %v369
      %v373 = vpop.xlane.xlu0 %372
      %v374 = vmul.f32 %v371, 0.015625
      %v375 = vmul.f32 %v373, 0.015625
      %v376 = vmul.f32 %v368, %v347
      %v377 = vmul.f32 %v369, %v352
      %378 = vadd.xlane.f32.xlu0 %v376
      %v379 = vpop.xlane.xlu0 %378
      %380 = vadd.xlane.f32.xlu0 %v377
      %v381 = vpop.xlane.xlu0 %380
      %v382 = vmul.f32 %v379, 0.015625
      %v383 = vmul.f32 %v381, 0.015625
      %v384 = vmul.f32 %v374, %v374
      %v385 = vmul.f32 %v375, %v375
      %v386 = vsub.f32 %v382, %v384
      %v387 = vsub.f32 %v383, %v385
      %v388 = vmax.f32 %v386, 0.0
      %v389 = vmax.f32 %v387, 0.0
      %v390 = vsub.f32 %v347, %v374
      %v391 = vsub.f32 %v352, %v375
      %v392 = vadd.f32 %v388, 1e-05
      %v393 = vadd.f32 %v389, 1e-05
      %v394 = vrsqrt.pop %v392
      %v395 = vrsqrt.pop %v393
      %v396 = vmul.f32 %v390, %v394
      %v397 = vmul.f32 %v391, %v395
      %vm398 = vcmp.gt.f32.partialorder %v396, 0.0
      %vm399 = vcmp.gt.f32.partialorder %v397, 0.0
      %v400 = vmul.f32 %v396, 0.2
      %v401 = vmul.f32 %v397, 0.2
      %v402 = vsel %vm398, %v396, %v400
      %v403 = vsel %vm399, %v397, %v401
      %404 = vst [vmem:[%s170] sm:$0xff] %v402
      %405 = vst [vmem:[%s170 + $0x8] sm:$0xff] %v403
      %p406 = scmp.lt.s32.totalorder %s14, 1
      %s407 = scalar_select %p406, %s14, 1
      %s408 = smul.addr %s407, 2
      %s409 = smul.addr %s408, 8
      %s410 = scalar_lea.vmem %s3, %s409
      // Predicated region
      $region33: #{nlayer_discriminator_forward.6} parent=31 // pred_check
        %p411 = pneg %p100
      $region34: #{nlayer_discriminator_forward.6} parent=31 // pred_check_branch
        %413 = sbr.rel (%p411) target = $region36
      $region35: #{nlayer_discriminator_forward.6} parent=31 // pred_region
        _
      $region36: #{nlayer_discriminator_forward.6} parent=31 // pred_fallthru
        _
    $region32: #{nlayer_discriminator_forward.6} parent=5 // pred_fallthru
      _
    %p414 = scmp.le.s32.totalorder 2, %s9
    // Predicated region
    $region37: #{nlayer_discriminator_forward.6} parent=5 // pred_check
      %p415 = pneg %p414
    $region38: #{nlayer_discriminator_forward.6} parent=5 // pred_check_branch
      %417 = sbr.rel (%p415) target = $region40
    $region39: #{nlayer_discriminator_forward.6} parent=5 // pred_region
      %s418 = ssub.s32 %s9, 2
      // Predicated region
      $region41: #{nlayer_discriminator_forward.6} parent=39 // pred_check
        %p419 = pneg %p106
      $region42: #{nlayer_discriminator_forward.6} parent=39 // pred_check_branch
        %421 = sbr.rel (%p419) target = $region44
      $region43: #{nlayer_discriminator_forward.6} parent=39 // pred_region
        %p422 = scmp.lt.s32.totalorder %s15, 1
        %s423 = scalar_select %p422, %s15, 1
        %s424 = smul.addr %s423, 2
        %s425 = smul.addr %s424, 8
        %s426 = scalar_lea.vmem %s3, %s425
      $region44: #{nlayer_discriminator_forward.6} parent=39 // pred_fallthru
        _
    $region40: #{nlayer_discriminator_forward.6} parent=5 // pred_fallthru
      _
  $region6: #{nlayer_discriminator_forward.6} parent=0 // loop_footer
    %s13 = sadd.s32 1, %s9
  $region7: #{nlayer_discriminator_forward.6} parent=0 // loop_footer_branch
    %8 = sbr.rel target = $region3
  $region8: #{nlayer_discriminator_forward.6} parent=0 // loop_exit
    _

// kernel: nlayer_discriminator_forward.7
$region0: #{nlayer_discriminator_forward.7}
  #allocation0 [shape = 'u32[]', space=smem, size = 0x4, offset = 0x4, fixed_abs, tag = 'smem constant byte address 0x4 - core index']
  #allocation1 [shape = 'u32[144,128]{1,0:T(1,128)}', space=vmem, size = 0x12000, scoped, tag = 'internal scratch']
  %s0 = inlined_call_operand.vmem [shape: f32[2,64,256], index: 0, kind: input, shape index: {}]
  %s1 = inlined_call_operand.vmem [shape: f32[32,256], index: 1, kind: input, shape index: {}]
  %s2 = inlined_call_operand.vmem [shape: f32[32,1], index: 2, kind: input, shape index: {}]
  %s3 = inlined_call_operand.vmem [shape: f32[2,32,128], index: 3, kind: output, shape index: {}]
  %s4 = sld [smem:[#allocation0]]
  $region45: #{nlayer_discriminator_forward.7} parent=0
    _
  %s6 = ssub.s32 1, %s4
  %s7 = scalar_select 0, %s6, %s4
  loop: start=0, step=1, limit=4
  $region2: #{nlayer_discriminator_forward.7} parent=0 // loop_pre_header
    _
  $region3: #{nlayer_discriminator_forward.7} parent=0 // loop_header
    %s9 = sphi 0, %s13
    %p10 = scmp.ge.s32.totalorder %s9, 4
    %s19 = sphi 0, %s21
    %s22 = sphi 0, %s19
    %s23 = sphi 0, %s22
    %s39 = sphi 0, %s23
    %s43 = sphi 0, %s43
    %s45 = sphi 0, %s43
    %s46 = sphi 0, %s45
    %s60 = sphi 0, %s46
    %s64 = sphi 0, %s64
    %s66 = sphi 0, %s64
    %s67 = sphi 0, %s66
    %s81 = sphi 0, %s67
    %s87 = sphi 0, %s89
    %s90 = sphi 0, %s87
    %s91 = sphi 0, %s90
    %s107 = sphi 0, %s91
  $region4: #{nlayer_discriminator_forward.7} parent=0 // loop_header_branch
    %12 = sbr.rel (%p10) target = $region8
  $region5: #{nlayer_discriminator_forward.7} parent=0 // loop_body
    %s14 = ssub.s32 %s9, 1
    %s15 = ssub.s32 %s9, 2
    %s16 = sadd.s32 %s9, 1
    %s17 = ssub.s32 %s9, %s16
    %p18 = scmp.eq.s32.totalorder %s17, 0
    %s20 = sadd.s32 %s19, 1
    %s21 = scalar_select %p18, %s19, %s20
    %p24 = pneg %p18
    %p25 = scmp.eq.s32.totalorder %s9, 1
    %p26 = por %p24, %p25
    %p27 = scmp.ne.s32.totalorder %s19, %s22
    %p28 = scmp.eq.s32.totalorder %s9, 0
    %p29 = por %p27, %p28
    %p30 = scmp.ne.s32.totalorder %s19, %s22
    %p31 = scmp.eq.s32.totalorder %s14, 1
    %p32 = por %p30, %p31
    %p33 = scmp.ne.s32.totalorder %s22, %s23
    %p34 = scmp.eq.s32.totalorder %s14, 0
    %p35 = por %p33, %p34
    %p36 = scmp.ne.s32.totalorder %s22, %s23
    %p37 = scmp.eq.s32.totalorder %s15, 1
    %p38 = por %p36, %p37
    %p40 = scmp.ne.s32.totalorder %s23, %s39
    %p41 = scmp.eq.s32.totalorder %s15, 0
    %p42 = por %p40, %p41
    %s44 = sadd.s32 %s43, 1
    %p47 = scmp.eq.s32.totalorder %s9, 1
    %p48 = scmp.ne.s32.totalorder %s43, %s45
    %p49 = scmp.eq.s32.totalorder %s9, 0
    %p50 = por %p48, %p49
    %p51 = scmp.ne.s32.totalorder %s43, %s45
    %p52 = scmp.eq.s32.totalorder %s14, 1
    %p53 = por %p51, %p52
    %p54 = scmp.ne.s32.totalorder %s45, %s46
    %p55 = scmp.eq.s32.totalorder %s14, 0
    %p56 = por %p54, %p55
    %p57 = scmp.ne.s32.totalorder %s45, %s46
    %p58 = scmp.eq.s32.totalorder %s15, 1
    %p59 = por %p57, %p58
    %p61 = scmp.ne.s32.totalorder %s46, %s60
    %p62 = scmp.eq.s32.totalorder %s15, 0
    %p63 = por %p61, %p62
    %s65 = sadd.s32 %s64, 1
    %p68 = scmp.eq.s32.totalorder %s9, 1
    %p69 = scmp.ne.s32.totalorder %s64, %s66
    %p70 = scmp.eq.s32.totalorder %s9, 0
    %p71 = por %p69, %p70
    %p72 = scmp.ne.s32.totalorder %s64, %s66
    %p73 = scmp.eq.s32.totalorder %s14, 1
    %p74 = por %p72, %p73
    %p75 = scmp.ne.s32.totalorder %s66, %s67
    %p76 = scmp.eq.s32.totalorder %s14, 0
    %p77 = por %p75, %p76
    %p78 = scmp.ne.s32.totalorder %s66, %s67
    %p79 = scmp.eq.s32.totalorder %s15, 1
    %p80 = por %p78, %p79
    %p82 = scmp.ne.s32.totalorder %s67, %s81
    %p83 = scmp.eq.s32.totalorder %s15, 0
    %p84 = por %p82, %p83
    %s85 = ssub.s32 %s9, %s16
    %p86 = scmp.eq.s32.totalorder %s85, 0
    %s88 = sadd.s32 %s87, 1
    %s89 = scalar_select %p86, %s87, %s88
    %p92 = pneg %p86
    %p93 = scmp.eq.s32.totalorder %s9, 1
    %p94 = por %p92, %p93
    %p95 = scmp.ne.s32.totalorder %s87, %s90
    %p96 = scmp.eq.s32.totalorder %s9, 0
    %p97 = por %p95, %p96
    %p98 = scmp.ne.s32.totalorder %s87, %s90
    %p99 = scmp.eq.s32.totalorder %s14, 1
    %p100 = por %p98, %p99
    %p101 = scmp.ne.s32.totalorder %s90, %s91
    %p102 = scmp.eq.s32.totalorder %s14, 0
    %p103 = por %p101, %p102
    %p104 = scmp.ne.s32.totalorder %s90, %s91
    %p105 = scmp.eq.s32.totalorder %s15, 1
    %p106 = por %p104, %p105
    %p108 = scmp.ne.s32.totalorder %s91, %s107
    %p109 = scmp.eq.s32.totalorder %s15, 0
    %p110 = por %p108, %p109
    %p111 = scmp.le.s32.totalorder 1, %s9
    %p112 = scmp.lt.s32.totalorder %s9, 3
    %p113 = pnand %p111, %p112
    %p114 = pneg %p113
    // Predicated region
    $region9: #{nlayer_discriminator_forward.7} parent=5 // pred_check
      _
    $region10: #{nlayer_discriminator_forward.7} parent=5 // pred_check_branch
      %116 = sbr.rel (%p113) target = $region12
    $region11: #{nlayer_discriminator_forward.7} parent=5 // pred_region
      %s117 = ssub.s32 %s9, 1
      // Predicated region
      $region13: #{nlayer_discriminator_forward.7} parent=11 // pred_check
        %p118 = pneg %p56
      $region14: #{nlayer_discriminator_forward.7} parent=11 // pred_check_branch
        %120 = sbr.rel (%p118) target = $region16
      $region15: #{nlayer_discriminator_forward.7} parent=11 // pred_region
        _
      $region16: #{nlayer_discriminator_forward.7} parent=11 // pred_fallthru
        _
      // Predicated region
      $region17: #{nlayer_discriminator_forward.7} parent=11 // pred_check
        %p121 = pneg %p77
      $region18: #{nlayer_discriminator_forward.7} parent=11 // pred_check_branch
        %123 = sbr.rel (%p121) target = $region20
      $region19: #{nlayer_discriminator_forward.7} parent=11 // pred_region
        _
      $region20: #{nlayer_discriminator_forward.7} parent=11 // pred_fallthru
        _
    $region12: #{nlayer_discriminator_forward.7} parent=5 // pred_fallthru
      _
    %p124 = scmp.lt.s32.totalorder %s9, 2
    // Predicated region
    $region21: #{nlayer_discriminator_forward.7} parent=5 // pred_check
      %p125 = pneg %p124
    $region22: #{nlayer_discriminator_forward.7} parent=5 // pred_check_branch
      %127 = sbr.rel (%p125) target = $region24
    $region23: #{nlayer_discriminator_forward.7} parent=5 // pred_region
      // Predicated region
      $region25: #{nlayer_discriminator_forward.7} parent=23 // pred_check
        %p128 = pneg %p29
      $region26: #{nlayer_discriminator_forward.7} parent=23 // pred_check_branch
        %130 = sbr.rel (%p128) target = $region28
      $region27: #{nlayer_discriminator_forward.7} parent=23 // pred_region
        %p131 = scmp.lt.s32.totalorder %s9, 1
        %s132 = scalar_select %p131, %s9, 1
        %s133 = smul.addr %s132, 16
        %s134 = smul.addr %s133, 8
        %s135 = scalar_lea.vmem %s0, %s134
      $region28: #{nlayer_discriminator_forward.7} parent=23 // pred_fallthru
        _
    $region24: #{nlayer_discriminator_forward.7} parent=5 // pred_fallthru
      _
    %p136 = scmp.le.s32.totalorder 1, %s9
    %p137 = scmp.lt.s32.totalorder %s9, 3
    %p138 = pnand %p136, %p137
    %p139 = pneg %p138
    // Predicated region
    $region29: #{nlayer_discriminator_forward.7} parent=5 // pred_check
      _
    $region30: #{nlayer_discriminator_forward.7} parent=5 // pred_check_branch
      %141 = sbr.rel (%p138) target = $region32
    $region31: #{nlayer_discriminator_forward.7} parent=5 // pred_region
      %s142 = ssub.s32 %s9, 1
      %p143 = scmp.lt.s32.totalorder %s14, 1
      %s144 = scalar_select %p143, %s14, 1
      %s145 = smul.addr %s144, 16
      %s146 = smul.addr %s145, 8
      %s147 = scalar_lea.vmem %s0, %s146
      %p148 = pneg %p35
      %p149 = pneg %p32
      %p150 = pneg %p56
      %p151 = pneg %p53
      %p152 = pneg %p77
      %p153 = pneg %p74
      %p154 = pneg %p103
      %p155 = pneg %p100
      %p156 = scmp.lt.s32.totalorder %s14, 1
      %s157 = scalar_select %p156, %s14, 1
      %s158 = smul.addr %s157, 4
      %s159 = smul.addr %s158, 8
      %s160 = scalar_lea.vmem %s3, %s159
      %p161 = scmp.lt.s32.totalorder %s14, 1
      %s162 = scalar_select %p161, %s14, 1
      %s163 = smul.addr %s162, 16
      %s164 = smul.addr %s163, 8
      %s165 = scalar_lea.vmem %s0, %s164
      %p166 = scmp.lt.s32.totalorder %s14, 1
      %s167 = scalar_select %p166, %s14, 1
      %s168 = smul.addr %s167, 4
      %s169 = smul.addr %s168, 8
      %s170 = scalar_lea.vmem %s3, %s169
      %v171 = vld [vmem:[%s165] sm:$0xff]
      %v172 = vld [vmem:[%s165 + $0x10] sm:$0xff]
      %v173 = vld [vmem:[%s165 + $0x20] sm:$0xff]
      %v174 = vld [vmem:[%s165 + $0x30] sm:$0xff]
      %v175 = vld [vmem:[%s165 + $0x40] sm:$0xff]
      %v176 = vld [vmem:[%s165 + $0x50] sm:$0xff]
      %v177 = vld [vmem:[%s165 + $0x60] sm:$0xff]
      %v178 = vld [vmem:[%s165 + $0x70] sm:$0xff]
      %v179 = vld [vmem:[%s165] sm:$0xff]
      %v180 = vld [vmem:[%s165 + $0x8] sm:$0xff]
      %v181 = vld [vmem:[%s165 + $0x10] sm:$0xff]
      %v182 = vld [vmem:[%s165 + $0x18] sm:$0xff]
      %v183 = vld [vmem:[%s165 + $0x20] sm:$0xff]
      %v184 = vld [vmem:[%s165 + $0x28] sm:$0xff]
      %v185 = vld [vmem:[%s165 + $0x30] sm:$0xff]
      %v186 = vld [vmem:[%s165 + $0x38] sm:$0xff]
      %v187 = vld [vmem:[%s165 + $0x40] sm:$0xff]
      %v188 = vld [vmem:[%s165 + $0x48] sm:$0xff]
      %v189 = vld [vmem:[%s165 + $0x50] sm:$0xff]
      %v190 = vld [vmem:[%s165 + $0x58] sm:$0xff]
      %v191 = vld [vmem:[%s165 + $0x60] sm:$0xff]
      %v192 = vld [vmem:[%s165 + $0x68] sm:$0xff]
      %v193 = vld [vmem:[%s165 + $0x70] sm:$0xff]
      %v194 = vld [vmem:[%s165 + $0x78] sm:$0xff]
      %211 = vrot.lane.b32.xlu0 %v179, 127
      %v212 = vpop.permute.xlu0 %211
      %213 = vrot.lane.b32.xlu0 %v180, 127
      %v214 = vpop.permute.xlu0 %213
      %215 = vrot.lane.b32.xlu0 %v181, 127
      %v216 = vpop.permute.xlu0 %215
      %217 = vrot.lane.b32.xlu0 %v182, 127
      %v218 = vpop.permute.xlu0 %217
      %219 = vrot.lane.b32.xlu0 %v183, 127
      %v220 = vpop.permute.xlu0 %219
      %221 = vrot.lane.b32.xlu0 %v184, 127
      %v222 = vpop.permute.xlu0 %221
      %223 = vrot.lane.b32.xlu0 %v185, 127
      %v224 = vpop.permute.xlu0 %223
      %225 = vrot.lane.b32.xlu0 %v186, 127
      %v226 = vpop.permute.xlu0 %225
      %227 = vrot.lane.b32.xlu0 %v187, 127
      %v228 = vpop.permute.xlu0 %227
      %229 = vrot.lane.b32.xlu0 %v188, 127
      %v230 = vpop.permute.xlu0 %229
      %231 = vrot.lane.b32.xlu0 %v189, 127
      %v232 = vpop.permute.xlu0 %231
      %233 = vrot.lane.b32.xlu0 %v190, 127
      %v234 = vpop.permute.xlu0 %233
      %235 = vrot.lane.b32.xlu0 %v191, 127
      %v236 = vpop.permute.xlu0 %235
      %237 = vrot.lane.b32.xlu0 %v192, 127
      %v238 = vpop.permute.xlu0 %237
      %239 = vrot.lane.b32.xlu0 %v193, 127
      %v240 = vpop.permute.xlu0 %239
      %241 = vrot.lane.b32.xlu0 %v194, 127
      %v242 = vpop.permute.xlu0 %241
      %vm243 = vcmask 1039360
      %v244 = vsel %vm243, %v212, %v214
      %v245 = vsel %vm243, %v216, %v218
      %v246 = vsel %vm243, %v220, %v222
      %v247 = vsel %vm243, %v224, %v226
      %v248 = vsel %vm243, %v228, %v230
      %v249 = vsel %vm243, %v232, %v234
      %v250 = vsel %vm243, %v236, %v238
      %v251 = vsel %vm243, %v240, %v242
      %260 = vrot.lane.b32.xlu0 %v179, 123
      %v261 = vpop.permute.xlu0 %260
      %262 = vrot.lane.b32.xlu0 %v180, 123
      %v263 = vpop.permute.xlu0 %262
      %264 = vrot.lane.b32.xlu0 %v181, 123
      %v265 = vpop.permute.xlu0 %264
      %266 = vrot.lane.b32.xlu0 %v182, 123
      %v267 = vpop.permute.xlu0 %266
      %268 = vrot.lane.b32.xlu0 %v183, 123
      %v269 = vpop.permute.xlu0 %268
      %270 = vrot.lane.b32.xlu0 %v184, 123
      %v271 = vpop.permute.xlu0 %270
      %272 = vrot.lane.b32.xlu0 %v185, 123
      %v273 = vpop.permute.xlu0 %272
      %274 = vrot.lane.b32.xlu0 %v186, 123
      %v275 = vpop.permute.xlu0 %274
      %276 = vrot.lane.b32.xlu0 %v187, 123
      %v277 = vpop.permute.xlu0 %276
      %278 = vrot.lane.b32.xlu0 %v188, 123
      %v279 = vpop.permute.xlu0 %278
      %280 = vrot.lane.b32.xlu0 %v189, 123
      %v281 = vpop.permute.xlu0 %280
      %282 = vrot.lane.b32.xlu0 %v190, 123
      %v283 = vpop.permute.xlu0 %282
      %284 = vrot.lane.b32.xlu0 %v191, 123
      %v285 = vpop.permute.xlu0 %284
      %286 = vrot.lane.b32.xlu0 %v192, 123
      %v287 = vpop.permute.xlu0 %286
      %288 = vrot.lane.b32.xlu0 %v193, 123
      %v289 = vpop.permute.xlu0 %288
      %290 = vrot.lane.b32.xlu0 %v194, 123
      %v291 = vpop.permute.xlu0 %290
      %vm292 = vcmask 1006592
      %v293 = vsel %vm292, %v261, %v263
      %v294 = vsel %vm292, %v265, %v267
      %v295 = vsel %vm292, %v269, %v271
      %v296 = vsel %vm292, %v273, %v275
      %v297 = vsel %vm292, %v277, %v279
      %v298 = vsel %vm292, %v281, %v283
      %v299 = vsel %vm292, %v285, %v287
      %v300 = vsel %vm292, %v289, %v291
      %309 = vrot.lane.b32.xlu0 %v179, 122
      %v310 = vpop.permute.xlu0 %309
      %311 = vrot.lane.b32.xlu0 %v180, 122
      %v312 = vpop.permute.xlu0 %311
      %313 = vrot.lane.b32.xlu0 %v181, 122
      %v314 = vpop.permute.xlu0 %313
      %315 = vrot.lane.b32.xlu0 %v182, 122
      %v316 = vpop.permute.xlu0 %315
      %317 = vrot.lane.b32.xlu0 %v183, 122
      %v318 = vpop.permute.xlu0 %317
      %319 = vrot.lane.b32.xlu0 %v184, 122
      %v320 = vpop.permute.xlu0 %319
      %321 = vrot.lane.b32.xlu0 %v185, 122
      %v322 = vpop.permute.xlu0 %321
      %323 = vrot.lane.b32.xlu0 %v186, 122
      %v324 = vpop.permute.xlu0 %323
      %325 = vrot.lane.b32.xlu0 %v187, 122
      %v326 = vpop.permute.xlu0 %325
      %327 = vrot.lane.b32.xlu0 %v188, 122
      %v328 = vpop.permute.xlu0 %327
      %329 = vrot.lane.b32.xlu0 %v189, 122
      %v330 = vpop.permute.xlu0 %329
      %331 = vrot.lane.b32.xlu0 %v190, 122
      %v332 = vpop.permute.xlu0 %331
      %333 = vrot.lane.b32.xlu0 %v191, 122
      %v334 = vpop.permute.xlu0 %333
      %335 = vrot.lane.b32.xlu0 %v192, 122
      %v336 = vpop.permute.xlu0 %335
      %337 = vrot.lane.b32.xlu0 %v193, 122
      %v338 = vpop.permute.xlu0 %337
      %339 = vrot.lane.b32.xlu0 %v194, 122
      %v340 = vpop.permute.xlu0 %339
      %vm341 = vcmask 998400
      %v342 = vsel %vm341, %v310, %v312
      %v343 = vsel %vm341, %v314, %v316
      %v344 = vsel %vm341, %v318, %v320
      %v345 = vsel %vm341, %v322, %v324
      %v346 = vsel %vm341, %v326, %v328
      %v347 = vsel %vm341, %v330, %v332
      %v348 = vsel %vm341, %v334, %v336
      %v349 = vsel %vm341, %v338, %v340
      %v358 = vld [vmem:[%s1] sm:$0xff]
      %v359 = vld [vmem:[%s1 + $0x8] sm:$0xff]
      %v360 = vld [vmem:[%s1 + $0x10] sm:$0xff]
      %v361 = vld [vmem:[%s1 + $0x18] sm:$0xff]
      %v362 = vld [vmem:[%s1 + $0x20] sm:$0xff]
      %v363 = vld [vmem:[%s1 + $0x28] sm:$0xff]
      %v364 = vld [vmem:[%s1 + $0x30] sm:$0xff]
      %v365 = vld [vmem:[%s1 + $0x38] sm:$0xff]
      %v366 = vld [vmem:[%s2] sm:$0xff]
      %v367 = vld [vmem:[%s2 + $0x8] sm:$0xff]
      %v368 = vld [vmem:[%s2 + $0x10] sm:$0xff]
      %v369 = vld [vmem:[%s2 + $0x18] sm:$0xff]
      %371 = vset.pattern.permute.xlu0 0
      %372 = vperm.xlu0 %371, %v366
      %v373 = vpop.permute.xlu0 %372
      %376 = vset.pattern.permute.xlu0 0
      %377 = vperm.xlu0 %376, %v367
      %v378 = vpop.permute.xlu0 %377
      %381 = vset.pattern.permute.xlu0 0
      %382 = vperm.xlu0 %381, %v368
      %v383 = vpop.permute.xlu0 %382
      %386 = vset.pattern.permute.xlu0 0
      %387 = vperm.xlu0 %386, %v369
      %v388 = vpop.permute.xlu0 %387
      %390 = vmatprep.subr.mxu0 0.0
      %391 = vmatpush1.msra.mxu0 %v251
      %392 = vmatprep.subr.mxu0 0.0
      %393 = vmatpush1.msra.mxu0 %v250
      %394 = vmatprep.subr.mxu0 0.0
      %395 = vmatpush1.msra.mxu0 %v249
      %396 = vmatprep.subr.mxu0 0.0
      %397 = vmatpush1.msra.mxu0 %v248
      %398 = vmatprep.subr.mxu0 0.0
      %399 = vmatpush1.msra.mxu0 %v247
      %400 = vmatprep.subr.mxu0 0.0
      %401 = vmatpush1.msra.mxu0 %v246
      %402 = vmatprep.subr.mxu0 0.0
      %403 = vmatpush1.msra.mxu0 %v245
      %404 = vmatprep.subr.mxu0 0.0
      %405 = vmatpush1.msra.mxu0 %v244
      %406 = vmatprep.subr.mxu0 0.0
      %407 = vmatpush1.msra.mxu0 %v178
      %408 = vmatprep.subr.mxu0 0.0
      %409 = vmatpush1.msra.mxu0 %v177
      %410 = vmatprep.subr.mxu0 0.0
      %411 = vmatpush1.msra.mxu0 %v176
      %412 = vmatprep.subr.mxu0 0.0
      %413 = vmatpush1.msra.mxu0 %v175
      %414 = vmatprep.subr.mxu0 0.0
      %415 = vmatpush1.msra.mxu0 %v174
      %416 = vmatprep.subr.mxu0 0.0
      %417 = vmatpush1.msra.mxu0 %v173
      %418 = vmatprep.subr.mxu0 0.0
      %419 = vmatpush1.msra.mxu0 %v172
      %420 = vmatprep.subr.mxu0 0.0
      %421 = vmatpush1.msra.mxu0 %v171
      %422 = vmatprep.subr.mxu0 0.0
      %423 = vmatpush2.msra.mxu0 %v349
      %424 = vmatprep.subr.mxu0 0.0
      %425 = vmatpush2.msra.mxu0 %v348
      %426 = vmatprep.subr.mxu0 0.0
      %427 = vmatpush2.msra.mxu0 %v347
      %428 = vmatprep.subr.mxu0 0.0
      %429 = vmatpush2.msra.mxu0 %v346
      %430 = vmatprep.subr.mxu0 0.0
      %431 = vmatpush2.msra.mxu0 %v345
      %432 = vmatprep.subr.mxu0 0.0
      %433 = vmatpush2.msra.mxu0 %v344
      %434 = vmatprep.subr.mxu0 0.0
      %435 = vmatpush2.msra.mxu0 %v343
      %436 = vmatprep.subr.mxu0 0.0
      %437 = vmatpush2.msra.mxu0 %v342
      %438 = vmatprep.subr.mxu0 0.0
      %439 = vmatpush2.msra.mxu0 %v300
      %440 = vmatprep.subr.mxu0 0.0
      %441 = vmatpush2.msra.mxu0 %v299
      %442 = vmatprep.subr.mxu0 0.0
      %443 = vmatpush2.msra.mxu0 %v298
      %444 = vmatprep.subr.mxu0 0.0
      %445 = vmatpush2.msra.mxu0 %v297
      %446 = vmatprep.subr.mxu0 0.0
      %447 = vmatpush2.msra.mxu0 %v296
      %448 = vmatprep.subr.mxu0 0.0
      %449 = vmatpush2.msra.mxu0 %v295
      %450 = vmatprep.subr.mxu0 0.0
      %451 = vmatpush2.msra.mxu0 %v294
      %452 = vmatprep.subr.mxu0 0.0
      %453 = vmatpush2.msra.mxu0 %v293
      %454 = vmatprep.mubr.f32.mxu0 %v359
      %455 = vmatmul.mubr.f32.gmra.mxu0 %v358
      %v456 = vpop.f32.mrf.mxu0
      %v457 = vadd.f32 %v373, %v456
      %v458 = vpop.f32.mrf.mxu0
      %459 = vmatprep.mubr.f32.mxu0 %v361
      %460 = vmatmul.mubr.f32.gmra.mxu0 %v360
      %v461 = vpop.f32.mrf.mxu0
      %v462 = vadd.f32 %v378, %v461
      %v463 = vpop.f32.mrf.mxu0
      %464 = vmatprep.mubr.f32.mxu0 %v363
      %465 = vmatmul.mubr.f32.gmra.mxu0 %v362
      %v466 = vpop.f32.mrf.mxu0
      %v467 = vadd.f32 %v383, %v466
      %v468 = vpop.f32.mrf.mxu0
      %469 = vmatprep.mubr.f32.mxu0 %v365
      %470 = vmatmul.mubr.f32.gmra.mxu0 %v364
      %v471 = vpop.f32.mrf.mxu0
      %v472 = vadd.f32 %v388, %v471
      %v473 = vpop.f32.mrf.mxu0
      %474 = vdwg.mxu0
      %v475 = vlaneseq
      %v476 = vand.u32 %v475, 127
      %v477 = vcvt.s32.f32 %v476
      %v478 = vadd.f32 %v477, 0.5
      %v479 = vmul.f32 %v478, 0.2
      %v480 = vfloor.f32 %v479
      %v481 = vmul.f32 %v480, 5.0
      %v482 = vsub.f32 %v477, %v481
      %vm483 = vcmp.lt.f32.partialorder %v482, 4.0
      %vm484 = vcmp.lt.f32.partialorder %v480, 4.0
      %vm485 = vmand %vm483, %vm484
      %v486 = vsel %vm485, 1, 0
      %v487 = vcvt.s32.f32 %v486
      %v488 = vmul.f32 %v457, %v487
      %v489 = vmul.f32 %v462, %v487
      %v490 = vmul.f32 %v467, %v487
      %v491 = vmul.f32 %v472, %v487
      %492 = vadd.xlane.f32.xlu0 %v488
      %v493 = vpop.xlane.xlu0 %492
      %494 = vadd.xlane.f32.xlu0 %v489
      %v495 = vpop.xlane.xlu0 %494
      %496 = vadd.xlane.f32.xlu0 %v490
      %v497 = vpop.xlane.xlu0 %496
      %498 = vadd.xlane.f32.xlu0 %v491
      %v499 = vpop.xlane.xlu0 %498
      %v500 = vmul.f32 %v493, 0.0625
      %v501 = vmul.f32 %v495, 0.0625
      %v502 = vmul.f32 %v497, 0.0625
      %v503 = vmul.f32 %v499, 0.0625
      %v504 = vmul.f32 %v488, %v457
      %v505 = vmul.f32 %v489, %v462
      %v506 = vmul.f32 %v490, %v467
      %v507 = vmul.f32 %v491, %v472
      %508 = vadd.xlane.f32.xlu0 %v504
      %v509 = vpop.xlane.xlu0 %508
      %510 = vadd.xlane.f32.xlu0 %v505
      %v511 = vpop.xlane.xlu0 %510
      %512 = vadd.xlane.f32.xlu0 %v506
      %v513 = vpop.xlane.xlu0 %512
      %514 = vadd.xlane.f32.xlu0 %v507
      %v515 = vpop.xlane.xlu0 %514
      %v516 = vmul.f32 %v509, 0.0625
      %v517 = vmul.f32 %v511, 0.0625
      %v518 = vmul.f32 %v513, 0.0625
      %v519 = vmul.f32 %v515, 0.0625
      %v520 = vmul.f32 %v500, %v500
      %v521 = vmul.f32 %v501, %v501
      %v522 = vmul.f32 %v502, %v502
      %v523 = vmul.f32 %v503, %v503
      %v524 = vsub.f32 %v516, %v520
      %v525 = vsub.f32 %v517, %v521
      %v526 = vsub.f32 %v518, %v522
      %v527 = vsub.f32 %v519, %v523
      %v528 = vmax.f32 %v524, 0.0
      %v529 = vmax.f32 %v525, 0.0
      %v530 = vmax.f32 %v526, 0.0
      %v531 = vmax.f32 %v527, 0.0
      %v532 = vsub.f32 %v457, %v500
      %v533 = vsub.f32 %v462, %v501
      %v534 = vsub.f32 %v467, %v502
      %v535 = vsub.f32 %v472, %v503
      %v536 = vadd.f32 %v528, 1e-05
      %v537 = vadd.f32 %v529, 1e-05
      %v538 = vadd.f32 %v530, 1e-05
      %v539 = vadd.f32 %v531, 1e-05
      %v540 = vrsqrt.pop %v536
      %v541 = vrsqrt.pop %v537
      %v542 = vrsqrt.pop %v538
      %v543 = vrsqrt.pop %v539
      %v544 = vmul.f32 %v532, %v540
      %v545 = vmul.f32 %v533, %v541
      %v546 = vmul.f32 %v534, %v542
      %v547 = vmul.f32 %v535, %v543
      %vm548 = vcmp.gt.f32.partialorder %v544, 0.0
      %vm549 = vcmp.gt.f32.partialorder %v545, 0.0
      %vm550 = vcmp.gt.f32.partialorder %v546, 0.0
      %vm551 = vcmp.gt.f32.partialorder %v547, 0.0
      %v552 = vmul.f32 %v544, 0.2
      %v553 = vmul.f32 %v545, 0.2
      %v554 = vmul.f32 %v546, 0.2
      %v555 = vmul.f32 %v547, 0.2
      %v556 = vsel %vm548, %v544, %v552
      %v557 = vsel %vm549, %v545, %v553
      %v558 = vsel %vm550, %v546, %v554
      %v559 = vsel %vm551, %v547, %v555
      %560 = vst [vmem:[%s170] sm:$0xff] %v556
      %561 = vst [vmem:[%s170 + $0x8] sm:$0xff] %v557
      %562 = vst [vmem:[%s170 + $0x10] sm:$0xff] %v558
      %563 = vst [vmem:[%s170 + $0x18] sm:$0xff] %v559
      %p564 = scmp.lt.s32.totalorder %s14, 1
      %s565 = scalar_select %p564, %s14, 1
      %s566 = smul.addr %s565, 4
      %s567 = smul.addr %s566, 8
      %s568 = scalar_lea.vmem %s3, %s567
      // Predicated region
      $region33: #{nlayer_discriminator_forward.7} parent=31 // pred_check
        %p569 = pneg %p100
      $region34: #{nlayer_discriminator_forward.7} parent=31 // pred_check_branch
        %571 = sbr.rel (%p569) target = $region36
      $region35: #{nlayer_discriminator_forward.7} parent=31 // pred_region
        _
      $region36: #{nlayer_discriminator_forward.7} parent=31 // pred_fallthru
        _
    $region32: #{nlayer_discriminator_forward.7} parent=5 // pred_fallthru
      _
    %p572 = scmp.le.s32.totalorder 2, %s9
    // Predicated region
    $region37: #{nlayer_discriminator_forward.7} parent=5 // pred_check
      %p573 = pneg %p572
    $region38: #{nlayer_discriminator_forward.7} parent=5 // pred_check_branch
      %575 = sbr.rel (%p573) target = $region40
    $region39: #{nlayer_discriminator_forward.7} parent=5 // pred_region
      %s576 = ssub.s32 %s9, 2
      // Predicated region
      $region41: #{nlayer_discriminator_forward.7} parent=39 // pred_check
        %p577 = pneg %p106
      $region42: #{nlayer_discriminator_forward.7} parent=39 // pred_check_branch
        %579 = sbr.rel (%p577) target = $region44
      $region43: #{nlayer_discriminator_forward.7} parent=39 // pred_region
        %p580 = scmp.lt.s32.totalorder %s15, 1
        %s581 = scalar_select %p580, %s15, 1
        %s582 = smul.addr %s581, 4
        %s583 = smul.addr %s582, 8
        %s584 = scalar_lea.vmem %s3, %s583
      $region44: #{nlayer_discriminator_forward.7} parent=39 // pred_fallthru
        _
    $region40: #{nlayer_discriminator_forward.7} parent=5 // pred_fallthru
      _
  $region6: #{nlayer_discriminator_forward.7} parent=0 // loop_footer
    %s13 = sadd.s32 1, %s9
  $region7: #{nlayer_discriminator_forward.7} parent=0 // loop_footer_branch
    %8 = sbr.rel target = $region3
  $region8: #{nlayer_discriminator_forward.7} parent=0 // loop_exit
    _

// kernel: nlayer_discriminator_forward.8
$region0: #{nlayer_discriminator_forward.8}
  #allocation0 [shape = 'u32[]', space=smem, size = 0x4, offset = 0x4, fixed_abs, tag = 'smem constant byte address 0x4 - core index']
  #allocation1 [shape = 'u32[144,128]{1,0:T(1,128)}', space=vmem, size = 0x12000, scoped, tag = 'internal scratch']
  %s0 = inlined_call_operand.vmem [shape: f32[2,32,256], index: 0, kind: input, shape index: {}]
  %s1 = inlined_call_operand.vmem [shape: f32[64,512], index: 1, kind: input, shape index: {}]
  %s2 = inlined_call_operand.vmem [shape: f32[64,1], index: 2, kind: input, shape index: {}]
  %s3 = inlined_call_operand.vmem [shape: f32[2,64,128], index: 3, kind: output, shape index: {}]
  %s4 = sld [smem:[#allocation0]]
  $region45: #{nlayer_discriminator_forward.8} parent=0
    _
  %s6 = ssub.s32 1, %s4
  %s7 = scalar_select 0, %s6, %s4
  loop: start=0, step=1, limit=4
  $region2: #{nlayer_discriminator_forward.8} parent=0 // loop_pre_header
    _
  $region3: #{nlayer_discriminator_forward.8} parent=0 // loop_header
    %s9 = sphi 0, %s13
    %p10 = scmp.ge.s32.totalorder %s9, 4
    %s19 = sphi 0, %s21
    %s22 = sphi 0, %s19
    %s23 = sphi 0, %s22
    %s39 = sphi 0, %s23
    %s43 = sphi 0, %s43
    %s45 = sphi 0, %s43
    %s46 = sphi 0, %s45
    %s60 = sphi 0, %s46
    %s64 = sphi 0, %s64
    %s66 = sphi 0, %s64
    %s67 = sphi 0, %s66
    %s81 = sphi 0, %s67
    %s87 = sphi 0, %s89
    %s90 = sphi 0, %s87
    %s91 = sphi 0, %s90
    %s107 = sphi 0, %s91
  $region4: #{nlayer_discriminator_forward.8} parent=0 // loop_header_branch
    %12 = sbr.rel (%p10) target = $region8
  $region5: #{nlayer_discriminator_forward.8} parent=0 // loop_body
    %s14 = ssub.s32 %s9, 1
    %s15 = ssub.s32 %s9, 2
    %s16 = sadd.s32 %s9, 1
    %s17 = ssub.s32 %s9, %s16
    %p18 = scmp.eq.s32.totalorder %s17, 0
    %s20 = sadd.s32 %s19, 1
    %s21 = scalar_select %p18, %s19, %s20
    %p24 = pneg %p18
    %p25 = scmp.eq.s32.totalorder %s9, 1
    %p26 = por %p24, %p25
    %p27 = scmp.ne.s32.totalorder %s19, %s22
    %p28 = scmp.eq.s32.totalorder %s9, 0
    %p29 = por %p27, %p28
    %p30 = scmp.ne.s32.totalorder %s19, %s22
    %p31 = scmp.eq.s32.totalorder %s14, 1
    %p32 = por %p30, %p31
    %p33 = scmp.ne.s32.totalorder %s22, %s23
    %p34 = scmp.eq.s32.totalorder %s14, 0
    %p35 = por %p33, %p34
    %p36 = scmp.ne.s32.totalorder %s22, %s23
    %p37 = scmp.eq.s32.totalorder %s15, 1
    %p38 = por %p36, %p37
    %p40 = scmp.ne.s32.totalorder %s23, %s39
    %p41 = scmp.eq.s32.totalorder %s15, 0
    %p42 = por %p40, %p41
    %s44 = sadd.s32 %s43, 1
    %p47 = scmp.eq.s32.totalorder %s9, 1
    %p48 = scmp.ne.s32.totalorder %s43, %s45
    %p49 = scmp.eq.s32.totalorder %s9, 0
    %p50 = por %p48, %p49
    %p51 = scmp.ne.s32.totalorder %s43, %s45
    %p52 = scmp.eq.s32.totalorder %s14, 1
    %p53 = por %p51, %p52
    %p54 = scmp.ne.s32.totalorder %s45, %s46
    %p55 = scmp.eq.s32.totalorder %s14, 0
    %p56 = por %p54, %p55
    %p57 = scmp.ne.s32.totalorder %s45, %s46
    %p58 = scmp.eq.s32.totalorder %s15, 1
    %p59 = por %p57, %p58
    %p61 = scmp.ne.s32.totalorder %s46, %s60
    %p62 = scmp.eq.s32.totalorder %s15, 0
    %p63 = por %p61, %p62
    %s65 = sadd.s32 %s64, 1
    %p68 = scmp.eq.s32.totalorder %s9, 1
    %p69 = scmp.ne.s32.totalorder %s64, %s66
    %p70 = scmp.eq.s32.totalorder %s9, 0
    %p71 = por %p69, %p70
    %p72 = scmp.ne.s32.totalorder %s64, %s66
    %p73 = scmp.eq.s32.totalorder %s14, 1
    %p74 = por %p72, %p73
    %p75 = scmp.ne.s32.totalorder %s66, %s67
    %p76 = scmp.eq.s32.totalorder %s14, 0
    %p77 = por %p75, %p76
    %p78 = scmp.ne.s32.totalorder %s66, %s67
    %p79 = scmp.eq.s32.totalorder %s15, 1
    %p80 = por %p78, %p79
    %p82 = scmp.ne.s32.totalorder %s67, %s81
    %p83 = scmp.eq.s32.totalorder %s15, 0
    %p84 = por %p82, %p83
    %s85 = ssub.s32 %s9, %s16
    %p86 = scmp.eq.s32.totalorder %s85, 0
    %s88 = sadd.s32 %s87, 1
    %s89 = scalar_select %p86, %s87, %s88
    %p92 = pneg %p86
    %p93 = scmp.eq.s32.totalorder %s9, 1
    %p94 = por %p92, %p93
    %p95 = scmp.ne.s32.totalorder %s87, %s90
    %p96 = scmp.eq.s32.totalorder %s9, 0
    %p97 = por %p95, %p96
    %p98 = scmp.ne.s32.totalorder %s87, %s90
    %p99 = scmp.eq.s32.totalorder %s14, 1
    %p100 = por %p98, %p99
    %p101 = scmp.ne.s32.totalorder %s90, %s91
    %p102 = scmp.eq.s32.totalorder %s14, 0
    %p103 = por %p101, %p102
    %p104 = scmp.ne.s32.totalorder %s90, %s91
    %p105 = scmp.eq.s32.totalorder %s15, 1
    %p106 = por %p104, %p105
    %p108 = scmp.ne.s32.totalorder %s91, %s107
    %p109 = scmp.eq.s32.totalorder %s15, 0
    %p110 = por %p108, %p109
    %p111 = scmp.le.s32.totalorder 1, %s9
    %p112 = scmp.lt.s32.totalorder %s9, 3
    %p113 = pnand %p111, %p112
    %p114 = pneg %p113
    // Predicated region
    $region9: #{nlayer_discriminator_forward.8} parent=5 // pred_check
      _
    $region10: #{nlayer_discriminator_forward.8} parent=5 // pred_check_branch
      %116 = sbr.rel (%p113) target = $region12
    $region11: #{nlayer_discriminator_forward.8} parent=5 // pred_region
      %s117 = ssub.s32 %s9, 1
      // Predicated region
      $region13: #{nlayer_discriminator_forward.8} parent=11 // pred_check
        %p118 = pneg %p56
      $region14: #{nlayer_discriminator_forward.8} parent=11 // pred_check_branch
        %120 = sbr.rel (%p118) target = $region16
      $region15: #{nlayer_discriminator_forward.8} parent=11 // pred_region
        _
      $region16: #{nlayer_discriminator_forward.8} parent=11 // pred_fallthru
        _
      // Predicated region
      $region17: #{nlayer_discriminator_forward.8} parent=11 // pred_check
        %p121 = pneg %p77
      $region18: #{nlayer_discriminator_forward.8} parent=11 // pred_check_branch
        %123 = sbr.rel (%p121) target = $region20
      $region19: #{nlayer_discriminator_forward.8} parent=11 // pred_region
        _
      $region20: #{nlayer_discriminator_forward.8} parent=11 // pred_fallthru
        _
    $region12: #{nlayer_discriminator_forward.8} parent=5 // pred_fallthru
      _
    %p124 = scmp.lt.s32.totalorder %s9, 2
    // Predicated region
    $region21: #{nlayer_discriminator_forward.8} parent=5 // pred_check
      %p125 = pneg %p124
    $region22: #{nlayer_discriminator_forward.8} parent=5 // pred_check_branch
      %127 = sbr.rel (%p125) target = $region24
    $region23: #{nlayer_discriminator_forward.8} parent=5 // pred_region
      // Predicated region
      $region25: #{nlayer_discriminator_forward.8} parent=23 // pred_check
        %p128 = pneg %p29
      $region26: #{nlayer_discriminator_forward.8} parent=23 // pred_check_branch
        %130 = sbr.rel (%p128) target = $region28
      $region27: #{nlayer_discriminator_forward.8} parent=23 // pred_region
        %p131 = scmp.lt.s32.totalorder %s9, 1
        %s132 = scalar_select %p131, %s9, 1
        %s133 = smul.addr %s132, 8
        %s134 = smul.addr %s133, 8
        %s135 = scalar_lea.vmem %s0, %s134
      $region28: #{nlayer_discriminator_forward.8} parent=23 // pred_fallthru
        _
    $region24: #{nlayer_discriminator_forward.8} parent=5 // pred_fallthru
      _
    %p136 = scmp.le.s32.totalorder 1, %s9
    %p137 = scmp.lt.s32.totalorder %s9, 3
    %p138 = pnand %p136, %p137
    %p139 = pneg %p138
    // Predicated region
    $region29: #{nlayer_discriminator_forward.8} parent=5 // pred_check
      _
    $region30: #{nlayer_discriminator_forward.8} parent=5 // pred_check_branch
      %141 = sbr.rel (%p138) target = $region32
    $region31: #{nlayer_discriminator_forward.8} parent=5 // pred_region
      %s142 = ssub.s32 %s9, 1
      %p143 = scmp.lt.s32.totalorder %s14, 1
      %s144 = scalar_select %p143, %s14, 1
      %s145 = smul.addr %s144, 8
      %s146 = smul.addr %s145, 8
      %s147 = scalar_lea.vmem %s0, %s146
      %p148 = pneg %p35
      %p149 = pneg %p32
      %p150 = pneg %p56
      %p151 = pneg %p53
      %p152 = pneg %p77
      %p153 = pneg %p74
      %p154 = pneg %p103
      %p155 = pneg %p100
      %p156 = scmp.lt.s32.totalorder %s14, 1
      %s157 = scalar_select %p156, %s14, 1
      %s158 = smul.addr %s157, 8
      %s159 = smul.addr %s158, 8
      %s160 = scalar_lea.vmem %s3, %s159
      %p161 = scmp.lt.s32.totalorder %s14, 1
      %s162 = scalar_select %p161, %s14, 1
      %s163 = smul.addr %s162, 8
      %s164 = smul.addr %s163, 8
      %s165 = scalar_lea.vmem %s0, %s164
      %p166 = scmp.lt.s32.totalorder %s14, 1
      %s167 = scalar_select %p166, %s14, 1
      %s168 = smul.addr %s167, 8
      %s169 = smul.addr %s168, 8
      %s170 = scalar_lea.vmem %s3, %s169
      %v171 = vld [vmem:[%s165] sm:$0xff]
      %v172 = vld [vmem:[%s165 + $0x10] sm:$0xff]
      %v173 = vld [vmem:[%s165 + $0x20] sm:$0xff]
      %v174 = vld [vmem:[%s165 + $0x30] sm:$0xff]
      %v175 = vld [vmem:[%s165] sm:$0xff]
      %v176 = vld [vmem:[%s165 + $0x8] sm:$0xff]
      %v177 = vld [vmem:[%s165 + $0x10] sm:$0xff]
      %v178 = vld [vmem:[%s165 + $0x18] sm:$0xff]
      %v179 = vld [vmem:[%s165 + $0x20] sm:$0xff]
      %v180 = vld [vmem:[%s165 + $0x28] sm:$0xff]
      %v181 = vld [vmem:[%s165 + $0x30] sm:$0xff]
      %v182 = vld [vmem:[%s165 + $0x38] sm:$0xff]
      %191 = vrot.lane.b32.xlu0 %v175, 127
      %v192 = vpop.permute.xlu0 %191
      %193 = vrot.lane.b32.xlu0 %v176, 127
      %v194 = vpop.permute.xlu0 %193
      %195 = vrot.lane.b32.xlu0 %v177, 127
      %v196 = vpop.permute.xlu0 %195
      %197 = vrot.lane.b32.xlu0 %v178, 127
      %v198 = vpop.permute.xlu0 %197
      %199 = vrot.lane.b32.xlu0 %v179, 127
      %v200 = vpop.permute.xlu0 %199
      %201 = vrot.lane.b32.xlu0 %v180, 127
      %v202 = vpop.permute.xlu0 %201
      %203 = vrot.lane.b32.xlu0 %v181, 127
      %v204 = vpop.permute.xlu0 %203
      %205 = vrot.lane.b32.xlu0 %v182, 127
      %v206 = vpop.permute.xlu0 %205
      %vm207 = vcmask 1039360
      %v208 = vsel %vm207, %v192, %v194
      %v209 = vsel %vm207, %v196, %v198
      %v210 = vsel %vm207, %v200, %v202
      %v211 = vsel %vm207, %v204, %v206
      %216 = vrot.lane.b32.xlu0 %v175, 126
      %v217 = vpop.permute.xlu0 %216
      %218 = vrot.lane.b32.xlu0 %v176, 126
      %v219 = vpop.permute.xlu0 %218
      %220 = vrot.lane.b32.xlu0 %v177, 126
      %v221 = vpop.permute.xlu0 %220
      %222 = vrot.lane.b32.xlu0 %v178, 126
      %v223 = vpop.permute.xlu0 %222
      %224 = vrot.lane.b32.xlu0 %v179, 126
      %v225 = vpop.permute.xlu0 %224
      %226 = vrot.lane.b32.xlu0 %v180, 126
      %v227 = vpop.permute.xlu0 %226
      %228 = vrot.lane.b32.xlu0 %v181, 126
      %v229 = vpop.permute.xlu0 %228
      %230 = vrot.lane.b32.xlu0 %v182, 126
      %v231 = vpop.permute.xlu0 %230
      %vm232 = vcmask 1031168
      %v233 = vsel %vm232, %v217, %v219
      %v234 = vsel %vm232, %v221, %v223
      %v235 = vsel %vm232, %v225, %v227
      %v236 = vsel %vm232, %v229, %v231
      %241 = vrot.lane.b32.xlu0 %v175, 125
      %v242 = vpop.permute.xlu0 %241
      %243 = vrot.lane.b32.xlu0 %v176, 125
      %v244 = vpop.permute.xlu0 %243
      %245 = vrot.lane.b32.xlu0 %v177, 125
      %v246 = vpop.permute.xlu0 %245
      %247 = vrot.lane.b32.xlu0 %v178, 125
      %v248 = vpop.permute.xlu0 %247
      %249 = vrot.lane.b32.xlu0 %v179, 125
      %v250 = vpop.permute.xlu0 %249
      %251 = vrot.lane.b32.xlu0 %v180, 125
      %v252 = vpop.permute.xlu0 %251
      %253 = vrot.lane.b32.xlu0 %v181, 125
      %v254 = vpop.permute.xlu0 %253
      %255 = vrot.lane.b32.xlu0 %v182, 125
      %v256 = vpop.permute.xlu0 %255
      %vm257 = vcmask 1022976
      %v258 = vsel %vm257, %v242, %v244
      %v259 = vsel %vm257, %v246, %v248
      %v260 = vsel %vm257, %v250, %v252
      %v261 = vsel %vm257, %v254, %v256
      %266 = vrot.lane.b32.xlu0 %v175, 122
      %v267 = vpop.permute.xlu0 %266
      %268 = vrot.lane.b32.xlu0 %v176, 122
      %v269 = vpop.permute.xlu0 %268
      %270 = vrot.lane.b32.xlu0 %v177, 122
      %v271 = vpop.permute.xlu0 %270
      %272 = vrot.lane.b32.xlu0 %v178, 122
      %v273 = vpop.permute.xlu0 %272
      %274 = vrot.lane.b32.xlu0 %v179, 122
      %v275 = vpop.permute.xlu0 %274
      %276 = vrot.lane.b32.xlu0 %v180, 122
      %v277 = vpop.permute.xlu0 %276
      %278 = vrot.lane.b32.xlu0 %v181, 122
      %v279 = vpop.permute.xlu0 %278
      %280 = vrot.lane.b32.xlu0 %v182, 122
      %v281 = vpop.permute.xlu0 %280
      %vm282 = vcmask 998400
      %v283 = vsel %vm282, %v267, %v269
      %v284 = vsel %vm282, %v271, %v273
      %v285 = vsel %vm282, %v275, %v277
      %v286 = vsel %vm282, %v279, %v281
      %291 = vrot.lane.b32.xlu0 %v175, 121
      %v292 = vpop.permute.xlu0 %291
      %293 = vrot.lane.b32.xlu0 %v176, 121
      %v294 = vpop.permute.xlu0 %293
      %295 = vrot.lane.b32.xlu0 %v177, 121
      %v296 = vpop.permute.xlu0 %295
      %297 = vrot.lane.b32.xlu0 %v178, 121
      %v298 = vpop.permute.xlu0 %297
      %299 = vrot.lane.b32.xlu0 %v179, 121
      %v300 = vpop.permute.xlu0 %299
      %301 = vrot.lane.b32.xlu0 %v180, 121
      %v302 = vpop.permute.xlu0 %301
      %303 = vrot.lane.b32.xlu0 %v181, 121
      %v304 = vpop.permute.xlu0 %303
      %305 = vrot.lane.b32.xlu0 %v182, 121
      %v306 = vpop.permute.xlu0 %305
      %vm307 = vcmask 990208
      %v308 = vsel %vm307, %v292, %v294
      %v309 = vsel %vm307, %v296, %v298
      %v310 = vsel %vm307, %v300, %v302
      %v311 = vsel %vm307, %v304, %v306
      %316 = vrot.lane.b32.xlu0 %v175, 120
      %v317 = vpop.permute.xlu0 %316
      %318 = vrot.lane.b32.xlu0 %v176, 120
      %v319 = vpop.permute.xlu0 %318
      %320 = vrot.lane.b32.xlu0 %v177, 120
      %v321 = vpop.permute.xlu0 %320
      %322 = vrot.lane.b32.xlu0 %v178, 120
      %v323 = vpop.permute.xlu0 %322
      %324 = vrot.lane.b32.xlu0 %v179, 120
      %v325 = vpop.permute.xlu0 %324
      %326 = vrot.lane.b32.xlu0 %v180, 120
      %v327 = vpop.permute.xlu0 %326
      %328 = vrot.lane.b32.xlu0 %v181, 120
      %v329 = vpop.permute.xlu0 %328
      %330 = vrot.lane.b32.xlu0 %v182, 120
      %v331 = vpop.permute.xlu0 %330
      %vm332 = vcmask 982016
      %v333 = vsel %vm332, %v317, %v319
      %v334 = vsel %vm332, %v321, %v323
      %v335 = vsel %vm332, %v325, %v327
      %v336 = vsel %vm332, %v329, %v331
      %341 = vrot.lane.b32.xlu0 %v175, 119
      %v342 = vpop.permute.xlu0 %341
      %343 = vrot.lane.b32.xlu0 %v176, 119
      %v344 = vpop.permute.xlu0 %343
      %345 = vrot.lane.b32.xlu0 %v177, 119
      %v346 = vpop.permute.xlu0 %345
      %347 = vrot.lane.b32.xlu0 %v178, 119
      %v348 = vpop.permute.xlu0 %347
      %349 = vrot.lane.b32.xlu0 %v179, 119
      %v350 = vpop.permute.xlu0 %349
      %351 = vrot.lane.b32.xlu0 %v180, 119
      %v352 = vpop.permute.xlu0 %351
      %353 = vrot.lane.b32.xlu0 %v181, 119
      %v354 = vpop.permute.xlu0 %353
      %355 = vrot.lane.b32.xlu0 %v182, 119
      %v356 = vpop.permute.xlu0 %355
      %vm357 = vcmask 973824
      %v358 = vsel %vm357, %v342, %v344
      %v359 = vsel %vm357, %v346, %v348
      %v360 = vsel %vm357, %v350, %v352
      %v361 = vsel %vm357, %v354, %v356
      %366 = vrot.lane.b32.xlu0 %v175, 116
      %v367 = vpop.permute.xlu0 %366
      %368 = vrot.lane.b32.xlu0 %v176, 116
      %v369 = vpop.permute.xlu0 %368
      %370 = vrot.lane.b32.xlu0 %v177, 116
      %v371 = vpop.permute.xlu0 %370
      %372 = vrot.lane.b32.xlu0 %v178, 116
      %v373 = vpop.permute.xlu0 %372
      %374 = vrot.lane.b32.xlu0 %v179, 116
      %v375 = vpop.permute.xlu0 %374
      %376 = vrot.lane.b32.xlu0 %v180, 116
      %v377 = vpop.permute.xlu0 %376
      %378 = vrot.lane.b32.xlu0 %v181, 116
      %v379 = vpop.permute.xlu0 %378
      %380 = vrot.lane.b32.xlu0 %v182, 116
      %v381 = vpop.permute.xlu0 %380
      %vm382 = vcmask 949248
      %v383 = vsel %vm382, %v367, %v369
      %v384 = vsel %vm382, %v371, %v373
      %v385 = vsel %vm382, %v375, %v377
      %v386 = vsel %vm382, %v379, %v381
      %391 = vrot.lane.b32.xlu0 %v175, 115
      %v392 = vpop.permute.xlu0 %391
      %393 = vrot.lane.b32.xlu0 %v176, 115
      %v394 = vpop.permute.xlu0 %393
      %395 = vrot.lane.b32.xlu0 %v177, 115
      %v396 = vpop.permute.xlu0 %395
      %397 = vrot.lane.b32.xlu0 %v178, 115
      %v398 = vpop.permute.xlu0 %397
      %399 = vrot.lane.b32.xlu0 %v179, 115
      %v400 = vpop.permute.xlu0 %399
      %401 = vrot.lane.b32.xlu0 %v180, 115
      %v402 = vpop.permute.xlu0 %401
      %403 = vrot.lane.b32.xlu0 %v181, 115
      %v404 = vpop.permute.xlu0 %403
      %405 = vrot.lane.b32.xlu0 %v182, 115
      %v406 = vpop.permute.xlu0 %405
      %vm407 = vcmask 941056
      %v408 = vsel %vm407, %v392, %v394
      %v409 = vsel %vm407, %v396, %v398
      %v410 = vsel %vm407, %v400, %v402
      %v411 = vsel %vm407, %v404, %v406
      %416 = vrot.lane.b32.xlu0 %v175, 114
      %v417 = vpop.permute.xlu0 %416
      %418 = vrot.lane.b32.xlu0 %v176, 114
      %v419 = vpop.permute.xlu0 %418
      %420 = vrot.lane.b32.xlu0 %v177, 114
      %v421 = vpop.permute.xlu0 %420
      %422 = vrot.lane.b32.xlu0 %v178, 114
      %v423 = vpop.permute.xlu0 %422
      %424 = vrot.lane.b32.xlu0 %v179, 114
      %v425 = vpop.permute.xlu0 %424
      %426 = vrot.lane.b32.xlu0 %v180, 114
      %v427 = vpop.permute.xlu0 %426
      %428 = vrot.lane.b32.xlu0 %v181, 114
      %v429 = vpop.permute.xlu0 %428
      %430 = vrot.lane.b32.xlu0 %v182, 114
      %v431 = vpop.permute.xlu0 %430
      %vm432 = vcmask 932864
      %v433 = vsel %vm432, %v417, %v419
      %v434 = vsel %vm432, %v421, %v423
      %v435 = vsel %vm432, %v425, %v427
      %v436 = vsel %vm432, %v429, %v431
      %441 = vrot.lane.b32.xlu0 %v175, 113
      %v442 = vpop.permute.xlu0 %441
      %443 = vrot.lane.b32.xlu0 %v176, 113
      %v444 = vpop.permute.xlu0 %443
      %445 = vrot.lane.b32.xlu0 %v177, 113
      %v446 = vpop.permute.xlu0 %445
      %447 = vrot.lane.b32.xlu0 %v178, 113
      %v448 = vpop.permute.xlu0 %447
      %449 = vrot.lane.b32.xlu0 %v179, 113
      %v450 = vpop.permute.xlu0 %449
      %451 = vrot.lane.b32.xlu0 %v180, 113
      %v452 = vpop.permute.xlu0 %451
      %453 = vrot.lane.b32.xlu0 %v181, 113
      %v454 = vpop.permute.xlu0 %453
      %455 = vrot.lane.b32.xlu0 %v182, 113
      %v456 = vpop.permute.xlu0 %455
      %vm457 = vcmask 924672
      %v458 = vsel %vm457, %v442, %v444
      %v459 = vsel %vm457, %v446, %v448
      %v460 = vsel %vm457, %v450, %v452
      %v461 = vsel %vm457, %v454, %v456
      %466 = vrot.lane.b32.xlu0 %v175, 110
      %v467 = vpop.permute.xlu0 %466
      %468 = vrot.lane.b32.xlu0 %v176, 110
      %v469 = vpop.permute.xlu0 %468
      %470 = vrot.lane.b32.xlu0 %v177, 110
      %v471 = vpop.permute.xlu0 %470
      %472 = vrot.lane.b32.xlu0 %v178, 110
      %v473 = vpop.permute.xlu0 %472
      %474 = vrot.lane.b32.xlu0 %v179, 110
      %v475 = vpop.permute.xlu0 %474
      %476 = vrot.lane.b32.xlu0 %v180, 110
      %v477 = vpop.permute.xlu0 %476
      %478 = vrot.lane.b32.xlu0 %v181, 110
      %v479 = vpop.permute.xlu0 %478
      %480 = vrot.lane.b32.xlu0 %v182, 110
      %v481 = vpop.permute.xlu0 %480
      %vm482 = vcmask 900096
      %v483 = vsel %vm482, %v467, %v469
      %v484 = vsel %vm482, %v471, %v473
      %v485 = vsel %vm482, %v475, %v477
      %v486 = vsel %vm482, %v479, %v481
      %491 = vrot.lane.b32.xlu0 %v175, 109
      %v492 = vpop.permute.xlu0 %491
      %493 = vrot.lane.b32.xlu0 %v176, 109
      %v494 = vpop.permute.xlu0 %493
      %495 = vrot.lane.b32.xlu0 %v177, 109
      %v496 = vpop.permute.xlu0 %495
      %497 = vrot.lane.b32.xlu0 %v178, 109
      %v498 = vpop.permute.xlu0 %497
      %499 = vrot.lane.b32.xlu0 %v179, 109
      %v500 = vpop.permute.xlu0 %499
      %501 = vrot.lane.b32.xlu0 %v180, 109
      %v502 = vpop.permute.xlu0 %501
      %503 = vrot.lane.b32.xlu0 %v181, 109
      %v504 = vpop.permute.xlu0 %503
      %505 = vrot.lane.b32.xlu0 %v182, 109
      %v506 = vpop.permute.xlu0 %505
      %vm507 = vcmask 891904
      %v508 = vsel %vm507, %v492, %v494
      %v509 = vsel %vm507, %v496, %v498
      %v510 = vsel %vm507, %v500, %v502
      %v511 = vsel %vm507, %v504, %v506
      %516 = vrot.lane.b32.xlu0 %v175, 108
      %v517 = vpop.permute.xlu0 %516
      %518 = vrot.lane.b32.xlu0 %v176, 108
      %v519 = vpop.permute.xlu0 %518
      %520 = vrot.lane.b32.xlu0 %v177, 108
      %v521 = vpop.permute.xlu0 %520
      %522 = vrot.lane.b32.xlu0 %v178, 108
      %v523 = vpop.permute.xlu0 %522
      %524 = vrot.lane.b32.xlu0 %v179, 108
      %v525 = vpop.permute.xlu0 %524
      %526 = vrot.lane.b32.xlu0 %v180, 108
      %v527 = vpop.permute.xlu0 %526
      %528 = vrot.lane.b32.xlu0 %v181, 108
      %v529 = vpop.permute.xlu0 %528
      %530 = vrot.lane.b32.xlu0 %v182, 108
      %v531 = vpop.permute.xlu0 %530
      %vm532 = vcmask 883712
      %v533 = vsel %vm532, %v517, %v519
      %v534 = vsel %vm532, %v521, %v523
      %v535 = vsel %vm532, %v525, %v527
      %v536 = vsel %vm532, %v529, %v531
      %541 = vrot.lane.b32.xlu0 %v175, 107
      %v542 = vpop.permute.xlu0 %541
      %543 = vrot.lane.b32.xlu0 %v176, 107
      %v544 = vpop.permute.xlu0 %543
      %545 = vrot.lane.b32.xlu0 %v177, 107
      %v546 = vpop.permute.xlu0 %545
      %547 = vrot.lane.b32.xlu0 %v178, 107
      %v548 = vpop.permute.xlu0 %547
      %549 = vrot.lane.b32.xlu0 %v179, 107
      %v550 = vpop.permute.xlu0 %549
      %551 = vrot.lane.b32.xlu0 %v180, 107
      %v552 = vpop.permute.xlu0 %551
      %553 = vrot.lane.b32.xlu0 %v181, 107
      %v554 = vpop.permute.xlu0 %553
      %555 = vrot.lane.b32.xlu0 %v182, 107
      %v556 = vpop.permute.xlu0 %555
      %vm557 = vcmask 875520
      %v558 = vsel %vm557, %v542, %v544
      %v559 = vsel %vm557, %v546, %v548
      %v560 = vsel %vm557, %v550, %v552
      %v561 = vsel %vm557, %v554, %v556
      %v566 = vld [vmem:[%s1] sm:$0xff]
      %v567 = vld [vmem:[%s1 + $0x8] sm:$0xff]
      %v568 = vld [vmem:[%s1 + $0x10] sm:$0xff]
      %v569 = vld [vmem:[%s1 + $0x18] sm:$0xff]
      %v570 = vld [vmem:[%s1 + $0x20] sm:$0xff]
      %v571 = vld [vmem:[%s1 + $0x28] sm:$0xff]
      %v572 = vld [vmem:[%s1 + $0x30] sm:$0xff]
      %v573 = vld [vmem:[%s1 + $0x38] sm:$0xff]
      %v574 = vld [vmem:[%s1 + $0x40] sm:$0xff]
      %v575 = vld [vmem:[%s1 + $0x48] sm:$0xff]
      %v576 = vld [vmem:[%s1 + $0x50] sm:$0xff]
      %v577 = vld [vmem:[%s1 + $0x58] sm:$0xff]
      %v578 = vld [vmem:[%s1 + $0x60] sm:$0xff]
      %v579 = vld [vmem:[%s1 + $0x68] sm:$0xff]
      %v580 = vld [vmem:[%s1 + $0x70] sm:$0xff]
      %v581 = vld [vmem:[%s1 + $0x78] sm:$0xff]
      %v582 = vld [vmem:[%s1 + $0x80] sm:$0xff]
      %v583 = vld [vmem:[%s1 + $0x88] sm:$0xff]
      %v584 = vld [vmem:[%s1 + $0x90] sm:$0xff]
      %v585 = vld [vmem:[%s1 + $0x98] sm:$0xff]
      %v586 = vld [vmem:[%s1 + $0xa0] sm:$0xff]
      %v587 = vld [vmem:[%s1 + $0xa8] sm:$0xff]
      %v588 = vld [vmem:[%s1 + $0xb0] sm:$0xff]
      %v589 = vld [vmem:[%s1 + $0xb8] sm:$0xff]
      %v590 = vld [vmem:[%s1 + $0xc0] sm:$0xff]
      %v591 = vld [vmem:[%s1 + $0xc8] sm:$0xff]
      %v592 = vld [vmem:[%s1 + $0xd0] sm:$0xff]
      %v593 = vld [vmem:[%s1 + $0xd8] sm:$0xff]
      %v594 = vld [vmem:[%s1 + $0xe0] sm:$0xff]
      %v595 = vld [vmem:[%s1 + $0xe8] sm:$0xff]
      %v596 = vld [vmem:[%s1 + $0xf0] sm:$0xff]
      %v597 = vld [vmem:[%s1 + $0xf8] sm:$0xff]
      %v598 = vld [vmem:[%s2] sm:$0xff]
      %v599 = vld [vmem:[%s2 + $0x8] sm:$0xff]
      %v600 = vld [vmem:[%s2 + $0x10] sm:$0xff]
      %v601 = vld [vmem:[%s2 + $0x18] sm:$0xff]
      %v602 = vld [vmem:[%s2 + $0x20] sm:$0xff]
      %v603 = vld [vmem:[%s2 + $0x28] sm:$0xff]
      %v604 = vld [vmem:[%s2 + $0x30] sm:$0xff]
      %v605 = vld [vmem:[%s2 + $0x38] sm:$0xff]
      %607 = vset.pattern.permute.xlu0 0
      %608 = vperm.xlu0 %607, %v598
      %v609 = vpop.permute.xlu0 %608
      %612 = vset.pattern.permute.xlu0 0
      %613 = vperm.xlu0 %612, %v599
      %v614 = vpop.permute.xlu0 %613
      %617 = vset.pattern.permute.xlu0 0
      %618 = vperm.xlu0 %617, %v600
      %v619 = vpop.permute.xlu0 %618
      %622 = vset.pattern.permute.xlu0 0
      %623 = vperm.xlu0 %622, %v601
      %v624 = vpop.permute.xlu0 %623
      %627 = vset.pattern.permute.xlu0 0
      %628 = vperm.xlu0 %627, %v602
      %v629 = vpop.permute.xlu0 %628
      %632 = vset.pattern.permute.xlu0 0
      %633 = vperm.xlu0 %632, %v603
      %v634 = vpop.permute.xlu0 %633
      %637 = vset.pattern.permute.xlu0 0
      %638 = vperm.xlu0 %637, %v604
      %v639 = vpop.permute.xlu0 %638
      %642 = vset.pattern.permute.xlu0 0
      %643 = vperm.xlu0 %642, %v605
      %v644 = vpop.permute.xlu0 %643
      %646 = vmatprep.subr.mxu0 0.0
      %647 = vmatpush1.msra.mxu0 %v261
      %648 = vmatprep.subr.mxu0 0.0
      %649 = vmatpush1.msra.mxu0 %v260
      %650 = vmatprep.subr.mxu0 0.0
      %651 = vmatpush1.msra.mxu0 %v259
      %652 = vmatprep.subr.mxu0 0.0
      %653 = vmatpush1.msra.mxu0 %v258
      %654 = vmatprep.subr.mxu0 0.0
      %655 = vmatpush1.msra.mxu0 %v236
      %656 = vmatprep.subr.mxu0 0.0
      %657 = vmatpush1.msra.mxu0 %v235
      %658 = vmatprep.subr.mxu0 0.0
      %659 = vmatpush1.msra.mxu0 %v234
      %660 = vmatprep.subr.mxu0 0.0
      %661 = vmatpush1.msra.mxu0 %v233
      %662 = vmatprep.subr.mxu0 0.0
      %663 = vmatpush1.msra.mxu0 %v211
      %664 = vmatprep.subr.mxu0 0.0
      %665 = vmatpush1.msra.mxu0 %v210
      %666 = vmatprep.subr.mxu0 0.0
      %667 = vmatpush1.msra.mxu0 %v209
      %668 = vmatprep.subr.mxu0 0.0
      %669 = vmatpush1.msra.mxu0 %v208
      %670 = vmatprep.subr.mxu0 0.0
      %671 = vmatpush1.msra.mxu0 %v174
      %672 = vmatprep.subr.mxu0 0.0
      %673 = vmatpush1.msra.mxu0 %v173
      %674 = vmatprep.subr.mxu0 0.0
      %675 = vmatpush1.msra.mxu0 %v172
      %676 = vmatprep.subr.mxu0 0.0
      %677 = vmatpush1.msra.mxu0 %v171
      %678 = vmatprep.subr.mxu0 0.0
      %679 = vmatpush2.msra.mxu0 %v361
      %680 = vmatprep.subr.mxu0 0.0
      %681 = vmatpush2.msra.mxu0 %v360
      %682 = vmatprep.subr.mxu0 0.0
      %683 = vmatpush2.msra.mxu0 %v359
      %684 = vmatprep.subr.mxu0 0.0
      %685 = vmatpush2.msra.mxu0 %v358
      %686 = vmatprep.subr.mxu0 0.0
      %687 = vmatpush2.msra.mxu0 %v336
      %688 = vmatprep.subr.mxu0 0.0
      %689 = vmatpush2.msra.mxu0 %v335
      %690 = vmatprep.subr.mxu0 0.0
      %691 = vmatpush2.msra.mxu0 %v334
      %692 = vmatprep.subr.mxu0 0.0
      %693 = vmatpush2.msra.mxu0 %v333
      %694 = vmatprep.subr.mxu0 0.0
      %695 = vmatpush2.msra.mxu0 %v311
      %696 = vmatprep.subr.mxu0 0.0
      %697 = vmatpush2.msra.mxu0 %v310
      %698 = vmatprep.subr.mxu0 0.0
      %699 = vmatpush2.msra.mxu0 %v309
      %700 = vmatprep.subr.mxu0 0.0
      %701 = vmatpush2.msra.mxu0 %v308
      %702 = vmatprep.subr.mxu0 0.0
      %703 = vmatpush2.msra.mxu0 %v286
      %704 = vmatprep.subr.mxu0 0.0
      %705 = vmatpush2.msra.mxu0 %v285
      %706 = vmatprep.subr.mxu0 0.0
      %707 = vmatpush2.msra.mxu0 %v284
      %708 = vmatprep.subr.mxu0 0.0
      %709 = vmatpush2.msra.mxu0 %v283
      %710 = vmatprep.mubr.f32.mxu0 %v567
      %711 = vmatmul.mubr.f32.gmra.mxu0 %v566
      %v712 = vpop.f32.mrf.mxu0
      %v713 = vadd.f32 %v609, %v712
      %v714 = vpop.f32.mrf.mxu0
      %715 = vmatprep.mubr.f32.mxu0 %v571
      %716 = vmatmul.mubr.f32.gmra.mxu0 %v570
      %v717 = vpop.f32.mrf.mxu0
      %v718 = vadd.f32 %v614, %v717
      %v719 = vpop.f32.mrf.mxu0
      %720 = vmatprep.mubr.f32.mxu0 %v575
      %721 = vmatmul.mubr.f32.gmra.mxu0 %v574
      %v722 = vpop.f32.mrf.mxu0
      %v723 = vadd.f32 %v619, %v722
      %v724 = vpop.f32.mrf.mxu0
      %725 = vmatprep.mubr.f32.mxu0 %v579
      %726 = vmatmul.mubr.f32.gmra.mxu0 %v578
      %v727 = vpop.f32.mrf.mxu0
      %v728 = vadd.f32 %v624, %v727
      %v729 = vpop.f32.mrf.mxu0
      %730 = vmatprep.mubr.f32.mxu0 %v583
      %731 = vmatmul.mubr.f32.gmra.mxu0 %v582
      %v732 = vpop.f32.mrf.mxu0
      %v733 = vadd.f32 %v629, %v732
      %v734 = vpop.f32.mrf.mxu0
      %735 = vmatprep.mubr.f32.mxu0 %v587
      %736 = vmatmul.mubr.f32.gmra.mxu0 %v586
      %v737 = vpop.f32.mrf.mxu0
      %v738 = vadd.f32 %v634, %v737
      %v739 = vpop.f32.mrf.mxu0
      %740 = vmatprep.mubr.f32.mxu0 %v591
      %741 = vmatmul.mubr.f32.gmra.mxu0 %v590
      %v742 = vpop.f32.mrf.mxu0
      %v743 = vadd.f32 %v639, %v742
      %v744 = vpop.f32.mrf.mxu0
      %745 = vmatprep.mubr.f32.mxu0 %v595
      %746 = vmatmul.mubr.f32.gmra.mxu0 %v594
      %v747 = vpop.f32.mrf.mxu0
      %v748 = vadd.f32 %v644, %v747
      %v749 = vpop.f32.mrf.mxu0
      %750 = vdwg.mxu0
      %751 = vmatprep.subr.mxu0 0.0
      %752 = vmatpush1.msra.mxu0 %v461
      %753 = vmatprep.subr.mxu0 0.0
      %754 = vmatpush1.msra.mxu0 %v460
      %755 = vmatprep.subr.mxu0 0.0
      %756 = vmatpush1.msra.mxu0 %v459
      %757 = vmatprep.subr.mxu0 0.0
      %758 = vmatpush1.msra.mxu0 %v458
      %759 = vmatprep.subr.mxu0 0.0
      %760 = vmatpush1.msra.mxu0 %v436
      %761 = vmatprep.subr.mxu0 0.0
      %762 = vmatpush1.msra.mxu0 %v435
      %763 = vmatprep.subr.mxu0 0.0
      %764 = vmatpush1.msra.mxu0 %v434
      %765 = vmatprep.subr.mxu0 0.0
      %766 = vmatpush1.msra.mxu0 %v433
      %767 = vmatprep.subr.mxu0 0.0
      %768 = vmatpush1.msra.mxu0 %v411
      %769 = vmatprep.subr.mxu0 0.0
      %770 = vmatpush1.msra.mxu0 %v410
      %771 = vmatprep.subr.mxu0 0.0
      %772 = vmatpush1.msra.mxu0 %v409
      %773 = vmatprep.subr.mxu0 0.0
      %774 = vmatpush1.msra.mxu0 %v408
      %775 = vmatprep.subr.mxu0 0.0
      %776 = vmatpush1.msra.mxu0 %v386
      %777 = vmatprep.subr.mxu0 0.0
      %778 = vmatpush1.msra.mxu0 %v385
      %779 = vmatprep.subr.mxu0 0.0
      %780 = vmatpush1.msra.mxu0 %v384
      %781 = vmatprep.subr.mxu0 0.0
      %782 = vmatpush1.msra.mxu0 %v383
      %783 = vmatprep.subr.mxu0 0.0
      %784 = vmatpush2.msra.mxu0 %v561
      %785 = vmatprep.subr.mxu0 0.0
      %786 = vmatpush2.msra.mxu0 %v560
      %787 = vmatprep.subr.mxu0 0.0
      %788 = vmatpush2.msra.mxu0 %v559
      %789 = vmatprep.subr.mxu0 0.0
      %790 = vmatpush2.msra.mxu0 %v558
      %791 = vmatprep.subr.mxu0 0.0
      %792 = vmatpush2.msra.mxu0 %v536
      %793 = vmatprep.subr.mxu0 0.0
      %794 = vmatpush2.msra.mxu0 %v535
      %795 = vmatprep.subr.mxu0 0.0
      %796 = vmatpush2.msra.mxu0 %v534
      %797 = vmatprep.subr.mxu0 0.0
      %798 = vmatpush2.msra.mxu0 %v533
      %799 = vmatprep.subr.mxu0 0.0
      %800 = vmatpush2.msra.mxu0 %v511
      %801 = vmatprep.subr.mxu0 0.0
      %802 = vmatpush2.msra.mxu0 %v510
      %803 = vmatprep.subr.mxu0 0.0
      %804 = vmatpush2.msra.mxu0 %v509
      %805 = vmatprep.subr.mxu0 0.0
      %806 = vmatpush2.msra.mxu0 %v508
      %807 = vmatprep.subr.mxu0 0.0
      %808 = vmatpush2.msra.mxu0 %v486
      %809 = vmatprep.subr.mxu0 0.0
      %810 = vmatpush2.msra.mxu0 %v485
      %811 = vmatprep.subr.mxu0 0.0
      %812 = vmatpush2.msra.mxu0 %v484
      %813 = vmatprep.subr.mxu0 0.0
      %814 = vmatpush2.msra.mxu0 %v483
      %815 = vmatprep.mubr.f32.mxu0 %v569
      %816 = vmatmul.mubr.f32.gmra.mxu0 %v568
      %v817 = vpop.f32.mrf.mxu0
      %v818 = vadd.f32 %v713, %v817
      %v819 = vpop.f32.mrf.mxu0
      %820 = vmatprep.mubr.f32.mxu0 %v573
      %821 = vmatmul.mubr.f32.gmra.mxu0 %v572
      %v822 = vpop.f32.mrf.mxu0
      %v823 = vadd.f32 %v718, %v822
      %v824 = vpop.f32.mrf.mxu0
      %825 = vmatprep.mubr.f32.mxu0 %v577
      %826 = vmatmul.mubr.f32.gmra.mxu0 %v576
      %v827 = vpop.f32.mrf.mxu0
      %v828 = vadd.f32 %v723, %v827
      %v829 = vpop.f32.mrf.mxu0
      %830 = vmatprep.mubr.f32.mxu0 %v581
      %831 = vmatmul.mubr.f32.gmra.mxu0 %v580
      %v832 = vpop.f32.mrf.mxu0
      %v833 = vadd.f32 %v728, %v832
      %v834 = vpop.f32.mrf.mxu0
      %835 = vmatprep.mubr.f32.mxu0 %v585
      %836 = vmatmul.mubr.f32.gmra.mxu0 %v584
      %v837 = vpop.f32.mrf.mxu0
      %v838 = vadd.f32 %v733, %v837
      %v839 = vpop.f32.mrf.mxu0
      %840 = vmatprep.mubr.f32.mxu0 %v589
      %841 = vmatmul.mubr.f32.gmra.mxu0 %v588
      %v842 = vpop.f32.mrf.mxu0
      %v843 = vadd.f32 %v738, %v842
      %v844 = vpop.f32.mrf.mxu0
      %845 = vmatprep.mubr.f32.mxu0 %v593
      %846 = vmatmul.mubr.f32.gmra.mxu0 %v592
      %v847 = vpop.f32.mrf.mxu0
      %v848 = vadd.f32 %v743, %v847
      %v849 = vpop.f32.mrf.mxu0
      %850 = vmatprep.mubr.f32.mxu0 %v597
      %851 = vmatmul.mubr.f32.gmra.mxu0 %v596
      %v852 = vpop.f32.mrf.mxu0
      %v853 = vadd.f32 %v748, %v852
      %v854 = vpop.f32.mrf.mxu0
      %855 = vdwg.mxu0
      %v856 = vlaneseq
      %v857 = vand.u32 %v856, 127
      %v858 = vcvt.s32.f32 %v857
      %v859 = vadd.f32 %v858, 0.5
      %v860 = vmul.f32 %v859, 0.16666667
      %v861 = vfloor.f32 %v860
      %v862 = vmul.f32 %v861, 6.0
      %v863 = vsub.f32 %v858, %v862
      %vm864 = vcmp.lt.f32.partialorder %v863, 3.0
      %vm865 = vcmp.lt.f32.partialorder %v861, 3.0
      %vm866 = vmand %vm864, %vm865
      %v867 = vsel %vm866, 1, 0
      %v868 = vcvt.s32.f32 %v867
      %v869 = vmul.f32 %v818, %v868
      %v870 = vmul.f32 %v823, %v868
      %v871 = vmul.f32 %v828, %v868
      %v872 = vmul.f32 %v833, %v868
      %v873 = vmul.f32 %v838, %v868
      %v874 = vmul.f32 %v843, %v868
      %v875 = vmul.f32 %v848, %v868
      %v876 = vmul.f32 %v853, %v868
      %877 = vadd.xlane.f32.xlu0 %v869
      %v878 = vpop.xlane.xlu0 %877
      %879 = vadd.xlane.f32.xlu0 %v870
      %v880 = vpop.xlane.xlu0 %879
      %881 = vadd.xlane.f32.xlu0 %v871
      %v882 = vpop.xlane.xlu0 %881
      %883 = vadd.xlane.f32.xlu0 %v872
      %v884 = vpop.xlane.xlu0 %883
      %885 = vadd.xlane.f32.xlu0 %v873
      %v886 = vpop.xlane.xlu0 %885
      %887 = vadd.xlane.f32.xlu0 %v874
      %v888 = vpop.xlane.xlu0 %887
      %889 = vadd.xlane.f32.xlu0 %v875
      %v890 = vpop.xlane.xlu0 %889
      %891 = vadd.xlane.f32.xlu0 %v876
      %v892 = vpop.xlane.xlu0 %891
      %v893 = vmul.f32 %v878, 0.11111111
      %v894 = vmul.f32 %v880, 0.11111111
      %v895 = vmul.f32 %v882, 0.11111111
      %v896 = vmul.f32 %v884, 0.11111111
      %v897 = vmul.f32 %v886, 0.11111111
      %v898 = vmul.f32 %v888, 0.11111111
      %v899 = vmul.f32 %v890, 0.11111111
      %v900 = vmul.f32 %v892, 0.11111111
      %v901 = vmul.f32 %v869, %v818
      %v902 = vmul.f32 %v870, %v823
      %v903 = vmul.f32 %v871, %v828
      %v904 = vmul.f32 %v872, %v833
      %v905 = vmul.f32 %v873, %v838
      %v906 = vmul.f32 %v874, %v843
      %v907 = vmul.f32 %v875, %v848
      %v908 = vmul.f32 %v876, %v853
      %909 = vadd.xlane.f32.xlu0 %v901
      %v910 = vpop.xlane.xlu0 %909
      %911 = vadd.xlane.f32.xlu0 %v902
      %v912 = vpop.xlane.xlu0 %911
      %913 = vadd.xlane.f32.xlu0 %v903
      %v914 = vpop.xlane.xlu0 %913
      %915 = vadd.xlane.f32.xlu0 %v904
      %v916 = vpop.xlane.xlu0 %915
      %917 = vadd.xlane.f32.xlu0 %v905
      %v918 = vpop.xlane.xlu0 %917
      %919 = vadd.xlane.f32.xlu0 %v906
      %v920 = vpop.xlane.xlu0 %919
      %921 = vadd.xlane.f32.xlu0 %v907
      %v922 = vpop.xlane.xlu0 %921
      %923 = vadd.xlane.f32.xlu0 %v908
      %v924 = vpop.xlane.xlu0 %923
      %v925 = vmul.f32 %v910, 0.11111111
      %v926 = vmul.f32 %v912, 0.11111111
      %v927 = vmul.f32 %v914, 0.11111111
      %v928 = vmul.f32 %v916, 0.11111111
      %v929 = vmul.f32 %v918, 0.11111111
      %v930 = vmul.f32 %v920, 0.11111111
      %v931 = vmul.f32 %v922, 0.11111111
      %v932 = vmul.f32 %v924, 0.11111111
      %v933 = vmul.f32 %v893, %v893
      %v934 = vmul.f32 %v894, %v894
      %v935 = vmul.f32 %v895, %v895
      %v936 = vmul.f32 %v896, %v896
      %v937 = vmul.f32 %v897, %v897
      %v938 = vmul.f32 %v898, %v898
      %v939 = vmul.f32 %v899, %v899
      %v940 = vmul.f32 %v900, %v900
      %v941 = vsub.f32 %v925, %v933
      %v942 = vsub.f32 %v926, %v934
      %v943 = vsub.f32 %v927, %v935
      %v944 = vsub.f32 %v928, %v936
      %v945 = vsub.f32 %v929, %v937
      %v946 = vsub.f32 %v930, %v938
      %v947 = vsub.f32 %v931, %v939
      %v948 = vsub.f32 %v932, %v940
      %v949 = vmax.f32 %v941, 0.0
      %v950 = vmax.f32 %v942, 0.0
      %v951 = vmax.f32 %v943, 0.0
      %v952 = vmax.f32 %v944, 0.0
      %v953 = vmax.f32 %v945, 0.0
      %v954 = vmax.f32 %v946, 0.0
      %v955 = vmax.f32 %v947, 0.0
      %v956 = vmax.f32 %v948, 0.0
      %v957 = vsub.f32 %v818, %v893
      %v958 = vsub.f32 %v823, %v894
      %v959 = vsub.f32 %v828, %v895
      %v960 = vsub.f32 %v833, %v896
      %v961 = vsub.f32 %v838, %v897
      %v962 = vsub.f32 %v843, %v898
      %v963 = vsub.f32 %v848, %v899
      %v964 = vsub.f32 %v853, %v900
      %v965 = vadd.f32 %v949, 1e-05
      %v966 = vadd.f32 %v950, 1e-05
      %v967 = vadd.f32 %v951, 1e-05
      %v968 = vadd.f32 %v952, 1e-05
      %v969 = vadd.f32 %v953, 1e-05
      %v970 = vadd.f32 %v954, 1e-05
      %v971 = vadd.f32 %v955, 1e-05
      %v972 = vadd.f32 %v956, 1e-05
      %v973 = vrsqrt.pop %v965
      %v974 = vrsqrt.pop %v966
      %v975 = vrsqrt.pop %v967
      %v976 = vrsqrt.pop %v968
      %v977 = vrsqrt.pop %v969
      %v978 = vrsqrt.pop %v970
      %v979 = vrsqrt.pop %v971
      %v980 = vrsqrt.pop %v972
      %v981 = vmul.f32 %v957, %v973
      %v982 = vmul.f32 %v958, %v974
      %v983 = vmul.f32 %v959, %v975
      %v984 = vmul.f32 %v960, %v976
      %v985 = vmul.f32 %v961, %v977
      %v986 = vmul.f32 %v962, %v978
      %v987 = vmul.f32 %v963, %v979
      %v988 = vmul.f32 %v964, %v980
      %vm989 = vcmp.gt.f32.partialorder %v981, 0.0
      %vm990 = vcmp.gt.f32.partialorder %v982, 0.0
      %vm991 = vcmp.gt.f32.partialorder %v983, 0.0
      %vm992 = vcmp.gt.f32.partialorder %v984, 0.0
      %vm993 = vcmp.gt.f32.partialorder %v985, 0.0
      %vm994 = vcmp.gt.f32.partialorder %v986, 0.0
      %vm995 = vcmp.gt.f32.partialorder %v987, 0.0
      %vm996 = vcmp.gt.f32.partialorder %v988, 0.0
      %v997 = vmul.f32 %v981, 0.2
      %v998 = vmul.f32 %v982, 0.2
      %v999 = vmul.f32 %v983, 0.2
      %v1000 = vmul.f32 %v984, 0.2
      %v1001 = vmul.f32 %v985, 0.2
      %v1002 = vmul.f32 %v986, 0.2
      %v1003 = vmul.f32 %v987, 0.2
      %v1004 = vmul.f32 %v988, 0.2
      %v1005 = vsel %vm989, %v981, %v997
      %v1006 = vsel %vm990, %v982, %v998
      %v1007 = vsel %vm991, %v983, %v999
      %v1008 = vsel %vm992, %v984, %v1000
      %v1009 = vsel %vm993, %v985, %v1001
      %v1010 = vsel %vm994, %v986, %v1002
      %v1011 = vsel %vm995, %v987, %v1003
      %v1012 = vsel %vm996, %v988, %v1004
      %1013 = vst [vmem:[%s170] sm:$0xff] %v1005
      %1014 = vst [vmem:[%s170 + $0x8] sm:$0xff] %v1006
      %1015 = vst [vmem:[%s170 + $0x10] sm:$0xff] %v1007
      %1016 = vst [vmem:[%s170 + $0x18] sm:$0xff] %v1008
      %1017 = vst [vmem:[%s170 + $0x20] sm:$0xff] %v1009
      %1018 = vst [vmem:[%s170 + $0x28] sm:$0xff] %v1010
      %1019 = vst [vmem:[%s170 + $0x30] sm:$0xff] %v1011
      %1020 = vst [vmem:[%s170 + $0x38] sm:$0xff] %v1012
      %p1021 = scmp.lt.s32.totalorder %s14, 1
      %s1022 = scalar_select %p1021, %s14, 1
      %s1023 = smul.addr %s1022, 8
      %s1024 = smul.addr %s1023, 8
      %s1025 = scalar_lea.vmem %s3, %s1024
      // Predicated region
      $region33: #{nlayer_discriminator_forward.8} parent=31 // pred_check
        %p1026 = pneg %p100
      $region34: #{nlayer_discriminator_forward.8} parent=31 // pred_check_branch
        %1028 = sbr.rel (%p1026) target = $region36
      $region35: #{nlayer_discriminator_forward.8} parent=31 // pred_region
        _
      $region36: #{nlayer_discriminator_forward.8} parent=31 // pred_fallthru
        _
    $region32: #{nlayer_discriminator_forward.8} parent=5 // pred_fallthru
      _
    %p1029 = scmp.le.s32.totalorder 2, %s9
    // Predicated region
    $region37: #{nlayer_discriminator_forward.8} parent=5 // pred_check
      %p1030 = pneg %p1029
    $region38: #{nlayer_discriminator_forward.8} parent=5 // pred_check_branch
      %1032 = sbr.rel (%p1030) target = $region40
    $region39: #{nlayer_discriminator_forward.8} parent=5 // pred_region
      %s1033 = ssub.s32 %s9, 2
      // Predicated region
      $region41: #{nlayer_discriminator_forward.8} parent=39 // pred_check
        %p1034 = pneg %p106
      $region42: #{nlayer_discriminator_forward.8} parent=39 // pred_check_branch
        %1036 = sbr.rel (%p1034) target = $region44
      $region43: #{nlayer_discriminator_forward.8} parent=39 // pred_region
        %p1037 = scmp.lt.s32.totalorder %s15, 1
        %s1038 = scalar_select %p1037, %s15, 1
        %s1039 = smul.addr %s1038, 8
        %s1040 = smul.addr %s1039, 8
        %s1041 = scalar_lea.vmem %s3, %s1040
      $region44: #{nlayer_discriminator_forward.8} parent=39 // pred_fallthru
        _
    $region40: #{nlayer_discriminator_forward.8} parent=5 // pred_fallthru
      _
  $region6: #{nlayer_discriminator_forward.8} parent=0 // loop_footer
    %s13 = sadd.s32 1, %s9
  $region7: #{nlayer_discriminator_forward.8} parent=0 // loop_footer_branch
    %8 = sbr.rel target = $region3
  $region8: #{nlayer_discriminator_forward.8} parent=0 // loop_exit
    _

// kernel: nlayer_discriminator_forward.9
$region0: #{nlayer_discriminator_forward.9}
  #allocation0 [shape = 'u32[]', space=smem, size = 0x4, offset = 0x4, fixed_abs, tag = 'smem constant byte address 0x4 - core index']
  #allocation1 [shape = 'u32[144,128]{1,0:T(1,128)}', space=vmem, size = 0x12000, scoped, tag = 'internal scratch']
  #allocation2 [shape = 'f32[1,1]{1,0:T(1,128)S(1)}', space=vmem, size = 0x200, scoped, tag = 'scoped memory for nlayer_discriminator_forward.9']
  %s0 = inlined_call_operand.vmem [shape: f32[2,64,256], index: 0, kind: input, shape index: {}]
  %s1 = inlined_call_operand.vmem [shape: f32[1,1024], index: 1, kind: input, shape index: {}]
  %s2 = inlined_call_operand.<no memory space> [shape: f32[1,1], index: 2, kind: input, shape index: {}]
  %s3 = inlined_call_operand.vmem [shape: f32[2,1,128], index: 3, kind: output, shape index: {}]
  %s4 = sld [smem:[#allocation0]]
  $region45: #{nlayer_discriminator_forward.9} parent=0
    _
  %s6 = ssub.s32 1, %s4
  %s7 = scalar_select 0, %s6, %s4
  %v8 = vstv %s2
  %9 = vst [vmem:[#allocation2] sm:$0x1] %v8
  loop: start=0, step=1, limit=4
  $region2: #{nlayer_discriminator_forward.9} parent=0 // loop_pre_header
    _
  $region3: #{nlayer_discriminator_forward.9} parent=0 // loop_header
    %s11 = sphi 0, %s15
    %p12 = scmp.ge.s32.totalorder %s11, 4
    %s21 = sphi 0, %s23
    %s24 = sphi 0, %s21
    %s25 = sphi 0, %s24
    %s41 = sphi 0, %s25
    %s45 = sphi 0, %s45
    %s47 = sphi 0, %s45
    %s48 = sphi 0, %s47
    %s62 = sphi 0, %s48
    %s66 = sphi 0, %s66
    %s68 = sphi 0, %s66
    %s69 = sphi 0, %s68
    %s83 = sphi 0, %s69
    %s89 = sphi 0, %s91
    %s92 = sphi 0, %s89
    %s93 = sphi 0, %s92
    %s109 = sphi 0, %s93
  $region4: #{nlayer_discriminator_forward.9} parent=0 // loop_header_branch
    %14 = sbr.rel (%p12) target = $region8
  $region5: #{nlayer_discriminator_forward.9} parent=0 // loop_body
    %s16 = ssub.s32 %s11, 1
    %s17 = ssub.s32 %s11, 2
    %s18 = sadd.s32 %s11, 1
    %s19 = ssub.s32 %s11, %s18
    %p20 = scmp.eq.s32.totalorder %s19, 0
    %s22 = sadd.s32 %s21, 1
    %s23 = scalar_select %p20, %s21, %s22
    %p26 = pneg %p20
    %p27 = scmp.eq.s32.totalorder %s11, 1
    %p28 = por %p26, %p27
    %p29 = scmp.ne.s32.totalorder %s21, %s24
    %p30 = scmp.eq.s32.totalorder %s11, 0
    %p31 = por %p29, %p30
    %p32 = scmp.ne.s32.totalorder %s21, %s24
    %p33 = scmp.eq.s32.totalorder %s16, 1
    %p34 = por %p32, %p33
    %p35 = scmp.ne.s32.totalorder %s24, %s25
    %p36 = scmp.eq.s32.totalorder %s16, 0
    %p37 = por %p35, %p36
    %p38 = scmp.ne.s32.totalorder %s24, %s25
    %p39 = scmp.eq.s32.totalorder %s17, 1
    %p40 = por %p38, %p39
    %p42 = scmp.ne.s32.totalorder %s25, %s41
    %p43 = scmp.eq.s32.totalorder %s17, 0
    %p44 = por %p42, %p43
    %s46 = sadd.s32 %s45, 1
    %p49 = scmp.eq.s32.totalorder %s11, 1
    %p50 = scmp.ne.s32.totalorder %s45, %s47
    %p51 = scmp.eq.s32.totalorder %s11, 0
    %p52 = por %p50, %p51
    %p53 = scmp.ne.s32.totalorder %s45, %s47
    %p54 = scmp.eq.s32.totalorder %s16, 1
    %p55 = por %p53, %p54
    %p56 = scmp.ne.s32.totalorder %s47, %s48
    %p57 = scmp.eq.s32.totalorder %s16, 0
    %p58 = por %p56, %p57
    %p59 = scmp.ne.s32.totalorder %s47, %s48
    %p60 = scmp.eq.s32.totalorder %s17, 1
    %p61 = por %p59, %p60
    %p63 = scmp.ne.s32.totalorder %s48, %s62
    %p64 = scmp.eq.s32.totalorder %s17, 0
    %p65 = por %p63, %p64
    %s67 = sadd.s32 %s66, 1
    %p70 = scmp.eq.s32.totalorder %s11, 1
    %p71 = scmp.ne.s32.totalorder %s66, %s68
    %p72 = scmp.eq.s32.totalorder %s11, 0
    %p73 = por %p71, %p72
    %p74 = scmp.ne.s32.totalorder %s66, %s68
    %p75 = scmp.eq.s32.totalorder %s16, 1
    %p76 = por %p74, %p75
    %p77 = scmp.ne.s32.totalorder %s68, %s69
    %p78 = scmp.eq.s32.totalorder %s16, 0
    %p79 = por %p77, %p78
    %p80 = scmp.ne.s32.totalorder %s68, %s69
    %p81 = scmp.eq.s32.totalorder %s17, 1
    %p82 = por %p80, %p81
    %p84 = scmp.ne.s32.totalorder %s69, %s83
    %p85 = scmp.eq.s32.totalorder %s17, 0
    %p86 = por %p84, %p85
    %s87 = ssub.s32 %s11, %s18
    %p88 = scmp.eq.s32.totalorder %s87, 0
    %s90 = sadd.s32 %s89, 1
    %s91 = scalar_select %p88, %s89, %s90
    %p94 = pneg %p88
    %p95 = scmp.eq.s32.totalorder %s11, 1
    %p96 = por %p94, %p95
    %p97 = scmp.ne.s32.totalorder %s89, %s92
    %p98 = scmp.eq.s32.totalorder %s11, 0
    %p99 = por %p97, %p98
    %p100 = scmp.ne.s32.totalorder %s89, %s92
    %p101 = scmp.eq.s32.totalorder %s16, 1
    %p102 = por %p100, %p101
    %p103 = scmp.ne.s32.totalorder %s92, %s93
    %p104 = scmp.eq.s32.totalorder %s16, 0
    %p105 = por %p103, %p104
    %p106 = scmp.ne.s32.totalorder %s92, %s93
    %p107 = scmp.eq.s32.totalorder %s17, 1
    %p108 = por %p106, %p107
    %p110 = scmp.ne.s32.totalorder %s93, %s109
    %p111 = scmp.eq.s32.totalorder %s17, 0
    %p112 = por %p110, %p111
    %p113 = scmp.le.s32.totalorder 1, %s11
    %p114 = scmp.lt.s32.totalorder %s11, 3
    %p115 = pnand %p113, %p114
    %p116 = pneg %p115
    // Predicated region
    $region9: #{nlayer_discriminator_forward.9} parent=5 // pred_check
      _
    $region10: #{nlayer_discriminator_forward.9} parent=5 // pred_check_branch
      %118 = sbr.rel (%p115) target = $region12
    $region11: #{nlayer_discriminator_forward.9} parent=5 // pred_region
      %s119 = ssub.s32 %s11, 1
      // Predicated region
      $region13: #{nlayer_discriminator_forward.9} parent=11 // pred_check
        %p120 = pneg %p58
      $region14: #{nlayer_discriminator_forward.9} parent=11 // pred_check_branch
        %122 = sbr.rel (%p120) target = $region16
      $region15: #{nlayer_discriminator_forward.9} parent=11 // pred_region
        _
      $region16: #{nlayer_discriminator_forward.9} parent=11 // pred_fallthru
        _
      // Predicated region
      $region17: #{nlayer_discriminator_forward.9} parent=11 // pred_check
        %p123 = pneg %p79
      $region18: #{nlayer_discriminator_forward.9} parent=11 // pred_check_branch
        %125 = sbr.rel (%p123) target = $region20
      $region19: #{nlayer_discriminator_forward.9} parent=11 // pred_region
        _
      $region20: #{nlayer_discriminator_forward.9} parent=11 // pred_fallthru
        _
    $region12: #{nlayer_discriminator_forward.9} parent=5 // pred_fallthru
      _
    %p126 = scmp.lt.s32.totalorder %s11, 2
    // Predicated region
    $region21: #{nlayer_discriminator_forward.9} parent=5 // pred_check
      %p127 = pneg %p126
    $region22: #{nlayer_discriminator_forward.9} parent=5 // pred_check_branch
      %129 = sbr.rel (%p127) target = $region24
    $region23: #{nlayer_discriminator_forward.9} parent=5 // pred_region
      // Predicated region
      $region25: #{nlayer_discriminator_forward.9} parent=23 // pred_check
        %p130 = pneg %p31
      $region26: #{nlayer_discriminator_forward.9} parent=23 // pred_check_branch
        %132 = sbr.rel (%p130) target = $region28
      $region27: #{nlayer_discriminator_forward.9} parent=23 // pred_region
        %p133 = scmp.lt.s32.totalorder %s11, 1
        %s134 = scalar_select %p133, %s11, 1
        %s135 = smul.addr %s134, 16
        %s136 = smul.addr %s135, 8
        %s137 = scalar_lea.vmem %s0, %s136
      $region28: #{nlayer_discriminator_forward.9} parent=23 // pred_fallthru
        _
    $region24: #{nlayer_discriminator_forward.9} parent=5 // pred_fallthru
      _
    %p138 = scmp.le.s32.totalorder 1, %s11
    %p139 = scmp.lt.s32.totalorder %s11, 3
    %p140 = pnand %p138, %p139
    %p141 = pneg %p140
    // Predicated region
    $region29: #{nlayer_discriminator_forward.9} parent=5 // pred_check
      _
    $region30: #{nlayer_discriminator_forward.9} parent=5 // pred_check_branch
      %143 = sbr.rel (%p140) target = $region32
    $region31: #{nlayer_discriminator_forward.9} parent=5 // pred_region
      %s144 = ssub.s32 %s11, 1
      %p145 = scmp.lt.s32.totalorder %s16, 1
      %s146 = scalar_select %p145, %s16, 1
      %s147 = smul.addr %s146, 16
      %s148 = smul.addr %s147, 8
      %s149 = scalar_lea.vmem %s0, %s148
      %p150 = pneg %p37
      %p151 = pneg %p34
      %p152 = pneg %p58
      %p153 = pneg %p55
      %p154 = pneg %p79
      %p155 = pneg %p76
      %p156 = pneg %p105
      %p157 = pneg %p102
      %p158 = scmp.lt.s32.totalorder %s16, 1
      %s159 = scalar_select %p158, %s16, 1
      %s160 = scalar_lea.vmem %s3, %s159
      %p161 = scmp.lt.s32.totalorder %s16, 1
      %s162 = scalar_select %p161, %s16, 1
      %s163 = smul.addr %s162, 16
      %s164 = smul.addr %s163, 8
      %s165 = scalar_lea.vmem %s0, %s164
      %p166 = scmp.lt.s32.totalorder %s16, 1
      %s167 = scalar_select %p166, %s16, 1
      %s168 = scalar_lea.vmem %s3, %s167
      %v169 = vld [vmem:[%s165] sm:$0xff]
      %v170 = vld [vmem:[%s165 + $0x10] sm:$0xff]
      %v171 = vld [vmem:[%s165 + $0x20] sm:$0xff]
      %v172 = vld [vmem:[%s165 + $0x30] sm:$0xff]
      %v173 = vld [vmem:[%s165 + $0x40] sm:$0xff]
      %v174 = vld [vmem:[%s165 + $0x50] sm:$0xff]
      %v175 = vld [vmem:[%s165 + $0x60] sm:$0xff]
      %v176 = vld [vmem:[%s165 + $0x70] sm:$0xff]
      %v177 = vld [vmem:[%s165] sm:$0xff]
      %v178 = vld [vmem:[%s165 + $0x8] sm:$0xff]
      %v179 = vld [vmem:[%s165 + $0x10] sm:$0xff]
      %v180 = vld [vmem:[%s165 + $0x18] sm:$0xff]
      %v181 = vld [vmem:[%s165 + $0x20] sm:$0xff]
      %v182 = vld [vmem:[%s165 + $0x28] sm:$0xff]
      %v183 = vld [vmem:[%s165 + $0x30] sm:$0xff]
      %v184 = vld [vmem:[%s165 + $0x38] sm:$0xff]
      %v185 = vld [vmem:[%s165 + $0x40] sm:$0xff]
      %v186 = vld [vmem:[%s165 + $0x48] sm:$0xff]
      %v187 = vld [vmem:[%s165 + $0x50] sm:$0xff]
      %v188 = vld [vmem:[%s165 + $0x58] sm:$0xff]
      %v189 = vld [vmem:[%s165 + $0x60] sm:$0xff]
      %v190 = vld [vmem:[%s165 + $0x68] sm:$0xff]
      %v191 = vld [vmem:[%s165 + $0x70] sm:$0xff]
      %v192 = vld [vmem:[%s165 + $0x78] sm:$0xff]
      %209 = vrot.lane.b32.xlu0 %v177, 127
      %v210 = vpop.permute.xlu0 %209
      %211 = vrot.lane.b32.xlu0 %v178, 127
      %v212 = vpop.permute.xlu0 %211
      %213 = vrot.lane.b32.xlu0 %v179, 127
      %v214 = vpop.permute.xlu0 %213
      %215 = vrot.lane.b32.xlu0 %v180, 127
      %v216 = vpop.permute.xlu0 %215
      %217 = vrot.lane.b32.xlu0 %v181, 127
      %v218 = vpop.permute.xlu0 %217
      %219 = vrot.lane.b32.xlu0 %v182, 127
      %v220 = vpop.permute.xlu0 %219
      %221 = vrot.lane.b32.xlu0 %v183, 127
      %v222 = vpop.permute.xlu0 %221
      %223 = vrot.lane.b32.xlu0 %v184, 127
      %v224 = vpop.permute.xlu0 %223
      %225 = vrot.lane.b32.xlu0 %v185, 127
      %v226 = vpop.permute.xlu0 %225
      %227 = vrot.lane.b32.xlu0 %v186, 127
      %v228 = vpop.permute.xlu0 %227
      %229 = vrot.lane.b32.xlu0 %v187, 127
      %v230 = vpop.permute.xlu0 %229
      %231 = vrot.lane.b32.xlu0 %v188, 127
      %v232 = vpop.permute.xlu0 %231
      %233 = vrot.lane.b32.xlu0 %v189, 127
      %v234 = vpop.permute.xlu0 %233
      %235 = vrot.lane.b32.xlu0 %v190, 127
      %v236 = vpop.permute.xlu0 %235
      %237 = vrot.lane.b32.xlu0 %v191, 127
      %v238 = vpop.permute.xlu0 %237
      %239 = vrot.lane.b32.xlu0 %v192, 127
      %v240 = vpop.permute.xlu0 %239
      %vm241 = vcmask 1039360
      %v242 = vsel %vm241, %v210, %v212
      %v243 = vsel %vm241, %v214, %v216
      %v244 = vsel %vm241, %v218, %v220
      %v245 = vsel %vm241, %v222, %v224
      %v246 = vsel %vm241, %v226, %v228
      %v247 = vsel %vm241, %v230, %v232
      %v248 = vsel %vm241, %v234, %v236
      %v249 = vsel %vm241, %v238, %v240
      %258 = vrot.lane.b32.xlu0 %v177, 126
      %v259 = vpop.permute.xlu0 %258
      %260 = vrot.lane.b32.xlu0 %v178, 126
      %v261 = vpop.permute.xlu0 %260
      %262 = vrot.lane.b32.xlu0 %v179, 126
      %v263 = vpop.permute.xlu0 %262
      %264 = vrot.lane.b32.xlu0 %v180, 126
      %v265 = vpop.permute.xlu0 %264
      %266 = vrot.lane.b32.xlu0 %v181, 126
      %v267 = vpop.permute.xlu0 %266
      %268 = vrot.lane.b32.xlu0 %v182, 126
      %v269 = vpop.permute.xlu0 %268
      %270 = vrot.lane.b32.xlu0 %v183, 126
      %v271 = vpop.permute.xlu0 %270
      %272 = vrot.lane.b32.xlu0 %v184, 126
      %v273 = vpop.permute.xlu0 %272
      %274 = vrot.lane.b32.xlu0 %v185, 126
      %v275 = vpop.permute.xlu0 %274
      %276 = vrot.lane.b32.xlu0 %v186, 126
      %v277 = vpop.permute.xlu0 %276
      %278 = vrot.lane.b32.xlu0 %v187, 126
      %v279 = vpop.permute.xlu0 %278
      %280 = vrot.lane.b32.xlu0 %v188, 126
      %v281 = vpop.permute.xlu0 %280
      %282 = vrot.lane.b32.xlu0 %v189, 126
      %v283 = vpop.permute.xlu0 %282
      %284 = vrot.lane.b32.xlu0 %v190, 126
      %v285 = vpop.permute.xlu0 %284
      %286 = vrot.lane.b32.xlu0 %v191, 126
      %v287 = vpop.permute.xlu0 %286
      %288 = vrot.lane.b32.xlu0 %v192, 126
      %v289 = vpop.permute.xlu0 %288
      %vm290 = vcmask 1031168
      %v291 = vsel %vm290, %v259, %v261
      %v292 = vsel %vm290, %v263, %v265
      %v293 = vsel %vm290, %v267, %v269
      %v294 = vsel %vm290, %v271, %v273
      %v295 = vsel %vm290, %v275, %v277
      %v296 = vsel %vm290, %v279, %v281
      %v297 = vsel %vm290, %v283, %v285
      %v298 = vsel %vm290, %v287, %v289
      %307 = vrot.lane.b32.xlu0 %v177, 125
      %v308 = vpop.permute.xlu0 %307
      %309 = vrot.lane.b32.xlu0 %v178, 125
      %v310 = vpop.permute.xlu0 %309
      %311 = vrot.lane.b32.xlu0 %v179, 125
      %v312 = vpop.permute.xlu0 %311
      %313 = vrot.lane.b32.xlu0 %v180, 125
      %v314 = vpop.permute.xlu0 %313
      %315 = vrot.lane.b32.xlu0 %v181, 125
      %v316 = vpop.permute.xlu0 %315
      %317 = vrot.lane.b32.xlu0 %v182, 125
      %v318 = vpop.permute.xlu0 %317
      %319 = vrot.lane.b32.xlu0 %v183, 125
      %v320 = vpop.permute.xlu0 %319
      %321 = vrot.lane.b32.xlu0 %v184, 125
      %v322 = vpop.permute.xlu0 %321
      %323 = vrot.lane.b32.xlu0 %v185, 125
      %v324 = vpop.permute.xlu0 %323
      %325 = vrot.lane.b32.xlu0 %v186, 125
      %v326 = vpop.permute.xlu0 %325
      %327 = vrot.lane.b32.xlu0 %v187, 125
      %v328 = vpop.permute.xlu0 %327
      %329 = vrot.lane.b32.xlu0 %v188, 125
      %v330 = vpop.permute.xlu0 %329
      %331 = vrot.lane.b32.xlu0 %v189, 125
      %v332 = vpop.permute.xlu0 %331
      %333 = vrot.lane.b32.xlu0 %v190, 125
      %v334 = vpop.permute.xlu0 %333
      %335 = vrot.lane.b32.xlu0 %v191, 125
      %v336 = vpop.permute.xlu0 %335
      %337 = vrot.lane.b32.xlu0 %v192, 125
      %v338 = vpop.permute.xlu0 %337
      %vm339 = vcmask 1022976
      %v340 = vsel %vm339, %v308, %v310
      %v341 = vsel %vm339, %v312, %v314
      %v342 = vsel %vm339, %v316, %v318
      %v343 = vsel %vm339, %v320, %v322
      %v344 = vsel %vm339, %v324, %v326
      %v345 = vsel %vm339, %v328, %v330
      %v346 = vsel %vm339, %v332, %v334
      %v347 = vsel %vm339, %v336, %v338
      %356 = vrot.lane.b32.xlu0 %v177, 123
      %v357 = vpop.permute.xlu0 %356
      %358 = vrot.lane.b32.xlu0 %v178, 123
      %v359 = vpop.permute.xlu0 %358
      %360 = vrot.lane.b32.xlu0 %v179, 123
      %v361 = vpop.permute.xlu0 %360
      %362 = vrot.lane.b32.xlu0 %v180, 123
      %v363 = vpop.permute.xlu0 %362
      %364 = vrot.lane.b32.xlu0 %v181, 123
      %v365 = vpop.permute.xlu0 %364
      %366 = vrot.lane.b32.xlu0 %v182, 123
      %v367 = vpop.permute.xlu0 %366
      %368 = vrot.lane.b32.xlu0 %v183, 123
      %v369 = vpop.permute.xlu0 %368
      %370 = vrot.lane.b32.xlu0 %v184, 123
      %v371 = vpop.permute.xlu0 %370
      %372 = vrot.lane.b32.xlu0 %v185, 123
      %v373 = vpop.permute.xlu0 %372
      %374 = vrot.lane.b32.xlu0 %v186, 123
      %v375 = vpop.permute.xlu0 %374
      %376 = vrot.lane.b32.xlu0 %v187, 123
      %v377 = vpop.permute.xlu0 %376
      %378 = vrot.lane.b32.xlu0 %v188, 123
      %v379 = vpop.permute.xlu0 %378
      %380 = vrot.lane.b32.xlu0 %v189, 123
      %v381 = vpop.permute.xlu0 %380
      %382 = vrot.lane.b32.xlu0 %v190, 123
      %v383 = vpop.permute.xlu0 %382
      %384 = vrot.lane.b32.xlu0 %v191, 123
      %v385 = vpop.permute.xlu0 %384
      %386 = vrot.lane.b32.xlu0 %v192, 123
      %v387 = vpop.permute.xlu0 %386
      %vm388 = vcmask 1006592
      %v389 = vsel %vm388, %v357, %v359
      %v390 = vsel %vm388, %v361, %v363
      %v391 = vsel %vm388, %v365, %v367
      %v392 = vsel %vm388, %v369, %v371
      %v393 = vsel %vm388, %v373, %v375
      %v394 = vsel %vm388, %v377, %v379
      %v395 = vsel %vm388, %v381, %v383
      %v396 = vsel %vm388, %v385, %v387
      %405 = vrot.lane.b32.xlu0 %v177, 122
      %v406 = vpop.permute.xlu0 %405
      %407 = vrot.lane.b32.xlu0 %v178, 122
      %v408 = vpop.permute.xlu0 %407
      %409 = vrot.lane.b32.xlu0 %v179, 122
      %v410 = vpop.permute.xlu0 %409
      %411 = vrot.lane.b32.xlu0 %v180, 122
      %v412 = vpop.permute.xlu0 %411
      %413 = vrot.lane.b32.xlu0 %v181, 122
      %v414 = vpop.permute.xlu0 %413
      %415 = vrot.lane.b32.xlu0 %v182, 122
      %v416 = vpop.permute.xlu0 %415
      %417 = vrot.lane.b32.xlu0 %v183, 122
      %v418 = vpop.permute.xlu0 %417
      %419 = vrot.lane.b32.xlu0 %v184, 122
      %v420 = vpop.permute.xlu0 %419
      %421 = vrot.lane.b32.xlu0 %v185, 122
      %v422 = vpop.permute.xlu0 %421
      %423 = vrot.lane.b32.xlu0 %v186, 122
      %v424 = vpop.permute.xlu0 %423
      %425 = vrot.lane.b32.xlu0 %v187, 122
      %v426 = vpop.permute.xlu0 %425
      %427 = vrot.lane.b32.xlu0 %v188, 122
      %v428 = vpop.permute.xlu0 %427
      %429 = vrot.lane.b32.xlu0 %v189, 122
      %v430 = vpop.permute.xlu0 %429
      %431 = vrot.lane.b32.xlu0 %v190, 122
      %v432 = vpop.permute.xlu0 %431
      %433 = vrot.lane.b32.xlu0 %v191, 122
      %v434 = vpop.permute.xlu0 %433
      %435 = vrot.lane.b32.xlu0 %v192, 122
      %v436 = vpop.permute.xlu0 %435
      %vm437 = vcmask 998400
      %v438 = vsel %vm437, %v406, %v408
      %v439 = vsel %vm437, %v410, %v412
      %v440 = vsel %vm437, %v414, %v416
      %v441 = vsel %vm437, %v418, %v420
      %v442 = vsel %vm437, %v422, %v424
      %v443 = vsel %vm437, %v426, %v428
      %v444 = vsel %vm437, %v430, %v432
      %v445 = vsel %vm437, %v434, %v436
      %454 = vrot.lane.b32.xlu0 %v177, 121
      %v455 = vpop.permute.xlu0 %454
      %456 = vrot.lane.b32.xlu0 %v178, 121
      %v457 = vpop.permute.xlu0 %456
      %458 = vrot.lane.b32.xlu0 %v179, 121
      %v459 = vpop.permute.xlu0 %458
      %460 = vrot.lane.b32.xlu0 %v180, 121
      %v461 = vpop.permute.xlu0 %460
      %462 = vrot.lane.b32.xlu0 %v181, 121
      %v463 = vpop.permute.xlu0 %462
      %464 = vrot.lane.b32.xlu0 %v182, 121
      %v465 = vpop.permute.xlu0 %464
      %466 = vrot.lane.b32.xlu0 %v183, 121
      %v467 = vpop.permute.xlu0 %466
      %468 = vrot.lane.b32.xlu0 %v184, 121
      %v469 = vpop.permute.xlu0 %468
      %470 = vrot.lane.b32.xlu0 %v185, 121
      %v471 = vpop.permute.xlu0 %470
      %472 = vrot.lane.b32.xlu0 %v186, 121
      %v473 = vpop.permute.xlu0 %472
      %474 = vrot.lane.b32.xlu0 %v187, 121
      %v475 = vpop.permute.xlu0 %474
      %476 = vrot.lane.b32.xlu0 %v188, 121
      %v477 = vpop.permute.xlu0 %476
      %478 = vrot.lane.b32.xlu0 %v189, 121
      %v479 = vpop.permute.xlu0 %478
      %480 = vrot.lane.b32.xlu0 %v190, 121
      %v481 = vpop.permute.xlu0 %480
      %482 = vrot.lane.b32.xlu0 %v191, 121
      %v483 = vpop.permute.xlu0 %482
      %484 = vrot.lane.b32.xlu0 %v192, 121
      %v485 = vpop.permute.xlu0 %484
      %vm486 = vcmask 990208
      %v487 = vsel %vm486, %v455, %v457
      %v488 = vsel %vm486, %v459, %v461
      %v489 = vsel %vm486, %v463, %v465
      %v490 = vsel %vm486, %v467, %v469
      %v491 = vsel %vm486, %v471, %v473
      %v492 = vsel %vm486, %v475, %v477
      %v493 = vsel %vm486, %v479, %v481
      %v494 = vsel %vm486, %v483, %v485
      %503 = vrot.lane.b32.xlu0 %v177, 120
      %v504 = vpop.permute.xlu0 %503
      %505 = vrot.lane.b32.xlu0 %v178, 120
      %v506 = vpop.permute.xlu0 %505
      %507 = vrot.lane.b32.xlu0 %v179, 120
      %v508 = vpop.permute.xlu0 %507
      %509 = vrot.lane.b32.xlu0 %v180, 120
      %v510 = vpop.permute.xlu0 %509
      %511 = vrot.lane.b32.xlu0 %v181, 120
      %v512 = vpop.permute.xlu0 %511
      %513 = vrot.lane.b32.xlu0 %v182, 120
      %v514 = vpop.permute.xlu0 %513
      %515 = vrot.lane.b32.xlu0 %v183, 120
      %v516 = vpop.permute.xlu0 %515
      %517 = vrot.lane.b32.xlu0 %v184, 120
      %v518 = vpop.permute.xlu0 %517
      %519 = vrot.lane.b32.xlu0 %v185, 120
      %v520 = vpop.permute.xlu0 %519
      %521 = vrot.lane.b32.xlu0 %v186, 120
      %v522 = vpop.permute.xlu0 %521
      %523 = vrot.lane.b32.xlu0 %v187, 120
      %v524 = vpop.permute.xlu0 %523
      %525 = vrot.lane.b32.xlu0 %v188, 120
      %v526 = vpop.permute.xlu0 %525
      %527 = vrot.lane.b32.xlu0 %v189, 120
      %v528 = vpop.permute.xlu0 %527
      %529 = vrot.lane.b32.xlu0 %v190, 120
      %v530 = vpop.permute.xlu0 %529
      %531 = vrot.lane.b32.xlu0 %v191, 120
      %v532 = vpop.permute.xlu0 %531
      %533 = vrot.lane.b32.xlu0 %v192, 120
      %v534 = vpop.permute.xlu0 %533
      %vm535 = vcmask 982016
      %v536 = vsel %vm535, %v504, %v506
      %v537 = vsel %vm535, %v508, %v510
      %v538 = vsel %vm535, %v512, %v514
      %v539 = vsel %vm535, %v516, %v518
      %v540 = vsel %vm535, %v520, %v522
      %v541 = vsel %vm535, %v524, %v526
      %v542 = vsel %vm535, %v528, %v530
      %v543 = vsel %vm535, %v532, %v534
      %552 = vrot.lane.b32.xlu0 %v177, 118
      %v553 = vpop.permute.xlu0 %552
      %554 = vrot.lane.b32.xlu0 %v178, 118
      %v555 = vpop.permute.xlu0 %554
      %556 = vrot.lane.b32.xlu0 %v179, 118
      %v557 = vpop.permute.xlu0 %556
      %558 = vrot.lane.b32.xlu0 %v180, 118
      %v559 = vpop.permute.xlu0 %558
      %560 = vrot.lane.b32.xlu0 %v181, 118
      %v561 = vpop.permute.xlu0 %560
      %562 = vrot.lane.b32.xlu0 %v182, 118
      %v563 = vpop.permute.xlu0 %562
      %564 = vrot.lane.b32.xlu0 %v183, 118
      %v565 = vpop.permute.xlu0 %564
      %566 = vrot.lane.b32.xlu0 %v184, 118
      %v567 = vpop.permute.xlu0 %566
      %568 = vrot.lane.b32.xlu0 %v185, 118
      %v569 = vpop.permute.xlu0 %568
      %570 = vrot.lane.b32.xlu0 %v186, 118
      %v571 = vpop.permute.xlu0 %570
      %572 = vrot.lane.b32.xlu0 %v187, 118
      %v573 = vpop.permute.xlu0 %572
      %574 = vrot.lane.b32.xlu0 %v188, 118
      %v575 = vpop.permute.xlu0 %574
      %576 = vrot.lane.b32.xlu0 %v189, 118
      %v577 = vpop.permute.xlu0 %576
      %578 = vrot.lane.b32.xlu0 %v190, 118
      %v579 = vpop.permute.xlu0 %578
      %580 = vrot.lane.b32.xlu0 %v191, 118
      %v581 = vpop.permute.xlu0 %580
      %582 = vrot.lane.b32.xlu0 %v192, 118
      %v583 = vpop.permute.xlu0 %582
      %vm584 = vcmask 965632
      %v585 = vsel %vm584, %v553, %v555
      %v586 = vsel %vm584, %v557, %v559
      %v587 = vsel %vm584, %v561, %v563
      %v588 = vsel %vm584, %v565, %v567
      %v589 = vsel %vm584, %v569, %v571
      %v590 = vsel %vm584, %v573, %v575
      %v591 = vsel %vm584, %v577, %v579
      %v592 = vsel %vm584, %v581, %v583
      %601 = vrot.lane.b32.xlu0 %v177, 117
      %v602 = vpop.permute.xlu0 %601
      %603 = vrot.lane.b32.xlu0 %v178, 117
      %v604 = vpop.permute.xlu0 %603
      %605 = vrot.lane.b32.xlu0 %v179, 117
      %v606 = vpop.permute.xlu0 %605
      %607 = vrot.lane.b32.xlu0 %v180, 117
      %v608 = vpop.permute.xlu0 %607
      %609 = vrot.lane.b32.xlu0 %v181, 117
      %v610 = vpop.permute.xlu0 %609
      %611 = vrot.lane.b32.xlu0 %v182, 117
      %v612 = vpop.permute.xlu0 %611
      %613 = vrot.lane.b32.xlu0 %v183, 117
      %v614 = vpop.permute.xlu0 %613
      %615 = vrot.lane.b32.xlu0 %v184, 117
      %v616 = vpop.permute.xlu0 %615
      %617 = vrot.lane.b32.xlu0 %v185, 117
      %v618 = vpop.permute.xlu0 %617
      %619 = vrot.lane.b32.xlu0 %v186, 117
      %v620 = vpop.permute.xlu0 %619
      %621 = vrot.lane.b32.xlu0 %v187, 117
      %v622 = vpop.permute.xlu0 %621
      %623 = vrot.lane.b32.xlu0 %v188, 117
      %v624 = vpop.permute.xlu0 %623
      %625 = vrot.lane.b32.xlu0 %v189, 117
      %v626 = vpop.permute.xlu0 %625
      %627 = vrot.lane.b32.xlu0 %v190, 117
      %v628 = vpop.permute.xlu0 %627
      %629 = vrot.lane.b32.xlu0 %v191, 117
      %v630 = vpop.permute.xlu0 %629
      %631 = vrot.lane.b32.xlu0 %v192, 117
      %v632 = vpop.permute.xlu0 %631
      %vm633 = vcmask 957440
      %v634 = vsel %vm633, %v602, %v604
      %v635 = vsel %vm633, %v606, %v608
      %v636 = vsel %vm633, %v610, %v612
      %v637 = vsel %vm633, %v614, %v616
      %v638 = vsel %vm633, %v618, %v620
      %v639 = vsel %vm633, %v622, %v624
      %v640 = vsel %vm633, %v626, %v628
      %v641 = vsel %vm633, %v630, %v632
      %650 = vrot.lane.b32.xlu0 %v177, 116
      %v651 = vpop.permute.xlu0 %650
      %652 = vrot.lane.b32.xlu0 %v178, 116
      %v653 = vpop.permute.xlu0 %652
      %654 = vrot.lane.b32.xlu0 %v179, 116
      %v655 = vpop.permute.xlu0 %654
      %656 = vrot.lane.b32.xlu0 %v180, 116
      %v657 = vpop.permute.xlu0 %656
      %658 = vrot.lane.b32.xlu0 %v181, 116
      %v659 = vpop.permute.xlu0 %658
      %660 = vrot.lane.b32.xlu0 %v182, 116
      %v661 = vpop.permute.xlu0 %660
      %662 = vrot.lane.b32.xlu0 %v183, 116
      %v663 = vpop.permute.xlu0 %662
      %664 = vrot.lane.b32.xlu0 %v184, 116
      %v665 = vpop.permute.xlu0 %664
      %666 = vrot.lane.b32.xlu0 %v185, 116
      %v667 = vpop.permute.xlu0 %666
      %668 = vrot.lane.b32.xlu0 %v186, 116
      %v669 = vpop.permute.xlu0 %668
      %670 = vrot.lane.b32.xlu0 %v187, 116
      %v671 = vpop.permute.xlu0 %670
      %672 = vrot.lane.b32.xlu0 %v188, 116
      %v673 = vpop.permute.xlu0 %672
      %674 = vrot.lane.b32.xlu0 %v189, 116
      %v675 = vpop.permute.xlu0 %674
      %676 = vrot.lane.b32.xlu0 %v190, 116
      %v677 = vpop.permute.xlu0 %676
      %678 = vrot.lane.b32.xlu0 %v191, 116
      %v679 = vpop.permute.xlu0 %678
      %680 = vrot.lane.b32.xlu0 %v192, 116
      %v681 = vpop.permute.xlu0 %680
      %vm682 = vcmask 949248
      %v683 = vsel %vm682, %v651, %v653
      %v684 = vsel %vm682, %v655, %v657
      %v685 = vsel %vm682, %v659, %v661
      %v686 = vsel %vm682, %v663, %v665
      %v687 = vsel %vm682, %v667, %v669
      %v688 = vsel %vm682, %v671, %v673
      %v689 = vsel %vm682, %v675, %v677
      %v690 = vsel %vm682, %v679, %v681
      %699 = vrot.lane.b32.xlu0 %v177, 115
      %v700 = vpop.permute.xlu0 %699
      %701 = vrot.lane.b32.xlu0 %v178, 115
      %v702 = vpop.permute.xlu0 %701
      %703 = vrot.lane.b32.xlu0 %v179, 115
      %v704 = vpop.permute.xlu0 %703
      %705 = vrot.lane.b32.xlu0 %v180, 115
      %v706 = vpop.permute.xlu0 %705
      %707 = vrot.lane.b32.xlu0 %v181, 115
      %v708 = vpop.permute.xlu0 %707
      %709 = vrot.lane.b32.xlu0 %v182, 115
      %v710 = vpop.permute.xlu0 %709
      %711 = vrot.lane.b32.xlu0 %v183, 115
      %v712 = vpop.permute.xlu0 %711
      %713 = vrot.lane.b32.xlu0 %v184, 115
      %v714 = vpop.permute.xlu0 %713
      %715 = vrot.lane.b32.xlu0 %v185, 115
      %v716 = vpop.permute.xlu0 %715
      %717 = vrot.lane.b32.xlu0 %v186, 115
      %v718 = vpop.permute.xlu0 %717
      %719 = vrot.lane.b32.xlu0 %v187, 115
      %v720 = vpop.permute.xlu0 %719
      %721 = vrot.lane.b32.xlu0 %v188, 115
      %v722 = vpop.permute.xlu0 %721
      %723 = vrot.lane.b32.xlu0 %v189, 115
      %v724 = vpop.permute.xlu0 %723
      %725 = vrot.lane.b32.xlu0 %v190, 115
      %v726 = vpop.permute.xlu0 %725
      %727 = vrot.lane.b32.xlu0 %v191, 115
      %v728 = vpop.permute.xlu0 %727
      %729 = vrot.lane.b32.xlu0 %v192, 115
      %v730 = vpop.permute.xlu0 %729
      %vm731 = vcmask 941056
      %v732 = vsel %vm731, %v700, %v702
      %v733 = vsel %vm731, %v704, %v706
      %v734 = vsel %vm731, %v708, %v710
      %v735 = vsel %vm731, %v712, %v714
      %v736 = vsel %vm731, %v716, %v718
      %v737 = vsel %vm731, %v720, %v722
      %v738 = vsel %vm731, %v724, %v726
      %v739 = vsel %vm731, %v728, %v730
      %748 = vrot.lane.b32.xlu0 %v177, 113
      %v749 = vpop.permute.xlu0 %748
      %750 = vrot.lane.b32.xlu0 %v178, 113
      %v751 = vpop.permute.xlu0 %750
      %752 = vrot.lane.b32.xlu0 %v179, 113
      %v753 = vpop.permute.xlu0 %752
      %754 = vrot.lane.b32.xlu0 %v180, 113
      %v755 = vpop.permute.xlu0 %754
      %756 = vrot.lane.b32.xlu0 %v181, 113
      %v757 = vpop.permute.xlu0 %756
      %758 = vrot.lane.b32.xlu0 %v182, 113
      %v759 = vpop.permute.xlu0 %758
      %760 = vrot.lane.b32.xlu0 %v183, 113
      %v761 = vpop.permute.xlu0 %760
      %762 = vrot.lane.b32.xlu0 %v184, 113
      %v763 = vpop.permute.xlu0 %762
      %764 = vrot.lane.b32.xlu0 %v185, 113
      %v765 = vpop.permute.xlu0 %764
      %766 = vrot.lane.b32.xlu0 %v186, 113
      %v767 = vpop.permute.xlu0 %766
      %768 = vrot.lane.b32.xlu0 %v187, 113
      %v769 = vpop.permute.xlu0 %768
      %770 = vrot.lane.b32.xlu0 %v188, 113
      %v771 = vpop.permute.xlu0 %770
      %772 = vrot.lane.b32.xlu0 %v189, 113
      %v773 = vpop.permute.xlu0 %772
      %774 = vrot.lane.b32.xlu0 %v190, 113
      %v775 = vpop.permute.xlu0 %774
      %776 = vrot.lane.b32.xlu0 %v191, 113
      %v777 = vpop.permute.xlu0 %776
      %778 = vrot.lane.b32.xlu0 %v192, 113
      %v779 = vpop.permute.xlu0 %778
      %vm780 = vcmask 924672
      %v781 = vsel %vm780, %v749, %v751
      %v782 = vsel %vm780, %v753, %v755
      %v783 = vsel %vm780, %v757, %v759
      %v784 = vsel %vm780, %v761, %v763
      %v785 = vsel %vm780, %v765, %v767
      %v786 = vsel %vm780, %v769, %v771
      %v787 = vsel %vm780, %v773, %v775
      %v788 = vsel %vm780, %v777, %v779
      %797 = vrot.lane.b32.xlu0 %v177, 112
      %v798 = vpop.permute.xlu0 %797
      %799 = vrot.lane.b32.xlu0 %v178, 112
      %v800 = vpop.permute.xlu0 %799
      %801 = vrot.lane.b32.xlu0 %v179, 112
      %v802 = vpop.permute.xlu0 %801
      %803 = vrot.lane.b32.xlu0 %v180, 112
      %v804 = vpop.permute.xlu0 %803
      %805 = vrot.lane.b32.xlu0 %v181, 112
      %v806 = vpop.permute.xlu0 %805
      %807 = vrot.lane.b32.xlu0 %v182, 112
      %v808 = vpop.permute.xlu0 %807
      %809 = vrot.lane.b32.xlu0 %v183, 112
      %v810 = vpop.permute.xlu0 %809
      %811 = vrot.lane.b32.xlu0 %v184, 112
      %v812 = vpop.permute.xlu0 %811
      %813 = vrot.lane.b32.xlu0 %v185, 112
      %v814 = vpop.permute.xlu0 %813
      %815 = vrot.lane.b32.xlu0 %v186, 112
      %v816 = vpop.permute.xlu0 %815
      %817 = vrot.lane.b32.xlu0 %v187, 112
      %v818 = vpop.permute.xlu0 %817
      %819 = vrot.lane.b32.xlu0 %v188, 112
      %v820 = vpop.permute.xlu0 %819
      %821 = vrot.lane.b32.xlu0 %v189, 112
      %v822 = vpop.permute.xlu0 %821
      %823 = vrot.lane.b32.xlu0 %v190, 112
      %v824 = vpop.permute.xlu0 %823
      %825 = vrot.lane.b32.xlu0 %v191, 112
      %v826 = vpop.permute.xlu0 %825
      %827 = vrot.lane.b32.xlu0 %v192, 112
      %v828 = vpop.permute.xlu0 %827
      %vm829 = vcmask 916480
      %v830 = vsel %vm829, %v798, %v800
      %v831 = vsel %vm829, %v802, %v804
      %v832 = vsel %vm829, %v806, %v808
      %v833 = vsel %vm829, %v810, %v812
      %v834 = vsel %vm829, %v814, %v816
      %v835 = vsel %vm829, %v818, %v820
      %v836 = vsel %vm829, %v822, %v824
      %v837 = vsel %vm829, %v826, %v828
      %846 = vrot.lane.b32.xlu0 %v177, 111
      %v847 = vpop.permute.xlu0 %846
      %848 = vrot.lane.b32.xlu0 %v178, 111
      %v849 = vpop.permute.xlu0 %848
      %850 = vrot.lane.b32.xlu0 %v179, 111
      %v851 = vpop.permute.xlu0 %850
      %852 = vrot.lane.b32.xlu0 %v180, 111
      %v853 = vpop.permute.xlu0 %852
      %854 = vrot.lane.b32.xlu0 %v181, 111
      %v855 = vpop.permute.xlu0 %854
      %856 = vrot.lane.b32.xlu0 %v182, 111
      %v857 = vpop.permute.xlu0 %856
      %858 = vrot.lane.b32.xlu0 %v183, 111
      %v859 = vpop.permute.xlu0 %858
      %860 = vrot.lane.b32.xlu0 %v184, 111
      %v861 = vpop.permute.xlu0 %860
      %862 = vrot.lane.b32.xlu0 %v185, 111
      %v863 = vpop.permute.xlu0 %862
      %864 = vrot.lane.b32.xlu0 %v186, 111
      %v865 = vpop.permute.xlu0 %864
      %866 = vrot.lane.b32.xlu0 %v187, 111
      %v867 = vpop.permute.xlu0 %866
      %868 = vrot.lane.b32.xlu0 %v188, 111
      %v869 = vpop.permute.xlu0 %868
      %870 = vrot.lane.b32.xlu0 %v189, 111
      %v871 = vpop.permute.xlu0 %870
      %872 = vrot.lane.b32.xlu0 %v190, 111
      %v873 = vpop.permute.xlu0 %872
      %874 = vrot.lane.b32.xlu0 %v191, 111
      %v875 = vpop.permute.xlu0 %874
      %876 = vrot.lane.b32.xlu0 %v192, 111
      %v877 = vpop.permute.xlu0 %876
      %vm878 = vcmask 908288
      %v879 = vsel %vm878, %v847, %v849
      %v880 = vsel %vm878, %v851, %v853
      %v881 = vsel %vm878, %v855, %v857
      %v882 = vsel %vm878, %v859, %v861
      %v883 = vsel %vm878, %v863, %v865
      %v884 = vsel %vm878, %v867, %v869
      %v885 = vsel %vm878, %v871, %v873
      %v886 = vsel %vm878, %v875, %v877
      %895 = vrot.lane.b32.xlu0 %v177, 110
      %v896 = vpop.permute.xlu0 %895
      %897 = vrot.lane.b32.xlu0 %v178, 110
      %v898 = vpop.permute.xlu0 %897
      %899 = vrot.lane.b32.xlu0 %v179, 110
      %v900 = vpop.permute.xlu0 %899
      %901 = vrot.lane.b32.xlu0 %v180, 110
      %v902 = vpop.permute.xlu0 %901
      %903 = vrot.lane.b32.xlu0 %v181, 110
      %v904 = vpop.permute.xlu0 %903
      %905 = vrot.lane.b32.xlu0 %v182, 110
      %v906 = vpop.permute.xlu0 %905
      %907 = vrot.lane.b32.xlu0 %v183, 110
      %v908 = vpop.permute.xlu0 %907
      %909 = vrot.lane.b32.xlu0 %v184, 110
      %v910 = vpop.permute.xlu0 %909
      %911 = vrot.lane.b32.xlu0 %v185, 110
      %v912 = vpop.permute.xlu0 %911
      %913 = vrot.lane.b32.xlu0 %v186, 110
      %v914 = vpop.permute.xlu0 %913
      %915 = vrot.lane.b32.xlu0 %v187, 110
      %v916 = vpop.permute.xlu0 %915
      %917 = vrot.lane.b32.xlu0 %v188, 110
      %v918 = vpop.permute.xlu0 %917
      %919 = vrot.lane.b32.xlu0 %v189, 110
      %v920 = vpop.permute.xlu0 %919
      %921 = vrot.lane.b32.xlu0 %v190, 110
      %v922 = vpop.permute.xlu0 %921
      %923 = vrot.lane.b32.xlu0 %v191, 110
      %v924 = vpop.permute.xlu0 %923
      %925 = vrot.lane.b32.xlu0 %v192, 110
      %v926 = vpop.permute.xlu0 %925
      %vm927 = vcmask 900096
      %v928 = vsel %vm927, %v896, %v898
      %v929 = vsel %vm927, %v900, %v902
      %v930 = vsel %vm927, %v904, %v906
      %v931 = vsel %vm927, %v908, %v910
      %v932 = vsel %vm927, %v912, %v914
      %v933 = vsel %vm927, %v916, %v918
      %v934 = vsel %vm927, %v920, %v922
      %v935 = vsel %vm927, %v924, %v926
      %v944 = vld [vmem:[%s1] sm:$0xff]
      %v945 = vld [vmem:[#allocation2] sm:$0x1]
      %947 = vset.pattern.permute.xlu0 0
      %948 = vperm.xlu0 %947, %v945
      %v949 = vpop.permute.xlu0 %948
      %v951 = vlaneseq
      %v952 = vshrl.u32 %v951, 7
      %v953 = vsub.s32 0, %v952
      %v954 = vrot.slane %v949, %v953
      %v956 = vlaneseq
      %v957 = vshrl.u32 %v956, 7
      %v958 = vsub.s32 0, %v957
      %v959 = vrot.slane %v944, %v958
      %v960 = vlaneseq
      %v961 = vshrl.u32 %v960, 7
      %v962 = vsub.s32 1, %v961
      %v963 = vrot.slane %v944, %v962
      %v964 = vlaneseq
      %v965 = vshrl.u32 %v964, 7
      %v966 = vsub.s32 2, %v965
      %v967 = vrot.slane %v944, %v966
      %v968 = vlaneseq
      %v969 = vshrl.u32 %v968, 7
      %v970 = vsub.s32 3, %v969
      %v971 = vrot.slane %v944, %v970
      %v972 = vlaneseq
      %v973 = vshrl.u32 %v972, 7
      %v974 = vsub.s32 4, %v973
      %v975 = vrot.slane %v944, %v974
      %v976 = vlaneseq
      %v977 = vshrl.u32 %v976, 7
      %v978 = vsub.s32 5, %v977
      %v979 = vrot.slane %v944, %v978
      %v980 = vlaneseq
      %v981 = vshrl.u32 %v980, 7
      %v982 = vsub.s32 6, %v981
      %v983 = vrot.slane %v944, %v982
      %v984 = vlaneseq
      %v985 = vshrl.u32 %v984, 7
      %v986 = vsub.s32 7, %v985
      %v987 = vrot.slane %v944, %v986
      %996 = vmatprep.subr.mxu0 0.0
      %997 = vmatpush1.msra.mxu0 %v249
      %998 = vmatprep.subr.mxu0 0.0
      %999 = vmatpush1.msra.mxu0 %v248
      %1000 = vmatprep.subr.mxu0 0.0
      %1001 = vmatpush1.msra.mxu0 %v247
      %1002 = vmatprep.subr.mxu0 0.0
      %1003 = vmatpush1.msra.mxu0 %v246
      %1004 = vmatprep.subr.mxu0 0.0
      %1005 = vmatpush1.msra.mxu0 %v245
      %1006 = vmatprep.subr.mxu0 0.0
      %1007 = vmatpush1.msra.mxu0 %v244
      %1008 = vmatprep.subr.mxu0 0.0
      %1009 = vmatpush1.msra.mxu0 %v243
      %1010 = vmatprep.subr.mxu0 0.0
      %1011 = vmatpush1.msra.mxu0 %v242
      %1012 = vmatprep.subr.mxu0 0.0
      %1013 = vmatpush1.msra.mxu0 %v176
      %1014 = vmatprep.subr.mxu0 0.0
      %1015 = vmatpush1.msra.mxu0 %v175
      %1016 = vmatprep.subr.mxu0 0.0
      %1017 = vmatpush1.msra.mxu0 %v174
      %1018 = vmatprep.subr.mxu0 0.0
      %1019 = vmatpush1.msra.mxu0 %v173
      %1020 = vmatprep.subr.mxu0 0.0
      %1021 = vmatpush1.msra.mxu0 %v172
      %1022 = vmatprep.subr.mxu0 0.0
      %1023 = vmatpush1.msra.mxu0 %v171
      %1024 = vmatprep.subr.mxu0 0.0
      %1025 = vmatpush1.msra.mxu0 %v170
      %1026 = vmatprep.subr.mxu0 0.0
      %1027 = vmatpush1.msra.mxu0 %v169
      %1028 = vmatprep.subr.mxu0 0.0
      %1029 = vmatpush2.msra.mxu0 %v347
      %1030 = vmatprep.subr.mxu0 0.0
      %1031 = vmatpush2.msra.mxu0 %v346
      %1032 = vmatprep.subr.mxu0 0.0
      %1033 = vmatpush2.msra.mxu0 %v345
      %1034 = vmatprep.subr.mxu0 0.0
      %1035 = vmatpush2.msra.mxu0 %v344
      %1036 = vmatprep.subr.mxu0 0.0
      %1037 = vmatpush2.msra.mxu0 %v343
      %1038 = vmatprep.subr.mxu0 0.0
      %1039 = vmatpush2.msra.mxu0 %v342
      %1040 = vmatprep.subr.mxu0 0.0
      %1041 = vmatpush2.msra.mxu0 %v341
      %1042 = vmatprep.subr.mxu0 0.0
      %1043 = vmatpush2.msra.mxu0 %v340
      %1044 = vmatprep.subr.mxu0 0.0
      %1045 = vmatpush2.msra.mxu0 %v298
      %1046 = vmatprep.subr.mxu0 0.0
      %1047 = vmatpush2.msra.mxu0 %v297
      %1048 = vmatprep.subr.mxu0 0.0
      %1049 = vmatpush2.msra.mxu0 %v296
      %1050 = vmatprep.subr.mxu0 0.0
      %1051 = vmatpush2.msra.mxu0 %v295
      %1052 = vmatprep.subr.mxu0 0.0
      %1053 = vmatpush2.msra.mxu0 %v294
      %1054 = vmatprep.subr.mxu0 0.0
      %1055 = vmatpush2.msra.mxu0 %v293
      %1056 = vmatprep.subr.mxu0 0.0
      %1057 = vmatpush2.msra.mxu0 %v292
      %1058 = vmatprep.subr.mxu0 0.0
      %1059 = vmatpush2.msra.mxu0 %v291
      %1060 = vmatprep.mubr.f32.mxu0 %v963
      %1061 = vmatmul.mubr.f32.gmra.mxu0 %v959
      %v1062 = vpop.f32.mrf.mxu0
      %v1063 = vadd.f32 %v954, %v1062
      %v1064 = vpop.f32.mrf.mxu0
      %1065 = vdwg.mxu0
      %1066 = vmatprep.subr.mxu0 0.0
      %1067 = vmatpush1.msra.mxu0 %v445
      %1068 = vmatprep.subr.mxu0 0.0
      %1069 = vmatpush1.msra.mxu0 %v444
      %1070 = vmatprep.subr.mxu0 0.0
      %1071 = vmatpush1.msra.mxu0 %v443
      %1072 = vmatprep.subr.mxu0 0.0
      %1073 = vmatpush1.msra.mxu0 %v442
      %1074 = vmatprep.subr.mxu0 0.0
      %1075 = vmatpush1.msra.mxu0 %v441
      %1076 = vmatprep.subr.mxu0 0.0
      %1077 = vmatpush1.msra.mxu0 %v440
      %1078 = vmatprep.subr.mxu0 0.0
      %1079 = vmatpush1.msra.mxu0 %v439
      %1080 = vmatprep.subr.mxu0 0.0
      %1081 = vmatpush1.msra.mxu0 %v438
      %1082 = vmatprep.subr.mxu0 0.0
      %1083 = vmatpush1.msra.mxu0 %v396
      %1084 = vmatprep.subr.mxu0 0.0
      %1085 = vmatpush1.msra.mxu0 %v395
      %1086 = vmatprep.subr.mxu0 0.0
      %1087 = vmatpush1.msra.mxu0 %v394
      %1088 = vmatprep.subr.mxu0 0.0
      %1089 = vmatpush1.msra.mxu0 %v393
      %1090 = vmatprep.subr.mxu0 0.0
      %1091 = vmatpush1.msra.mxu0 %v392
      %1092 = vmatprep.subr.mxu0 0.0
      %1093 = vmatpush1.msra.mxu0 %v391
      %1094 = vmatprep.subr.mxu0 0.0
      %1095 = vmatpush1.msra.mxu0 %v390
      %1096 = vmatprep.subr.mxu0 0.0
      %1097 = vmatpush1.msra.mxu0 %v389
      %1098 = vmatprep.subr.mxu0 0.0
      %1099 = vmatpush2.msra.mxu0 %v543
      %1100 = vmatprep.subr.mxu0 0.0
      %1101 = vmatpush2.msra.mxu0 %v542
      %1102 = vmatprep.subr.mxu0 0.0
      %1103 = vmatpush2.msra.mxu0 %v541
      %1104 = vmatprep.subr.mxu0 0.0
      %1105 = vmatpush2.msra.mxu0 %v540
      %1106 = vmatprep.subr.mxu0 0.0
      %1107 = vmatpush2.msra.mxu0 %v539
      %1108 = vmatprep.subr.mxu0 0.0
      %1109 = vmatpush2.msra.mxu0 %v538
      %1110 = vmatprep.subr.mxu0 0.0
      %1111 = vmatpush2.msra.mxu0 %v537
      %1112 = vmatprep.subr.mxu0 0.0
      %1113 = vmatpush2.msra.mxu0 %v536
      %1114 = vmatprep.subr.mxu0 0.0
      %1115 = vmatpush2.msra.mxu0 %v494
      %1116 = vmatprep.subr.mxu0 0.0
      %1117 = vmatpush2.msra.mxu0 %v493
      %1118 = vmatprep.subr.mxu0 0.0
      %1119 = vmatpush2.msra.mxu0 %v492
      %1120 = vmatprep.subr.mxu0 0.0
      %1121 = vmatpush2.msra.mxu0 %v491
      %1122 = vmatprep.subr.mxu0 0.0
      %1123 = vmatpush2.msra.mxu0 %v490
      %1124 = vmatprep.subr.mxu0 0.0
      %1125 = vmatpush2.msra.mxu0 %v489
      %1126 = vmatprep.subr.mxu0 0.0
      %1127 = vmatpush2.msra.mxu0 %v488
      %1128 = vmatprep.subr.mxu0 0.0
      %1129 = vmatpush2.msra.mxu0 %v487
      %1130 = vmatprep.mubr.f32.mxu0 %v971
      %1131 = vmatmul.mubr.f32.gmra.mxu0 %v967
      %v1132 = vpop.f32.mrf.mxu0
      %v1133 = vadd.f32 %v1063, %v1132
      %v1134 = vpop.f32.mrf.mxu0
      %1135 = vdwg.mxu0
      %1136 = vmatprep.subr.mxu0 0.0
      %1137 = vmatpush1.msra.mxu0 %v641
      %1138 = vmatprep.subr.mxu0 0.0
      %1139 = vmatpush1.msra.mxu0 %v640
      %1140 = vmatprep.subr.mxu0 0.0
      %1141 = vmatpush1.msra.mxu0 %v639
      %1142 = vmatprep.subr.mxu0 0.0
      %1143 = vmatpush1.msra.mxu0 %v638
      %1144 = vmatprep.subr.mxu0 0.0
      %1145 = vmatpush1.msra.mxu0 %v637
      %1146 = vmatprep.subr.mxu0 0.0
      %1147 = vmatpush1.msra.mxu0 %v636
      %1148 = vmatprep.subr.mxu0 0.0
      %1149 = vmatpush1.msra.mxu0 %v635
      %1150 = vmatprep.subr.mxu0 0.0
      %1151 = vmatpush1.msra.mxu0 %v634
      %1152 = vmatprep.subr.mxu0 0.0
      %1153 = vmatpush1.msra.mxu0 %v592
      %1154 = vmatprep.subr.mxu0 0.0
      %1155 = vmatpush1.msra.mxu0 %v591
      %1156 = vmatprep.subr.mxu0 0.0
      %1157 = vmatpush1.msra.mxu0 %v590
      %1158 = vmatprep.subr.mxu0 0.0
      %1159 = vmatpush1.msra.mxu0 %v589
      %1160 = vmatprep.subr.mxu0 0.0
      %1161 = vmatpush1.msra.mxu0 %v588
      %1162 = vmatprep.subr.mxu0 0.0
      %1163 = vmatpush1.msra.mxu0 %v587
      %1164 = vmatprep.subr.mxu0 0.0
      %1165 = vmatpush1.msra.mxu0 %v586
      %1166 = vmatprep.subr.mxu0 0.0
      %1167 = vmatpush1.msra.mxu0 %v585
      %1168 = vmatprep.subr.mxu0 0.0
      %1169 = vmatpush2.msra.mxu0 %v739
      %1170 = vmatprep.subr.mxu0 0.0
      %1171 = vmatpush2.msra.mxu0 %v738
      %1172 = vmatprep.subr.mxu0 0.0
      %1173 = vmatpush2.msra.mxu0 %v737
      %1174 = vmatprep.subr.mxu0 0.0
      %1175 = vmatpush2.msra.mxu0 %v736
      %1176 = vmatprep.subr.mxu0 0.0
      %1177 = vmatpush2.msra.mxu0 %v735
      %1178 = vmatprep.subr.mxu0 0.0
      %1179 = vmatpush2.msra.mxu0 %v734
      %1180 = vmatprep.subr.mxu0 0.0
      %1181 = vmatpush2.msra.mxu0 %v733
      %1182 = vmatprep.subr.mxu0 0.0
      %1183 = vmatpush2.msra.mxu0 %v732
      %1184 = vmatprep.subr.mxu0 0.0
      %1185 = vmatpush2.msra.mxu0 %v690
      %1186 = vmatprep.subr.mxu0 0.0
      %1187 = vmatpush2.msra.mxu0 %v689
      %1188 = vmatprep.subr.mxu0 0.0
      %1189 = vmatpush2.msra.mxu0 %v688
      %1190 = vmatprep.subr.mxu0 0.0
      %1191 = vmatpush2.msra.mxu0 %v687
      %1192 = vmatprep.subr.mxu0 0.0
      %1193 = vmatpush2.msra.mxu0 %v686
      %1194 = vmatprep.subr.mxu0 0.0
      %1195 = vmatpush2.msra.mxu0 %v685
      %1196 = vmatprep.subr.mxu0 0.0
      %1197 = vmatpush2.msra.mxu0 %v684
      %1198 = vmatprep.subr.mxu0 0.0
      %1199 = vmatpush2.msra.mxu0 %v683
      %1200 = vmatprep.mubr.f32.mxu0 %v979
      %1201 = vmatmul.mubr.f32.gmra.mxu0 %v975
      %v1202 = vpop.f32.mrf.mxu0
      %v1203 = vadd.f32 %v1133, %v1202
      %v1204 = vpop.f32.mrf.mxu0
      %1205 = vdwg.mxu0
      %1206 = vmatprep.subr.mxu0 0.0
      %1207 = vmatpush1.msra.mxu0 %v837
      %1208 = vmatprep.subr.mxu0 0.0
      %1209 = vmatpush1.msra.mxu0 %v836
      %1210 = vmatprep.subr.mxu0 0.0
      %1211 = vmatpush1.msra.mxu0 %v835
      %1212 = vmatprep.subr.mxu0 0.0
      %1213 = vmatpush1.msra.mxu0 %v834
      %1214 = vmatprep.subr.mxu0 0.0
      %1215 = vmatpush1.msra.mxu0 %v833
      %1216 = vmatprep.subr.mxu0 0.0
      %1217 = vmatpush1.msra.mxu0 %v832
      %1218 = vmatprep.subr.mxu0 0.0
      %1219 = vmatpush1.msra.mxu0 %v831
      %1220 = vmatprep.subr.mxu0 0.0
      %1221 = vmatpush1.msra.mxu0 %v830
      %1222 = vmatprep.subr.mxu0 0.0
      %1223 = vmatpush1.msra.mxu0 %v788
      %1224 = vmatprep.subr.mxu0 0.0
      %1225 = vmatpush1.msra.mxu0 %v787
      %1226 = vmatprep.subr.mxu0 0.0
      %1227 = vmatpush1.msra.mxu0 %v786
      %1228 = vmatprep.subr.mxu0 0.0
      %1229 = vmatpush1.msra.mxu0 %v785
      %1230 = vmatprep.subr.mxu0 0.0
      %1231 = vmatpush1.msra.mxu0 %v784
      %1232 = vmatprep.subr.mxu0 0.0
      %1233 = vmatpush1.msra.mxu0 %v783
      %1234 = vmatprep.subr.mxu0 0.0
      %1235 = vmatpush1.msra.mxu0 %v782
      %1236 = vmatprep.subr.mxu0 0.0
      %1237 = vmatpush1.msra.mxu0 %v781
      %1238 = vmatprep.subr.mxu0 0.0
      %1239 = vmatpush2.msra.mxu0 %v935
      %1240 = vmatprep.subr.mxu0 0.0
      %1241 = vmatpush2.msra.mxu0 %v934
      %1242 = vmatprep.subr.mxu0 0.0
      %1243 = vmatpush2.msra.mxu0 %v933
      %1244 = vmatprep.subr.mxu0 0.0
      %1245 = vmatpush2.msra.mxu0 %v932
      %1246 = vmatprep.subr.mxu0 0.0
      %1247 = vmatpush2.msra.mxu0 %v931
      %1248 = vmatprep.subr.mxu0 0.0
      %1249 = vmatpush2.msra.mxu0 %v930
      %1250 = vmatprep.subr.mxu0 0.0
      %1251 = vmatpush2.msra.mxu0 %v929
      %1252 = vmatprep.subr.mxu0 0.0
      %1253 = vmatpush2.msra.mxu0 %v928
      %1254 = vmatprep.subr.mxu0 0.0
      %1255 = vmatpush2.msra.mxu0 %v886
      %1256 = vmatprep.subr.mxu0 0.0
      %1257 = vmatpush2.msra.mxu0 %v885
      %1258 = vmatprep.subr.mxu0 0.0
      %1259 = vmatpush2.msra.mxu0 %v884
      %1260 = vmatprep.subr.mxu0 0.0
      %1261 = vmatpush2.msra.mxu0 %v883
      %1262 = vmatprep.subr.mxu0 0.0
      %1263 = vmatpush2.msra.mxu0 %v882
      %1264 = vmatprep.subr.mxu0 0.0
      %1265 = vmatpush2.msra.mxu0 %v881
      %1266 = vmatprep.subr.mxu0 0.0
      %1267 = vmatpush2.msra.mxu0 %v880
      %1268 = vmatprep.subr.mxu0 0.0
      %1269 = vmatpush2.msra.mxu0 %v879
      %1270 = vmatprep.mubr.f32.mxu0 %v987
      %1271 = vmatmul.mubr.f32.gmra.mxu0 %v983
      %v1272 = vpop.f32.mrf.mxu0
      %v1273 = vadd.f32 %v1203, %v1272
      %v1274 = vpop.f32.mrf.mxu0
      %1275 = vdwg.mxu0
      %1276 = vst [vmem:[%s168] sm:$0x1] %v1273
      %p1277 = scmp.lt.s32.totalorder %s16, 1
      %s1278 = scalar_select %p1277, %s16, 1
      %s1279 = scalar_lea.vmem %s3, %s1278
      // Predicated region
      $region33: #{nlayer_discriminator_forward.9} parent=31 // pred_check
        %p1280 = pneg %p102
      $region34: #{nlayer_discriminator_forward.9} parent=31 // pred_check_branch
        %1282 = sbr.rel (%p1280) target = $region36
      $region35: #{nlayer_discriminator_forward.9} parent=31 // pred_region
        _
      $region36: #{nlayer_discriminator_forward.9} parent=31 // pred_fallthru
        _
    $region32: #{nlayer_discriminator_forward.9} parent=5 // pred_fallthru
      _
    %p1283 = scmp.le.s32.totalorder 2, %s11
    // Predicated region
    $region37: #{nlayer_discriminator_forward.9} parent=5 // pred_check
      %p1284 = pneg %p1283
    $region38: #{nlayer_discriminator_forward.9} parent=5 // pred_check_branch
      %1286 = sbr.rel (%p1284) target = $region40
    $region39: #{nlayer_discriminator_forward.9} parent=5 // pred_region
      %s1287 = ssub.s32 %s11, 2
      // Predicated region
      $region41: #{nlayer_discriminator_forward.9} parent=39 // pred_check
        %p1288 = pneg %p108
      $region42: #{nlayer_discriminator_forward.9} parent=39 // pred_check_branch
        %1290 = sbr.rel (%p1288) target = $region44
      $region43: #{nlayer_discriminator_forward.9} parent=39 // pred_region
        %p1291 = scmp.lt.s32.totalorder %s17, 1
        %s1292 = scalar_select %p1291, %s17, 1
        %s1293 = scalar_lea.vmem %s3, %s1292
      $region44: #{nlayer_discriminator_forward.9} parent=39 // pred_fallthru
        _
    $region40: #{nlayer_discriminator_forward.9} parent=5 // pred_fallthru
      _
  $region6: #{nlayer_discriminator_forward.9} parent=0 // loop_footer
    %s15 = sadd.s32 1, %s11
  $region7: #{nlayer_discriminator_forward.9} parent=0 // loop_footer_branch
    %10 = sbr.rel target = $region3
  $region8: #{nlayer_discriminator_forward.9} parent=0 // loop_exit
    _

</llo_original>
